<compile_context>
chip_gen: v7x
topology: tpu7x:2x2x1
jax: 0.10.0
libtpu: 0.0.40
codegen_flags: <defaults>
</compile_context>

<pallas_src>
import functools
import math

import jax
import jax.numpy as jnp
from jax.experimental import pallas as pl
from jax.experimental.pallas import tpu as pltpu

LN_EPS = 1e-5      # python float -> never captured as a traced constant
NEG_INF = -1e30    # python float, applied to f32 scores (would overflow bf16)


# ------------------------------ kernel helpers -------------------------------

def _layernorm(h, g, b):
    mu = jnp.mean(h, axis=-1, keepdims=True)
    var = jnp.mean((h - mu) ** 2, axis=-1, keepdims=True)
    return (h - mu) * jax.lax.rsqrt(var + LN_EPS) * g + b


def _mm(a, b):
    """(m,k) @ (k,n): bf16 MXU inputs, f32 accumulation."""
    return jax.lax.dot_general(
        a.astype(jnp.bfloat16), b.astype(jnp.bfloat16),
        dimension_numbers=(((1,), (0,)), ((), ())),
        preferred_element_type=jnp.float32)


def _mm_nt(a, b):
    """(m,k) @ (n,k)^T without materializing a transpose: bf16 in, f32 accumulate."""
    return jax.lax.dot_general(
        a.astype(jnp.bfloat16), b.astype(jnp.bfloat16),
        dimension_numbers=(((1,), (1,)), ((), ())),
        preferred_element_type=jnp.float32)


def _rope_full_width(t, cos, sin, n_heads, head_dim):
    """Rotate every head of t:(rows, n_heads*head_dim); returns same per-head layout."""
    d_rot = head_dim // 2
    parts = []
    for h in range(n_heads):
        b0 = h * head_dim
        t1 = t[:, b0:b0 + d_rot]
        t2 = t[:, b0 + d_rot:b0 + head_dim]
        parts.append(t1 * cos - t2 * sin)
        parts.append(t2 * cos + t1 * sin)
    return jnp.concatenate(parts, axis=-1)


# --------------------------------- kernel ------------------------------------

def _block_kernel(*refs, n_heads, head_dim, seq_len, q_tile, causal):
    if causal:
        (x_ref, cos_ref, sin_ref,
         ln1_g_ref, ln1_b_ref,
         wq_ref, wk_ref, wv_ref, bq_ref, bk_ref, bv_ref,
         wout_ref, bout_ref,
         ln2_g_ref, ln2_b_ref,
         wua_ref, wug_ref, bua_ref, bug_ref, wdn_ref, bdn_ref,
         o_ref, kr_ref, v_ref) = refs
        mask_ref = None
    else:
        (x_ref, cos_ref, sin_ref, mask_ref,
         ln1_g_ref, ln1_b_ref,
         wq_ref, wk_ref, wv_ref, bq_ref, bk_ref, bv_ref,
         wout_ref, bout_ref,
         ln2_g_ref, ln2_b_ref,
         wua_ref, wug_ref, bua_ref, bug_ref, wdn_ref, bdn_ref,
         o_ref, kr_ref, v_ref) = refs

    D = n_heads * head_dim
    qi = pl.program_id(1)
    q_start = pl.multiple_of(qi * q_tile, q_tile)

    # ---- K / V: built ONCE per batch element (qi == 0), cached in bf16 VMEM ----
    @pl.when(qi == 0)
    def _build_kv():
        x_all = x_ref[...]                                        # (S, D) f32 (one DMA / b)
        h_kv = _layernorm(x_all, ln1_g_ref[0], ln1_b_ref[0])
        k = _mm(h_kv, wk_ref[...]) + bk_ref[0]                    # depth-D matmuls
        v = _mm(h_kv, wv_ref[...]) + bv_ref[0]
        kr = _rope_full_width(k, cos_ref[...], sin_ref[...], n_heads, head_dim)
        kr_ref[...] = kr.astype(jnp.bfloat16)                     # rotated K, bf16 cache
        v_ref[...] = v.astype(jnp.bfloat16)

    # ------------------------------ query tile --------------------------------
    x_q = x_ref[pl.ds(q_start, q_tile), :]                        # (tq, D) f32
    h_q = _layernorm(x_q, ln1_g_ref[0], ln1_b_ref[0])
    q = _mm(h_q, wq_ref[...]) + bq_ref[0]                         # 1/sqrt(hd) folded in Wq/bq
    qr = _rope_full_width(
        q, cos_ref[pl.ds(q_start, q_tile), :], sin_ref[pl.ds(q_start, q_tile), :],
        n_heads, head_dim).astype(jnp.bfloat16)                   # (tq, D)

    if causal:
        row = jax.lax.broadcasted_iota(jnp.int32, (q_tile, seq_len), 0) + q_start
        col = jax.lax.broadcasted_iota(jnp.int32, (q_tile, seq_len), 1)
        allow = row >= col                                        # in-kernel, no HBM mask
    else:
        allow = mask_ref[...] != 0                                # int8 slab (tq, S)

    kr = kr_ref[...]                                              # (S, D) bf16 (cached)
    vv = v_ref[...]
    o_parts = []
    for h in range(n_heads):                                      # static per-head loop
        b0 = h * head_dim
        # ONE score matmul per head, contraction depth = head_dim.
        s = _mm_nt(qr[:, b0:b0 + head_dim], kr[:, b0:b0 + head_dim])   # (tq, S) f32
        s = jnp.where(allow, s, NEG_INF)
        s = s - jnp.max(s, axis=-1, keepdims=True)
        p = jnp.exp(s)
        p = p * pl.reciprocal(jnp.sum(p, axis=-1, keepdims=True), approx=True)  # EUP slot
        o_parts.append(_mm(p, vv[:, b0:b0 + head_dim]))           # (tq, head_dim), depth S
    attn_cat = jnp.concatenate(o_parts, axis=-1)                  # (tq, D)
    x1 = x_q + _mm(attn_cat, wout_ref[...]) + bout_ref[0]         # SINGLE out-proj, depth D

    # --------------------------- gated feed-forward ---------------------------
    h2 = _layernorm(x1, ln2_g_ref[0], ln2_b_ref[0])
    a = _mm(h2, wua_ref[...]) + bua_ref[0]                        # value branch (tq, H)
    g = _mm(h2, wug_ref[...]) + bug_ref[0]                        # gate branch  (tq, H)
    z = a * (g * jax.nn.sigmoid(g))                               # a * silu(g)
    o_ref[...] = x1 + _mm(z, wdn_ref[...]) + bdn_ref[0]           # residual 2


# -------------------------------- wrapper ------------------------------------

def _vmem_limit_bytes():
    """Per-generation scoped-VMEM limit: ~48 MiB on v7x (64 MiB/TC), ~96 MiB on v5e/v6e."""
    try:
        cap = int(pltpu.get_tpu_info().vmem_capacity_bytes)
    except Exception:
        cap = 64 * 1024 * 1024          # conservative default (v7x per-TensorCore VMEM)
    return max(16 * 1024 * 1024, min(cap * 3 // 4, 100 * 1024 * 1024))


def _pick_q_tile(s):
    for t in (256, 128, 64, 32, 16):
        if s % t == 0:
            return t
    return s


def block_pallas(x, cos, sin, params, *, n_heads, head_dim, mask=None, q_tile=None):
    B, S, D = x.shape
    assert D == n_heads * head_dim
    assert head_dim % 4 == 0            # theta width == head_dim // 2 (no RoPE passthrough)
    d_rot = head_dim // 2
    hidden_dim = params["wua"].shape[1]
    if q_tile is None:
        q_tile = _pick_q_tile(S)
    assert S % q_tile == 0
    # bf16 packs 16 rows per vreg sublane-wise: tiles must be multiples of 16 (or full S).
    assert q_tile == S or q_tile % 16 == 0
    nq = S // q_tile
    causal = mask is None

    args = [x, cos, sin]
    if not causal:
        args.append(mask)
    args += [
        params["attn_ln_g"], params["attn_ln_b"],
        params["wq"], params["wk"], params["wv"],
        params["bq"], params["bk"], params["bv"],
        params["wout"], params["bout"],
        params["ff_ln_g"], params["ff_ln_b"],
        params["wua"], params["wug"], params["bua"], params["bug"],
        params["wdn"], params["bdn"],
    ]

    kernel = functools.partial(
        _block_kernel, n_heads=n_heads, head_dim=head_dim,
        seq_len=S, q_tile=q_tile, causal=causal)

    def build(single_buffer_weights):
        def wspec(shape):
            idx = lambda b, qi: (0, 0)                   # constant across the grid
            if single_buffer_weights:
                # Weights never change: one VMEM buffer (no double-buffer waste on v7x).
                return pl.BlockSpec(shape, idx, pipeline_mode=pl.Buffered(1))
            return pl.BlockSpec(shape, idx)

        in_specs = [
            # Full-sequence activations: block index constant in qi, so Pallas fetches
            # them once per batch element (no per-q-tile re-DMA).
            pl.BlockSpec((None, S, D), lambda b, qi: (b, 0, 0)),       # x
            pl.BlockSpec((None, S, d_rot), lambda b, qi: (b, 0, 0)),   # cos
            pl.BlockSpec((None, S, d_rot), lambda b, qi: (b, 0, 0)),   # sin
        ]
        if not causal:
            # int8 mask slab (4x less HBM traffic than f32).  For tiled (nq > 1)
            # non-causal use, pick q_tile as a multiple of 32 for dense int8 tiles.
            in_specs.append(pl.BlockSpec((None, q_tile, S), lambda b, qi: (b, qi, 0)))
        in_specs += [
            wspec((1, D)), wspec((1, D)),                    # attn LN gamma / beta
            wspec((D, D)), wspec((D, D)), wspec((D, D)),     # Wq, Wk, Wv (bf16)
            wspec((1, D)), wspec((1, D)), wspec((1, D)),     # bq, bk, bv
            wspec((D, D)), wspec((1, D)),                    # Wout (bf16), bout
            wspec((1, D)), wspec((1, D)),                    # ff LN gamma / beta
            wspec((D, hidden_dim)), wspec((D, hidden_dim)),  # Wup value / gate (bf16)
            wspec((1, hidden_dim)), wspec((1, hidden_dim)),  # bup value / gate
            wspec((hidden_dim, D)), wspec((1, D)),           # Wdown (bf16), bdown
        ]
        # NOTE: for real model dims keep D a multiple of 128 so output stores are
        # lane-dense (test D=32 is below a full lane tile).
        return pl.pallas_call(
            kernel,
            out_shape=jax.ShapeDtypeStruct((B, S, D), jnp.float32),
            grid=(B, nq),
            in_specs=in_specs,
            out_specs=pl.BlockSpec((None, q_tile, D), lambda b, qi: (b, qi, 0)),
            scratch_shapes=[pltpu.VMEM((S, D), jnp.bfloat16),    # rotated K cache
                            pltpu.VMEM((S, D), jnp.bfloat16)],   # V cache
            compiler_params=pltpu.CompilerParams(
                # b: parallel (megacore); qi: arbitrary so the K/V scratch built at
                # qi == 0 is reused by every later query tile of that batch element.
                dimension_semantics=("parallel", "arbitrary"),
                vmem_limit_bytes=_vmem_limit_bytes()),
        )

    try:
        return build(True)(*args)
    except Exception:
        # pipeline_mode=pl.Buffered(1) unsupported on this jax version -> default buffering.
        return build(False)(*args)


def prepare_params(raw, *, dim, hidden_dim, head_dim):
    """Split fused weights, fold 1/sqrt(head_dim) into Wq/bq, cast matrices to bf16."""
    D, H = dim, hidden_dim
    bf = jnp.bfloat16
    wqkv, bqkv = raw["wqkv"], raw["bqkv"]
    wup, bup = raw["wup"], raw["bup"]
    scale = 1.0 / math.sqrt(head_dim)            # folded into the Q projection
    return {
        "attn_ln_g": raw["attn_ln_g"], "attn_ln_b": raw["attn_ln_b"],
        "wq": (wqkv[:, :D] * scale).astype(bf),
        "wk": wqkv[:, D:2 * D].astype(bf),
        "wv": wqkv[:, 2 * D:].astype(bf),
        "bq": bqkv[:, :D] * scale, "bk": bqkv[:, D:2 * D], "bv": bqkv[:, 2 * D:],
        "wout": raw["wout"].astype(bf), "bout": raw["bout"],
        "ff_ln_g": raw["ff_ln_g"], "ff_ln_b": raw["ff_ln_b"],
        "wua": wup[:, :H].astype(bf), "wug": wup[:, H:].astype(bf),
        "bua": bup[:, :H], "bug": bup[:, H:],
        "wdn": raw["wdown"].astype(bf), "bdn": raw["bdown"],
    }


def block_forward(x, m, p, theta, raw_params, *, n_heads, head_dim, hidden_dim,
                  q_tile=None, use_in_kernel_causal=True):
    """x:(B,S,D) f32; m:(B,S,S) bool; p:(B,S) int32 into theta (785, head_dim//2)."""
    th = theta[p].astype(jnp.float32)            # glue: gather + transcendentals hoisted
    cos, sin = jnp.cos(th), jnp.sin(th)          # (B, S, d_rot) each
    prepared = prepare_params(raw_params, dim=x.shape[-1], hidden_dim=hidden_dim,
                              head_dim=head_dim)
    mask = None if use_in_kernel_causal else m.astype(jnp.int8)
    return block_pallas(x, cos, sin, prepared, n_heads=n_heads, head_dim=head_dim,
                        mask=mask, q_tile=q_tile)


# --------------------------- RoPE table (glue) --------------------------------

def make_axial_pos(h, w):
    h_pos = jnp.linspace(-1.0, 1.0, h + 1)
    w_pos = jnp.linspace(-1.0, 1.0, w + 1)
    h_pos = (h_pos[:-1] + h_pos[1:]) / 2
    w_pos = (w_pos[:-1] + w_pos[1:]) / 2
    hh, ww = jnp.meshgrid(h_pos, w_pos, indexing="ij")
    return jnp.stack([hh, ww], axis=-1).reshape(h * w, 2)


def make_theta(head_dim):
    log_min = math.log(math.pi)
    log_max = math.log(10 * math.pi)
    freqs = jnp.exp(jnp.linspace(log_min, log_max, head_dim // 4 + 1)[:-1])
    pos = make_axial_pos(28, 28)
    pos = jnp.concatenate([jnp.zeros((1, 2)), pos], axis=0)      # (785, 2)
    theta_h = pos[:, 0:1] * freqs
    theta_w = pos[:, 1:2] * freqs
    return jnp.concatenate([theta_h, theta_w], axis=-1)          # (785, head_dim//2)


# ------------------- pure-JAX reference (same mixed precision) ----------------

def block_reference(x, m, p, theta, raw, *, n_heads, head_dim, hidden_dim):
    B, S, D = x.shape
    H = hidden_dim
    d_rot = head_dim // 2
    bf = jnp.bfloat16

    def mm(a, w):
        return jnp.dot(a.astype(bf), w.astype(bf), preferred_element_type=jnp.float32)

    def ln(h, g, b):
        mu = jnp.mean(h, -1, keepdims=True)
        var = jnp.mean((h - mu) ** 2, -1, keepdims=True)
        return (h - mu) * jax.lax.rsqrt(var + LN_EPS) * g + b

    # attention
    h = ln(x, raw["attn_ln_g"][0], raw["attn_ln_b"][0])
    wqkv, bqkv = raw["wqkv"], raw["bqkv"][0]
    q = mm(h, wqkv[:, :D]) + bqkv[:D]
    k = mm(h, wqkv[:, D:2 * D]) + bqkv[D:2 * D]
    v = mm(h, wqkv[:, 2 * D:]) + bqkv[2 * D:]
    q = q.reshape(B, S, n_heads, head_dim).transpose(0, 2, 1, 3) / math.sqrt(head_dim)
    k = k.reshape(B, S, n_heads, head_dim).transpose(0, 2, 1, 3)
    v = v.reshape(B, S, n_heads, head_dim).transpose(0, 2, 1, 3)
    th = theta[p][:, None].astype(jnp.float32)                   # (B, 1, S, d_rot)
    cos, sin = jnp.cos(th), jnp.sin(th)

    def rope(t):
        t1, t2 = t[..., :d_rot], t[..., d_rot:]
        return jnp.concatenate([t1 * cos - t2 * sin, t2 * cos + t1 * sin], axis=-1)

    qr, kr = rope(q), rope(k)
    s = jnp.einsum("bhqd,bhkd->bhqk", qr.astype(bf), kr.astype(bf),
                   preferred_element_type=jnp.float32)
    s = jnp.where(m[:, None], s, -1e30)
    s = s - jnp.max(s, -1, keepdims=True)
    pw = jnp.exp(s)
    pw = pw / jnp.sum(pw, -1, keepdims=True)
    o = jnp.einsum("bhqk,bhkd->bhqd", pw.astype(bf), v.astype(bf),
                   preferred_element_type=jnp.float32)
    o = o.transpose(0, 2, 1, 3).reshape(B, S, D)
    x1 = x + mm(o, raw["wout"]) + raw["bout"][0]

    # feedforward
    h2 = ln(x1, raw["ff_ln_g"][0], raw["ff_ln_b"][0])
    wup, bup = raw["wup"], raw["bup"][0]
    a_ = mm(h2, wup[:, :H]) + bup[:H]
    g_ = mm(h2, wup[:, H:]) + bup[H:]
    z = a_ * (g_ * jax.nn.sigmoid(g_))
    return x1 + mm(z, raw["wdown"]) + raw["bdown"][0]


# ---------------------------------- main --------------------------------------

if __name__ == "__main__":
    B, S = 2, 32
    dim, hidden_dim, head_dim = 32, 64, 16
    n_heads = dim // head_dim

    key = jax.random.PRNGKey(0)
    ks = jax.random.split(key, 10)

    def w(kk, shape, scale):
        return jax.random.normal(kk, shape, jnp.float32) * scale

    raw_params = {
        "attn_ln_g": jnp.ones((1, dim), jnp.float32),
        "attn_ln_b": jnp.zeros((1, dim), jnp.float32),
        "wqkv": w(ks[0], (dim, 3 * dim), 1.0 / math.sqrt(dim)),
        "bqkv": w(ks[1], (1, 3 * dim), 0.02),
        # NOTE: the PyTorch module zero-inits out_proj / down; nonzero deterministic
        # weights are used so the kernel exercises the full compute path.
        "wout": w(ks[2], (dim, dim), 1.0 / math.sqrt(dim)),
        "bout": w(ks[3], (1, dim), 0.02),
        "ff_ln_g": jnp.ones((1, dim), jnp.float32),
        "ff_ln_b": jnp.zeros((1, dim), jnp.float32),
        "wup": w(ks[4], (dim, 2 * hidden_dim), 1.0 / math.sqrt(dim)),
        "bup": w(ks[5], (1, 2 * hidden_dim), 0.02),
        "wdown": w(ks[6], (hidden_dim, dim), 1.0 / math.sqrt(hidden_dim)),
        "bdown": w(ks[7], (1, dim), 0.02),
    }

    theta = make_theta(head_dim)                                  # (785, head_dim//2)

    x = jax.random.normal(ks[8], (B, S, dim), jnp.float32)
    p = jnp.broadcast_to(jnp.arange(S, dtype=jnp.int32), (B, S))
    m = jnp.broadcast_to(jnp.tril(jnp.ones((S, S), jnp.bool_)), (B, S, S))   # causal

    # Primary path: in-kernel causal mask, grid (B, S//q_tile) = (2, 2) -> exercises the
    # qi > 0 reuse of the per-batch K/V VMEM cache.
    out = block_forward(x, m, p, theta, raw_params,
                        n_heads=n_heads, head_dim=head_dim, hidden_dim=hidden_dim,
                        q_tile=16, use_in_kernel_causal=True)
    out = jax.block_until_ready(out)

    # Fallback path: arbitrary mask streamed as int8 (single q tile: mask block = full dims).
    out_masked = block_forward(x, m, p, theta, raw_params,
                               n_heads=n_heads, head_dim=head_dim, hidden_dim=hidden_dim,
                               q_tile=S, use_in_kernel_causal=False)
    out_masked = jax.block_until_ready(out_masked)

    ref = block_reference(x, m, p, theta, raw_params,
                          n_heads=n_heads, head_dim=head_dim, hidden_dim=hidden_dim)

    assert out.shape == (B, S, dim)
    # Tolerance covers the approx-reciprocal softmax normalization; the reference mirrors
    # the kernel's bf16-matmul / f32-accumulate precision.
    assert jnp.allclose(out, ref, rtol=2e-2, atol=2e-2), "causal-path mismatch vs reference"
    assert jnp.allclose(out_masked, ref, rtol=2e-2, atol=2e-2), "mask-path mismatch vs reference"

    print("KERNEL_OK")
</pallas_src>

<mosaic_0001>
module attributes {stable_mosaic.version = 11 : i64} {
  func.func @_block_kernel(%arg0: i32, %arg1: i32, %arg2: memref<1x32x32xf32, #tpu.memory_space<vmem>>, %arg3: memref<1x32x8xf32, #tpu.memory_space<vmem>>, %arg4: memref<1x32x8xf32, #tpu.memory_space<vmem>>, %arg5: memref<1x32xf32, #tpu.memory_space<vmem>>, %arg6: memref<1x32xf32, #tpu.memory_space<vmem>>, %arg7: memref<32x32xbf16, #tpu.memory_space<vmem>>, %arg8: memref<32x32xbf16, #tpu.memory_space<vmem>>, %arg9: memref<32x32xbf16, #tpu.memory_space<vmem>>, %arg10: memref<1x32xf32, #tpu.memory_space<vmem>>, %arg11: memref<1x32xf32, #tpu.memory_space<vmem>>, %arg12: memref<1x32xf32, #tpu.memory_space<vmem>>, %arg13: memref<32x32xbf16, #tpu.memory_space<vmem>>, %arg14: memref<1x32xf32, #tpu.memory_space<vmem>>, %arg15: memref<1x32xf32, #tpu.memory_space<vmem>>, %arg16: memref<1x32xf32, #tpu.memory_space<vmem>>, %arg17: memref<32x64xbf16, #tpu.memory_space<vmem>>, %arg18: memref<32x64xbf16, #tpu.memory_space<vmem>>, %arg19: memref<1x64xf32, #tpu.memory_space<vmem>>, %arg20: memref<1x64xf32, #tpu.memory_space<vmem>>, %arg21: memref<64x32xbf16, #tpu.memory_space<vmem>>, %arg22: memref<1x32xf32, #tpu.memory_space<vmem>>, %arg23: memref<1x16x32xf32, #tpu.memory_space<vmem>>, %arg24: memref<32x32xbf16, #tpu.memory_space<vmem>>, %arg25: memref<32x32xbf16, #tpu.memory_space<vmem>>) attributes {dimension_semantics = [#tpu.dimension_semantics<parallel>, #tpu.dimension_semantics<arbitrary>], iteration_bounds = array<i64: 2, 2>, scalar_prefetch = 0 : i64, scratch_operands = 2 : i64, tpu.core_type = #tpu.core_type<tc>, window_params = [{transform_indices = @transform_0, window_bounds = array<i64: 1, 32, 32>}, {transform_indices = @transform_1, window_bounds = array<i64: 1, 32, 8>}, {transform_indices = @transform_2, window_bounds = array<i64: 1, 32, 8>}, {pipeline_mode = #tpu.pipeline_mode<synchronous>, transform_indices = @transform_3, window_bounds = array<i64: 1, 32>}, {pipeline_mode = #tpu.pipeline_mode<synchronous>, transform_indices = @transform_4, window_bounds = array<i64: 1, 32>}, {pipeline_mode = #tpu.pipeline_mode<synchronous>, transform_indices = @transform_5, window_bounds = array<i64: 32, 32>}, {pipeline_mode = #tpu.pipeline_mode<synchronous>, transform_indices = @transform_6, window_bounds = array<i64: 32, 32>}, {pipeline_mode = #tpu.pipeline_mode<synchronous>, transform_indices = @transform_7, window_bounds = array<i64: 32, 32>}, {pipeline_mode = #tpu.pipeline_mode<synchronous>, transform_indices = @transform_8, window_bounds = array<i64: 1, 32>}, {pipeline_mode = #tpu.pipeline_mode<synchronous>, transform_indices = @transform_9, window_bounds = array<i64: 1, 32>}, {pipeline_mode = #tpu.pipeline_mode<synchronous>, transform_indices = @transform_10, window_bounds = array<i64: 1, 32>}, {pipeline_mode = #tpu.pipeline_mode<synchronous>, transform_indices = @transform_11, window_bounds = array<i64: 32, 32>}, {pipeline_mode = #tpu.pipeline_mode<synchronous>, transform_indices = @transform_12, window_bounds = array<i64: 1, 32>}, {pipeline_mode = #tpu.pipeline_mode<synchronous>, transform_indices = @transform_13, window_bounds = array<i64: 1, 32>}, {pipeline_mode = #tpu.pipeline_mode<synchronous>, transform_indices = @transform_14, window_bounds = array<i64: 1, 32>}, {pipeline_mode = #tpu.pipeline_mode<synchronous>, transform_indices = @transform_15, window_bounds = array<i64: 32, 64>}, {pipeline_mode = #tpu.pipeline_mode<synchronous>, transform_indices = @transform_16, window_bounds = array<i64: 32, 64>}, {pipeline_mode = #tpu.pipeline_mode<synchronous>, transform_indices = @transform_17, window_bounds = array<i64: 1, 64>}, {pipeline_mode = #tpu.pipeline_mode<synchronous>, transform_indices = @transform_18, window_bounds = array<i64: 1, 64>}, {pipeline_mode = #tpu.pipeline_mode<synchronous>, transform_indices = @transform_19, window_bounds = array<i64: 64, 32>}, {pipeline_mode = #tpu.pipeline_mode<synchronous>, transform_indices = @transform_20, window_bounds = array<i64: 1, 32>}, {transform_indices = @transform_21, window_bounds = array<i64: 1, 16, 32>}]} {
    %c16_i32 = arith.constant 16 : i32
    %0 = arith.muli %arg1, %c16_i32 : i32
    %1 = tpu.assume_multiple %0, 16 : i32
    %c0_i32 = arith.constant 0 : i32
    %2 = arith.cmpi eq, %arg1, %c0_i32 : i32
    %3 = arith.extui %2 : i1 to i32
    %c0_i32_0 = arith.constant 0 : i32
    %4 = arith.cmpi ne, %3, %c0_i32_0 : i32
    scf.if %4 {
      %c0_66 = arith.constant 0 : index
      %c0_67 = arith.constant 0 : index
      %c0_68 = arith.constant 0 : index
      %184 = vector.load %arg2[%c0_66, %c0_67, %c0_68] : memref<1x32x32xf32, #tpu.memory_space<vmem>>, vector<1x32x32xf32>
      %185 = vector.shape_cast %184 : vector<1x32x32xf32> to vector<32x32xf32>
      %c0_69 = arith.constant 0 : index
      %c0_70 = arith.constant 0 : index
      %186 = vector.load %arg5[%c0_69, %c0_70] : memref<1x32xf32, #tpu.memory_space<vmem>>, vector<1x32xf32>
      %187 = vector.shape_cast %186 : vector<1x32xf32> to vector<32xf32>
      %c0_71 = arith.constant 0 : index
      %c0_72 = arith.constant 0 : index
      %188 = vector.load %arg6[%c0_71, %c0_72] : memref<1x32xf32, #tpu.memory_space<vmem>>, vector<1x32xf32>
      %189 = vector.shape_cast %188 : vector<1x32xf32> to vector<32xf32>
      %cst_73 = arith.constant dense<0.000000e+00> : vector<32xf32>
      %190 = vector.multi_reduction <add>, %185, %cst_73 [1] : vector<32x32xf32> to vector<32xf32>
      %191 = vector.shape_cast %190 : vector<32xf32> to vector<32x1xf32>
      %cst_74 = arith.constant 3.200000e+01 : f32
      %192 = vector.broadcast %cst_74 : f32 to vector<32x1xf32>
      %193 = arith.divf %191, %192 : vector<32x1xf32>
      %194 = vector.broadcast %193 : vector<32x1xf32> to vector<32x32xf32>
      %195 = arith.subf %185, %194 : vector<32x32xf32>
      %196 = arith.mulf %195, %195 : vector<32x32xf32>
      %cst_75 = arith.constant dense<0.000000e+00> : vector<32xf32>
      %197 = vector.multi_reduction <add>, %196, %cst_75 [1] : vector<32x32xf32> to vector<32xf32>
      %198 = vector.shape_cast %197 : vector<32xf32> to vector<32x1xf32>
      %cst_76 = arith.constant 3.200000e+01 : f32
      %199 = vector.broadcast %cst_76 : f32 to vector<32x1xf32>
      %200 = arith.divf %198, %199 : vector<32x1xf32>
      %201 = vector.broadcast %193 : vector<32x1xf32> to vector<32x32xf32>
      %202 = arith.subf %185, %201 : vector<32x32xf32>
      %cst_77 = arith.constant 9.99999974E-6 : f32
      %203 = vector.broadcast %cst_77 : f32 to vector<32x1xf32>
      %204 = arith.addf %200, %203 : vector<32x1xf32>
      %205 = math.rsqrt %204 : vector<32x1xf32>
      %206 = vector.broadcast %205 : vector<32x1xf32> to vector<32x32xf32>
      %207 = arith.mulf %202, %206 : vector<32x32xf32>
      %208 = vector.shape_cast %187 : vector<32xf32> to vector<1x32xf32>
      %209 = vector.broadcast %208 : vector<1x32xf32> to vector<32x32xf32>
      %210 = arith.mulf %207, %209 : vector<32x32xf32>
      %211 = vector.shape_cast %189 : vector<32xf32> to vector<1x32xf32>
      %212 = vector.broadcast %211 : vector<1x32xf32> to vector<32x32xf32>
      %213 = arith.addf %210, %212 : vector<32x32xf32>
      %c0_78 = arith.constant 0 : index
      %c0_79 = arith.constant 0 : index
      %214 = vector.load %arg8[%c0_78, %c0_79] : memref<32x32xbf16, #tpu.memory_space<vmem>>, vector<32x32xbf16>
      %215 = arith.truncf %213 : vector<32x32xf32> to vector<32x32xbf16>
      %cst_80 = arith.constant dense<0.000000e+00> : vector<32x32xf32>
      %216 = tpu.matmul %215, %214, %cst_80 {dimension_numbers = #tpu.dot_dimension_numbers<[1], [0], [0], [1], [0, 0, 1, 1], [], []>} : vector<32x32xbf16>, vector<32x32xbf16>, vector<32x32xf32> -> vector<32x32xf32>
      %c0_81 = arith.constant 0 : index
      %c0_82 = arith.constant 0 : index
      %217 = vector.load %arg11[%c0_81, %c0_82] : memref<1x32xf32, #tpu.memory_space<vmem>>, vector<1x32xf32>
      %218 = vector.shape_cast %217 : vector<1x32xf32> to vector<32xf32>
      %219 = vector.shape_cast %218 : vector<32xf32> to vector<1x32xf32>
      %220 = vector.broadcast %219 : vector<1x32xf32> to vector<32x32xf32>
      %221 = arith.addf %216, %220 : vector<32x32xf32>
      %c0_83 = arith.constant 0 : index
      %c0_84 = arith.constant 0 : index
      %222 = vector.load %arg9[%c0_83, %c0_84] : memref<32x32xbf16, #tpu.memory_space<vmem>>, vector<32x32xbf16>
      %223 = arith.truncf %213 : vector<32x32xf32> to vector<32x32xbf16>
      %cst_85 = arith.constant dense<0.000000e+00> : vector<32x32xf32>
      %224 = tpu.matmul %223, %222, %cst_85 {dimension_numbers = #tpu.dot_dimension_numbers<[1], [0], [0], [1], [0, 0, 1, 1], [], []>} : vector<32x32xbf16>, vector<32x32xbf16>, vector<32x32xf32> -> vector<32x32xf32>
      %c0_86 = arith.constant 0 : index
      %c0_87 = arith.constant 0 : index
      %225 = vector.load %arg12[%c0_86, %c0_87] : memref<1x32xf32, #tpu.memory_space<vmem>>, vector<1x32xf32>
      %226 = vector.shape_cast %225 : vector<1x32xf32> to vector<32xf32>
      %227 = vector.shape_cast %226 : vector<32xf32> to vector<1x32xf32>
      %228 = vector.broadcast %227 : vector<1x32xf32> to vector<32x32xf32>
      %229 = arith.addf %224, %228 : vector<32x32xf32>
      %c0_88 = arith.constant 0 : index
      %c0_89 = arith.constant 0 : index
      %c0_90 = arith.constant 0 : index
      %230 = vector.load %arg3[%c0_88, %c0_89, %c0_90] : memref<1x32x8xf32, #tpu.memory_space<vmem>>, vector<1x32x8xf32>
      %231 = vector.shape_cast %230 : vector<1x32x8xf32> to vector<32x8xf32>
      %c0_91 = arith.constant 0 : index
      %c0_92 = arith.constant 0 : index
      %c0_93 = arith.constant 0 : index
      %232 = vector.load %arg4[%c0_91, %c0_92, %c0_93] : memref<1x32x8xf32, #tpu.memory_space<vmem>>, vector<1x32x8xf32>
      %233 = vector.shape_cast %232 : vector<1x32x8xf32> to vector<32x8xf32>
      %234 = vector.extract_strided_slice %221 {offsets = [0, 0], sizes = [32, 8], strides = [1, 1]} : vector<32x32xf32> to vector<32x8xf32>
      %235 = vector.extract_strided_slice %221 {offsets = [0, 8], sizes = [32, 8], strides = [1, 1]} : vector<32x32xf32> to vector<32x8xf32>
      %236 = arith.mulf %234, %231 : vector<32x8xf32>
      %237 = arith.mulf %235, %233 : vector<32x8xf32>
      %238 = arith.subf %236, %237 : vector<32x8xf32>
      %239 = arith.mulf %235, %231 : vector<32x8xf32>
      %240 = arith.mulf %234, %233 : vector<32x8xf32>
      %241 = arith.addf %239, %240 : vector<32x8xf32>
      %242 = vector.extract_strided_slice %221 {offsets = [0, 16], sizes = [32, 8], strides = [1, 1]} : vector<32x32xf32> to vector<32x8xf32>
      %243 = vector.extract_strided_slice %221 {offsets = [0, 24], sizes = [32, 8], strides = [1, 1]} : vector<32x32xf32> to vector<32x8xf32>
      %244 = arith.mulf %242, %231 : vector<32x8xf32>
      %245 = arith.mulf %243, %233 : vector<32x8xf32>
      %246 = arith.subf %244, %245 : vector<32x8xf32>
      %247 = arith.mulf %243, %231 : vector<32x8xf32>
      %248 = arith.mulf %242, %233 : vector<32x8xf32>
      %249 = arith.addf %247, %248 : vector<32x8xf32>
      %250 = tpu.concatenate %238, %241, %246, %249 in 1 : vector<32x8xf32>, vector<32x8xf32>, vector<32x8xf32>, vector<32x8xf32> -> vector<32x32xf32>
      %251 = arith.truncf %250 : vector<32x32xf32> to vector<32x32xbf16>
      %c0_94 = arith.constant 0 : index
      %c0_95 = arith.constant 0 : index
      %252 = vector.load %arg24[%c0_94, %c0_95] : memref<32x32xbf16, #tpu.memory_space<vmem>>, vector<32x32xbf16>
      tpu.vector_store %arg24[%c0_94, %c0_95], %251 {strides = array<i32>} : memref<32x32xbf16, #tpu.memory_space<vmem>>, vector<32x32xbf16>,
      %253 = arith.truncf %229 : vector<32x32xf32> to vector<32x32xbf16>
      %c0_96 = arith.constant 0 : index
      %c0_97 = arith.constant 0 : index
      %254 = vector.load %arg25[%c0_96, %c0_97] : memref<32x32xbf16, #tpu.memory_space<vmem>>, vector<32x32xbf16>
      tpu.vector_store %arg25[%c0_96, %c0_97], %253 {strides = array<i32>} : memref<32x32xbf16, #tpu.memory_space<vmem>>, vector<32x32xbf16>,
    } else {
    }
    %c0 = arith.constant 0 : index
    %5 = arith.index_cast %1 : i32 to index
    %c0_1 = arith.constant 0 : index
    %6 = vector.load %arg2[%c0, %5, %c0_1] : memref<1x32x32xf32, #tpu.memory_space<vmem>>, vector<1x16x32xf32>
    %7 = vector.shape_cast %6 : vector<1x16x32xf32> to vector<16x32xf32>
    %c0_2 = arith.constant 0 : index
    %c0_3 = arith.constant 0 : index
    %8 = vector.load %arg5[%c0_2, %c0_3] : memref<1x32xf32, #tpu.memory_space<vmem>>, vector<1x32xf32>
    %9 = vector.shape_cast %8 : vector<1x32xf32> to vector<32xf32>
    %c0_4 = arith.constant 0 : index
    %c0_5 = arith.constant 0 : index
    %10 = vector.load %arg6[%c0_4, %c0_5] : memref<1x32xf32, #tpu.memory_space<vmem>>, vector<1x32xf32>
    %11 = vector.shape_cast %10 : vector<1x32xf32> to vector<32xf32>
    %cst = arith.constant dense<0.000000e+00> : vector<16xf32>
    %12 = vector.multi_reduction <add>, %7, %cst [1] : vector<16x32xf32> to vector<16xf32>
    %13 = vector.shape_cast %12 : vector<16xf32> to vector<16x1xf32>
    %cst_6 = arith.constant 3.200000e+01 : f32
    %14 = vector.broadcast %cst_6 : f32 to vector<16x1xf32>
    %15 = arith.divf %13, %14 : vector<16x1xf32>
    %16 = vector.broadcast %15 : vector<16x1xf32> to vector<16x32xf32>
    %17 = arith.subf %7, %16 : vector<16x32xf32>
    %18 = arith.mulf %17, %17 : vector<16x32xf32>
    %cst_7 = arith.constant dense<0.000000e+00> : vector<16xf32>
    %19 = vector.multi_reduction <add>, %18, %cst_7 [1] : vector<16x32xf32> to vector<16xf32>
    %20 = vector.shape_cast %19 : vector<16xf32> to vector<16x1xf32>
    %cst_8 = arith.constant 3.200000e+01 : f32
    %21 = vector.broadcast %cst_8 : f32 to vector<16x1xf32>
    %22 = arith.divf %20, %21 : vector<16x1xf32>
    %23 = vector.broadcast %15 : vector<16x1xf32> to vector<16x32xf32>
    %24 = arith.subf %7, %23 : vector<16x32xf32>
    %cst_9 = arith.constant 9.99999974E-6 : f32
    %25 = vector.broadcast %cst_9 : f32 to vector<16x1xf32>
    %26 = arith.addf %22, %25 : vector<16x1xf32>
    %27 = math.rsqrt %26 : vector<16x1xf32>
    %28 = vector.broadcast %27 : vector<16x1xf32> to vector<16x32xf32>
    %29 = arith.mulf %24, %28 : vector<16x32xf32>
    %30 = vector.shape_cast %9 : vector<32xf32> to vector<1x32xf32>
    %31 = vector.broadcast %30 : vector<1x32xf32> to vector<16x32xf32>
    %32 = arith.mulf %29, %31 : vector<16x32xf32>
    %33 = vector.shape_cast %11 : vector<32xf32> to vector<1x32xf32>
    %34 = vector.broadcast %33 : vector<1x32xf32> to vector<16x32xf32>
    %35 = arith.addf %32, %34 : vector<16x32xf32>
    %c0_10 = arith.constant 0 : index
    %c0_11 = arith.constant 0 : index
    %36 = vector.load %arg7[%c0_10, %c0_11] : memref<32x32xbf16, #tpu.memory_space<vmem>>, vector<32x32xbf16>
    %37 = arith.truncf %35 : vector<16x32xf32> to vector<16x32xbf16>
    %cst_12 = arith.constant dense<0.000000e+00> : vector<16x32xf32>
    %38 = tpu.matmul %37, %36, %cst_12 {dimension_numbers = #tpu.dot_dimension_numbers<[1], [0], [0], [1], [0, 0, 1, 1], [], []>} : vector<16x32xbf16>, vector<32x32xbf16>, vector<16x32xf32> -> vector<16x32xf32>
    %c0_13 = arith.constant 0 : index
    %c0_14 = arith.constant 0 : index
    %39 = vector.load %arg10[%c0_13, %c0_14] : memref<1x32xf32, #tpu.memory_space<vmem>>, vector<1x32xf32>
    %40 = vector.shape_cast %39 : vector<1x32xf32> to vector<32xf32>
    %41 = vector.shape_cast %40 : vector<32xf32> to vector<1x32xf32>
    %42 = vector.broadcast %41 : vector<1x32xf32> to vector<16x32xf32>
    %43 = arith.addf %38, %42 : vector<16x32xf32>
    %c0_15 = arith.constant 0 : index
    %44 = arith.index_cast %1 : i32 to index
    %c0_16 = arith.constant 0 : index
    %45 = vector.load %arg3[%c0_15, %44, %c0_16] : memref<1x32x8xf32, #tpu.memory_space<vmem>>, vector<1x16x8xf32>
    %46 = vector.shape_cast %45 : vector<1x16x8xf32> to vector<16x8xf32>
    %c0_17 = arith.constant 0 : index
    %47 = arith.index_cast %1 : i32 to index
    %c0_18 = arith.constant 0 : index
    %48 = vector.load %arg4[%c0_17, %47, %c0_18] : memref<1x32x8xf32, #tpu.memory_space<vmem>>, vector<1x16x8xf32>
    %49 = vector.shape_cast %48 : vector<1x16x8xf32> to vector<16x8xf32>
    %50 = vector.extract_strided_slice %43 {offsets = [0, 0], sizes = [16, 8], strides = [1, 1]} : vector<16x32xf32> to vector<16x8xf32>
    %51 = vector.extract_strided_slice %43 {offsets = [0, 8], sizes = [16, 8], strides = [1, 1]} : vector<16x32xf32> to vector<16x8xf32>
    %52 = arith.mulf %50, %46 : vector<16x8xf32>
    %53 = arith.mulf %51, %49 : vector<16x8xf32>
    %54 = arith.subf %52, %53 : vector<16x8xf32>
    %55 = arith.mulf %51, %46 : vector<16x8xf32>
    %56 = arith.mulf %50, %49 : vector<16x8xf32>
    %57 = arith.addf %55, %56 : vector<16x8xf32>
    %58 = vector.extract_strided_slice %43 {offsets = [0, 16], sizes = [16, 8], strides = [1, 1]} : vector<16x32xf32> to vector<16x8xf32>
    %59 = vector.extract_strided_slice %43 {offsets = [0, 24], sizes = [16, 8], strides = [1, 1]} : vector<16x32xf32> to vector<16x8xf32>
    %60 = arith.mulf %58, %46 : vector<16x8xf32>
    %61 = arith.mulf %59, %49 : vector<16x8xf32>
    %62 = arith.subf %60, %61 : vector<16x8xf32>
    %63 = arith.mulf %59, %46 : vector<16x8xf32>
    %64 = arith.mulf %58, %49 : vector<16x8xf32>
    %65 = arith.addf %63, %64 : vector<16x8xf32>
    %66 = tpu.concatenate %54, %57, %62, %65 in 1 : vector<16x8xf32>, vector<16x8xf32>, vector<16x8xf32>, vector<16x8xf32> -> vector<16x32xf32>
    %67 = arith.truncf %66 : vector<16x32xf32> to vector<16x32xbf16>
    %68 = tpu.iota {dimensions = array<i32: 0>} : vector<16x32xi32>
    %69 = vector.broadcast %1 : i32 to vector<16x32xi32>
    %70 = arith.addi %68, %69 : vector<16x32xi32>
    %71 = tpu.iota {dimensions = array<i32: 1>} : vector<16x32xi32>
    %72 = arith.cmpi sge, %70, %71 : vector<16x32xi32>
    %c0_19 = arith.constant 0 : index
    %c0_20 = arith.constant 0 : index
    %73 = vector.load %arg24[%c0_19, %c0_20] : memref<32x32xbf16, #tpu.memory_space<vmem>>, vector<32x32xbf16>
    %c0_21 = arith.constant 0 : index
    %c0_22 = arith.constant 0 : index
    %74 = vector.load %arg25[%c0_21, %c0_22] : memref<32x32xbf16, #tpu.memory_space<vmem>>, vector<32x32xbf16>
    %75 = vector.extract_strided_slice %67 {offsets = [0, 0], sizes = [16, 16], strides = [1, 1]} : vector<16x32xbf16> to vector<16x16xbf16>
    %76 = vector.extract_strided_slice %73 {offsets = [0, 0], sizes = [32, 16], strides = [1, 1]} : vector<32x32xbf16> to vector<32x16xbf16>
    %cst_23 = arith.constant dense<0.000000e+00> : vector<16x32xf32>
    %77 = tpu.matmul %75, %76, %cst_23 {dimension_numbers = #tpu.dot_dimension_numbers<[1], [1], [0], [0], [0, 0, 1, 0], [], []>} : vector<16x16xbf16>, vector<32x16xbf16>, vector<16x32xf32> -> vector<16x32xf32>
    %cst_24 = arith.constant -1.000000e+30 : f32
    %78 = vector.broadcast %cst_24 : f32 to vector<16x32xf32>
    %79 = arith.select %72, %77, %78 : vector<16x32xi1>, vector<16x32xf32>
    %cst_25 = arith.constant dense<0xFF800000> : vector<16xf32>
    %80 = vector.multi_reduction <maximumf>, %79, %cst_25 [1] : vector<16x32xf32> to vector<16xf32>
    %81 = vector.shape_cast %80 : vector<16xf32> to vector<16x1xf32>
    %82 = vector.broadcast %81 : vector<16x1xf32> to vector<16x32xf32>
    %83 = arith.subf %79, %82 : vector<16x32xf32>
    %84 = math.exp %83 : vector<16x32xf32>
    %cst_26 = arith.constant dense<0.000000e+00> : vector<16xf32>
    %85 = vector.multi_reduction <add>, %84, %cst_26 [1] : vector<16x32xf32> to vector<16xf32>
    %86 = vector.shape_cast %85 : vector<16xf32> to vector<16x1xf32>
    %87 = tpu.reciprocal %86 {approx = true} : vector<16x1xf32> -> vector<16x1xf32>
    %88 = vector.broadcast %87 : vector<16x1xf32> to vector<16x32xf32>
    %89 = arith.mulf %84, %88 : vector<16x32xf32>
    %90 = vector.extract_strided_slice %74 {offsets = [0, 0], sizes = [32, 16], strides = [1, 1]} : vector<32x32xbf16> to vector<32x16xbf16>
    %91 = arith.truncf %89 : vector<16x32xf32> to vector<16x32xbf16>
    %cst_27 = arith.constant dense<0.000000e+00> : vector<16x16xf32>
    %92 = tpu.matmul %91, %90, %cst_27 {dimension_numbers = #tpu.dot_dimension_numbers<[1], [0], [0], [1], [0, 0, 1, 1], [], []>} : vector<16x32xbf16>, vector<32x16xbf16>, vector<16x16xf32> -> vector<16x16xf32>
    %93 = vector.extract_strided_slice %67 {offsets = [0, 16], sizes = [16, 16], strides = [1, 1]} : vector<16x32xbf16> to vector<16x16xbf16>
    %94 = vector.extract_strided_slice %73 {offsets = [0, 16], sizes = [32, 16], strides = [1, 1]} : vector<32x32xbf16> to vector<32x16xbf16>
    %cst_28 = arith.constant dense<0.000000e+00> : vector<16x32xf32>
    %95 = tpu.matmul %93, %94, %cst_28 {dimension_numbers = #tpu.dot_dimension_numbers<[1], [1], [0], [0], [0, 0, 1, 0], [], []>} : vector<16x16xbf16>, vector<32x16xbf16>, vector<16x32xf32> -> vector<16x32xf32>
    %cst_29 = arith.constant -1.000000e+30 : f32
    %96 = vector.broadcast %cst_29 : f32 to vector<16x32xf32>
    %97 = arith.select %72, %95, %96 : vector<16x32xi1>, vector<16x32xf32>
    %cst_30 = arith.constant dense<0xFF800000> : vector<16xf32>
    %98 = vector.multi_reduction <maximumf>, %97, %cst_30 [1] : vector<16x32xf32> to vector<16xf32>
    %99 = vector.shape_cast %98 : vector<16xf32> to vector<16x1xf32>
    %100 = vector.broadcast %99 : vector<16x1xf32> to vector<16x32xf32>
    %101 = arith.subf %97, %100 : vector<16x32xf32>
    %102 = math.exp %101 : vector<16x32xf32>
    %cst_31 = arith.constant dense<0.000000e+00> : vector<16xf32>
    %103 = vector.multi_reduction <add>, %102, %cst_31 [1] : vector<16x32xf32> to vector<16xf32>
    %104 = vector.shape_cast %103 : vector<16xf32> to vector<16x1xf32>
    %105 = tpu.reciprocal %104 {approx = true} : vector<16x1xf32> -> vector<16x1xf32>
    %106 = vector.broadcast %105 : vector<16x1xf32> to vector<16x32xf32>
    %107 = arith.mulf %102, %106 : vector<16x32xf32>
    %108 = vector.extract_strided_slice %74 {offsets = [0, 16], sizes = [32, 16], strides = [1, 1]} : vector<32x32xbf16> to vector<32x16xbf16>
    %109 = arith.truncf %107 : vector<16x32xf32> to vector<16x32xbf16>
    %cst_32 = arith.constant dense<0.000000e+00> : vector<16x16xf32>
    %110 = tpu.matmul %109, %108, %cst_32 {dimension_numbers = #tpu.dot_dimension_numbers<[1], [0], [0], [1], [0, 0, 1, 1], [], []>} : vector<16x32xbf16>, vector<32x16xbf16>, vector<16x16xf32> -> vector<16x16xf32>
    %111 = tpu.concatenate %92, %110 in 1 : vector<16x16xf32>, vector<16x16xf32> -> vector<16x32xf32>
    %c0_33 = arith.constant 0 : index
    %c0_34 = arith.constant 0 : index
    %112 = vector.load %arg13[%c0_33, %c0_34] : memref<32x32xbf16, #tpu.memory_space<vmem>>, vector<32x32xbf16>
    %113 = arith.truncf %111 : vector<16x32xf32> to vector<16x32xbf16>
    %cst_35 = arith.constant dense<0.000000e+00> : vector<16x32xf32>
    %114 = tpu.matmul %113, %112, %cst_35 {dimension_numbers = #tpu.dot_dimension_numbers<[1], [0], [0], [1], [0, 0, 1, 1], [], []>} : vector<16x32xbf16>, vector<32x32xbf16>, vector<16x32xf32> -> vector<16x32xf32>
    %115 = arith.addf %7, %114 : vector<16x32xf32>
    %c0_36 = arith.constant 0 : index
    %c0_37 = arith.constant 0 : index
    %116 = vector.load %arg14[%c0_36, %c0_37] : memref<1x32xf32, #tpu.memory_space<vmem>>, vector<1x32xf32>
    %117 = vector.shape_cast %116 : vector<1x32xf32> to vector<32xf32>
    %118 = vector.shape_cast %117 : vector<32xf32> to vector<1x32xf32>
    %119 = vector.broadcast %118 : vector<1x32xf32> to vector<16x32xf32>
    %120 = arith.addf %115, %119 : vector<16x32xf32>
    %c0_38 = arith.constant 0 : index
    %c0_39 = arith.constant 0 : index
    %121 = vector.load %arg15[%c0_38, %c0_39] : memref<1x32xf32, #tpu.memory_space<vmem>>, vector<1x32xf32>
    %122 = vector.shape_cast %121 : vector<1x32xf32> to vector<32xf32>
    %c0_40 = arith.constant 0 : index
    %c0_41 = arith.constant 0 : index
    %123 = vector.load %arg16[%c0_40, %c0_41] : memref<1x32xf32, #tpu.memory_space<vmem>>, vector<1x32xf32>
    %124 = vector.shape_cast %123 : vector<1x32xf32> to vector<32xf32>
    %cst_42 = arith.constant dense<0.000000e+00> : vector<16xf32>
    %125 = vector.multi_reduction <add>, %120, %cst_42 [1] : vector<16x32xf32> to vector<16xf32>
    %126 = vector.shape_cast %125 : vector<16xf32> to vector<16x1xf32>
    %cst_43 = arith.constant 3.200000e+01 : f32
    %127 = vector.broadcast %cst_43 : f32 to vector<16x1xf32>
    %128 = arith.divf %126, %127 : vector<16x1xf32>
    %129 = vector.broadcast %128 : vector<16x1xf32> to vector<16x32xf32>
    %130 = arith.subf %120, %129 : vector<16x32xf32>
    %131 = arith.mulf %130, %130 : vector<16x32xf32>
    %cst_44 = arith.constant dense<0.000000e+00> : vector<16xf32>
    %132 = vector.multi_reduction <add>, %131, %cst_44 [1] : vector<16x32xf32> to vector<16xf32>
    %133 = vector.shape_cast %132 : vector<16xf32> to vector<16x1xf32>
    %cst_45 = arith.constant 3.200000e+01 : f32
    %134 = vector.broadcast %cst_45 : f32 to vector<16x1xf32>
    %135 = arith.divf %133, %134 : vector<16x1xf32>
    %136 = vector.broadcast %128 : vector<16x1xf32> to vector<16x32xf32>
    %137 = arith.subf %120, %136 : vector<16x32xf32>
    %cst_46 = arith.constant 9.99999974E-6 : f32
    %138 = vector.broadcast %cst_46 : f32 to vector<16x1xf32>
    %139 = arith.addf %135, %138 : vector<16x1xf32>
    %140 = math.rsqrt %139 : vector<16x1xf32>
    %141 = vector.broadcast %140 : vector<16x1xf32> to vector<16x32xf32>
    %142 = arith.mulf %137, %141 : vector<16x32xf32>
    %143 = vector.shape_cast %122 : vector<32xf32> to vector<1x32xf32>
    %144 = vector.broadcast %143 : vector<1x32xf32> to vector<16x32xf32>
    %145 = arith.mulf %142, %144 : vector<16x32xf32>
    %146 = vector.shape_cast %124 : vector<32xf32> to vector<1x32xf32>
    %147 = vector.broadcast %146 : vector<1x32xf32> to vector<16x32xf32>
    %148 = arith.addf %145, %147 : vector<16x32xf32>
    %c0_47 = arith.constant 0 : index
    %c0_48 = arith.constant 0 : index
    %149 = vector.load %arg17[%c0_47, %c0_48] : memref<32x64xbf16, #tpu.memory_space<vmem>>, vector<32x64xbf16>
    %150 = arith.truncf %148 : vector<16x32xf32> to vector<16x32xbf16>
    %cst_49 = arith.constant dense<0.000000e+00> : vector<16x64xf32>
    %151 = tpu.matmul %150, %149, %cst_49 {dimension_numbers = #tpu.dot_dimension_numbers<[1], [0], [0], [1], [0, 0, 1, 1], [], []>} : vector<16x32xbf16>, vector<32x64xbf16>, vector<16x64xf32> -> vector<16x64xf32>
    %c0_50 = arith.constant 0 : index
    %c0_51 = arith.constant 0 : index
    %152 = vector.load %arg19[%c0_50, %c0_51] : memref<1x64xf32, #tpu.memory_space<vmem>>, vector<1x64xf32>
    %153 = vector.shape_cast %152 : vector<1x64xf32> to vector<64xf32>
    %154 = vector.shape_cast %153 : vector<64xf32> to vector<1x64xf32>
    %155 = vector.broadcast %154 : vector<1x64xf32> to vector<16x64xf32>
    %156 = arith.addf %151, %155 : vector<16x64xf32>
    %c0_52 = arith.constant 0 : index
    %c0_53 = arith.constant 0 : index
    %157 = vector.load %arg18[%c0_52, %c0_53] : memref<32x64xbf16, #tpu.memory_space<vmem>>, vector<32x64xbf16>
    %158 = arith.truncf %148 : vector<16x32xf32> to vector<16x32xbf16>
    %cst_54 = arith.constant dense<0.000000e+00> : vector<16x64xf32>
    %159 = tpu.matmul %158, %157, %cst_54 {dimension_numbers = #tpu.dot_dimension_numbers<[1], [0], [0], [1], [0, 0, 1, 1], [], []>} : vector<16x32xbf16>, vector<32x64xbf16>, vector<16x64xf32> -> vector<16x64xf32>
    %c0_55 = arith.constant 0 : index
    %c0_56 = arith.constant 0 : index
    %160 = vector.load %arg20[%c0_55, %c0_56] : memref<1x64xf32, #tpu.memory_space<vmem>>, vector<1x64xf32>
    %161 = vector.shape_cast %160 : vector<1x64xf32> to vector<64xf32>
    %162 = vector.shape_cast %161 : vector<64xf32> to vector<1x64xf32>
    %163 = vector.broadcast %162 : vector<1x64xf32> to vector<16x64xf32>
    %164 = arith.addf %159, %163 : vector<16x64xf32>
    %165 = arith.negf %164 : vector<16x64xf32>
    %166 = math.exp %165 : vector<16x64xf32>
    %cst_57 = arith.constant 1.000000e+00 : f32
    %167 = vector.broadcast %cst_57 : f32 to vector<16x64xf32>
    %168 = arith.addf %167, %166 : vector<16x64xf32>
    %169 = arith.divf %167, %168 : vector<16x64xf32>
    %170 = arith.mulf %164, %169 : vector<16x64xf32>
    %171 = arith.mulf %156, %170 : vector<16x64xf32>
    %c0_58 = arith.constant 0 : index
    %c0_59 = arith.constant 0 : index
    %172 = vector.load %arg21[%c0_58, %c0_59] : memref<64x32xbf16, #tpu.memory_space<vmem>>, vector<64x32xbf16>
    %173 = arith.truncf %171 : vector<16x64xf32> to vector<16x64xbf16>
    %cst_60 = arith.constant dense<0.000000e+00> : vector<16x32xf32>
    %174 = tpu.matmul %173, %172, %cst_60 {dimension_numbers = #tpu.dot_dimension_numbers<[1], [0], [0], [1], [0, 0, 1, 1], [], []>} : vector<16x64xbf16>, vector<64x32xbf16>, vector<16x32xf32> -> vector<16x32xf32>
    %175 = arith.addf %120, %174 : vector<16x32xf32>
    %c0_61 = arith.constant 0 : index
    %c0_62 = arith.constant 0 : index
    %176 = vector.load %arg22[%c0_61, %c0_62] : memref<1x32xf32, #tpu.memory_space<vmem>>, vector<1x32xf32>
    %177 = vector.shape_cast %176 : vector<1x32xf32> to vector<32xf32>
    %178 = vector.shape_cast %177 : vector<32xf32> to vector<1x32xf32>
    %179 = vector.broadcast %178 : vector<1x32xf32> to vector<16x32xf32>
    %180 = arith.addf %175, %179 : vector<16x32xf32>
    %c0_63 = arith.constant 0 : index
    %c0_64 = arith.constant 0 : index
    %c0_65 = arith.constant 0 : index
    %181 = vector.load %arg23[%c0_63, %c0_64, %c0_65] : memref<1x16x32xf32, #tpu.memory_space<vmem>>, vector<1x16x32xf32>
    %182 = vector.shape_cast %181 : vector<1x16x32xf32> to vector<16x32xf32>
    %183 = vector.shape_cast %180 : vector<16x32xf32> to vector<1x16x32xf32>
    tpu.vector_store %arg23[%c0_63, %c0_64, %c0_65], %183 {strides = array<i32>} : memref<1x16x32xf32, #tpu.memory_space<vmem>>, vector<1x16x32xf32>,
    return
  }
  func.func @transform_0(%arg0: i32, %arg1: i32) -> (i32, i32, i32) {
    %c0_i32 = arith.constant 0 : i32
    %c0_i32_0 = arith.constant 0 : i32
    %c0_i32_1 = arith.constant 0 : i32
    return %arg0, %c0_i32, %c0_i32_0 : i32, i32, i32
  }
  func.func @transform_1(%arg0: i32, %arg1: i32) -> (i32, i32, i32) {
    %c0_i32 = arith.constant 0 : i32
    %c0_i32_0 = arith.constant 0 : i32
    %c0_i32_1 = arith.constant 0 : i32
    return %arg0, %c0_i32, %c0_i32_0 : i32, i32, i32
  }
  func.func @transform_2(%arg0: i32, %arg1: i32) -> (i32, i32, i32) {
    %c0_i32 = arith.constant 0 : i32
    %c0_i32_0 = arith.constant 0 : i32
    %c0_i32_1 = arith.constant 0 : i32
    return %arg0, %c0_i32, %c0_i32_0 : i32, i32, i32
  }
  func.func @transform_3(%arg0: i32, %arg1: i32) -> (i32, i32) {
    %c0_i32 = arith.constant 0 : i32
    %c0_i32_0 = arith.constant 0 : i32
    %c0_i32_1 = arith.constant 0 : i32
    return %c0_i32, %c0_i32_0 : i32, i32
  }
  func.func @transform_4(%arg0: i32, %arg1: i32) -> (i32, i32) {
    %c0_i32 = arith.constant 0 : i32
    %c0_i32_0 = arith.constant 0 : i32
    %c0_i32_1 = arith.constant 0 : i32
    return %c0_i32, %c0_i32_0 : i32, i32
  }
  func.func @transform_5(%arg0: i32, %arg1: i32) -> (i32, i32) {
    %c0_i32 = arith.constant 0 : i32
    %c0_i32_0 = arith.constant 0 : i32
    %c0_i32_1 = arith.constant 0 : i32
    return %c0_i32, %c0_i32_0 : i32, i32
  }
  func.func @transform_6(%arg0: i32, %arg1: i32) -> (i32, i32) {
    %c0_i32 = arith.constant 0 : i32
    %c0_i32_0 = arith.constant 0 : i32
    %c0_i32_1 = arith.constant 0 : i32
    return %c0_i32, %c0_i32_0 : i32, i32
  }
  func.func @transform_7(%arg0: i32, %arg1: i32) -> (i32, i32) {
    %c0_i32 = arith.constant 0 : i32
    %c0_i32_0 = arith.constant 0 : i32
    %c0_i32_1 = arith.constant 0 : i32
    return %c0_i32, %c0_i32_0 : i32, i32
  }
  func.func @transform_8(%arg0: i32, %arg1: i32) -> (i32, i32) {
    %c0_i32 = arith.constant 0 : i32
    %c0_i32_0 = arith.constant 0 : i32
    %c0_i32_1 = arith.constant 0 : i32
    return %c0_i32, %c0_i32_0 : i32, i32
  }
  func.func @transform_9(%arg0: i32, %arg1: i32) -> (i32, i32) {
    %c0_i32 = arith.constant 0 : i32
    %c0_i32_0 = arith.constant 0 : i32
    %c0_i32_1 = arith.constant 0 : i32
    return %c0_i32, %c0_i32_0 : i32, i32
  }
  func.func @transform_10(%arg0: i32, %arg1: i32) -> (i32, i32) {
    %c0_i32 = arith.constant 0 : i32
    %c0_i32_0 = arith.constant 0 : i32
    %c0_i32_1 = arith.constant 0 : i32
    return %c0_i32, %c0_i32_0 : i32, i32
  }
  func.func @transform_11(%arg0: i32, %arg1: i32) -> (i32, i32) {
    %c0_i32 = arith.constant 0 : i32
    %c0_i32_0 = arith.constant 0 : i32
    %c0_i32_1 = arith.constant 0 : i32
    return %c0_i32, %c0_i32_0 : i32, i32
  }
  func.func @transform_12(%arg0: i32, %arg1: i32) -> (i32, i32) {
    %c0_i32 = arith.constant 0 : i32
    %c0_i32_0 = arith.constant 0 : i32
    %c0_i32_1 = arith.constant 0 : i32
    return %c0_i32, %c0_i32_0 : i32, i32
  }
  func.func @transform_13(%arg0: i32, %arg1: i32) -> (i32, i32) {
    %c0_i32 = arith.constant 0 : i32
    %c0_i32_0 = arith.constant 0 : i32
    %c0_i32_1 = arith.constant 0 : i32
    return %c0_i32, %c0_i32_0 : i32, i32
  }
  func.func @transform_14(%arg0: i32, %arg1: i32) -> (i32, i32) {
    %c0_i32 = arith.constant 0 : i32
    %c0_i32_0 = arith.constant 0 : i32
    %c0_i32_1 = arith.constant 0 : i32
    return %c0_i32, %c0_i32_0 : i32, i32
  }
  func.func @transform_15(%arg0: i32, %arg1: i32) -> (i32, i32) {
    %c0_i32 = arith.constant 0 : i32
    %c0_i32_0 = arith.constant 0 : i32
    %c0_i32_1 = arith.constant 0 : i32
    return %c0_i32, %c0_i32_0 : i32, i32
  }
  func.func @transform_16(%arg0: i32, %arg1: i32) -> (i32, i32) {
    %c0_i32 = arith.constant 0 : i32
    %c0_i32_0 = arith.constant 0 : i32
    %c0_i32_1 = arith.constant 0 : i32
    return %c0_i32, %c0_i32_0 : i32, i32
  }
  func.func @transform_17(%arg0: i32, %arg1: i32) -> (i32, i32) {
    %c0_i32 = arith.constant 0 : i32
    %c0_i32_0 = arith.constant 0 : i32
    %c0_i32_1 = arith.constant 0 : i32
    return %c0_i32, %c0_i32_0 : i32, i32
  }
  func.func @transform_18(%arg0: i32, %arg1: i32) -> (i32, i32) {
    %c0_i32 = arith.constant 0 : i32
    %c0_i32_0 = arith.constant 0 : i32
    %c0_i32_1 = arith.constant 0 : i32
    return %c0_i32, %c0_i32_0 : i32, i32
  }
  func.func @transform_19(%arg0: i32, %arg1: i32) -> (i32, i32) {
    %c0_i32 = arith.constant 0 : i32
    %c0_i32_0 = arith.constant 0 : i32
    %c0_i32_1 = arith.constant 0 : i32
    return %c0_i32, %c0_i32_0 : i32, i32
  }
  func.func @transform_20(%arg0: i32, %arg1: i32) -> (i32, i32) {
    %c0_i32 = arith.constant 0 : i32
    %c0_i32_0 = arith.constant 0 : i32
    %c0_i32_1 = arith.constant 0 : i32
    return %c0_i32, %c0_i32_0 : i32, i32
  }
  func.func @transform_21(%arg0: i32, %arg1: i32) -> (i32, i32, i32) {
    %c0_i32 = arith.constant 0 : i32
    %c0_i32_0 = arith.constant 0 : i32
    return %arg0, %arg1, %c0_i32 : i32, i32, i32
  }
}

module attributes {stable_mosaic.version = 11 : i64} {
  func.func @_block_kernel(%arg0: i32, %arg1: i32, %arg2: memref<1x32x32xf32, #tpu.memory_space<vmem>>, %arg3: memref<1x32x8xf32, #tpu.memory_space<vmem>>, %arg4: memref<1x32x8xf32, #tpu.memory_space<vmem>>, %arg5: memref<1x32xf32, #tpu.memory_space<vmem>>, %arg6: memref<1x32xf32, #tpu.memory_space<vmem>>, %arg7: memref<32x32xbf16, #tpu.memory_space<vmem>>, %arg8: memref<32x32xbf16, #tpu.memory_space<vmem>>, %arg9: memref<32x32xbf16, #tpu.memory_space<vmem>>, %arg10: memref<1x32xf32, #tpu.memory_space<vmem>>, %arg11: memref<1x32xf32, #tpu.memory_space<vmem>>, %arg12: memref<1x32xf32, #tpu.memory_space<vmem>>, %arg13: memref<32x32xbf16, #tpu.memory_space<vmem>>, %arg14: memref<1x32xf32, #tpu.memory_space<vmem>>, %arg15: memref<1x32xf32, #tpu.memory_space<vmem>>, %arg16: memref<1x32xf32, #tpu.memory_space<vmem>>, %arg17: memref<32x64xbf16, #tpu.memory_space<vmem>>, %arg18: memref<32x64xbf16, #tpu.memory_space<vmem>>, %arg19: memref<1x64xf32, #tpu.memory_space<vmem>>, %arg20: memref<1x64xf32, #tpu.memory_space<vmem>>, %arg21: memref<64x32xbf16, #tpu.memory_space<vmem>>, %arg22: memref<1x32xf32, #tpu.memory_space<vmem>>, %arg23: memref<1x16x32xf32, #tpu.memory_space<vmem>>, %arg24: memref<32x32xbf16, #tpu.memory_space<vmem>>, %arg25: memref<32x32xbf16, #tpu.memory_space<vmem>>) attributes {dimension_semantics = [#tpu.dimension_semantics<parallel>, #tpu.dimension_semantics<arbitrary>], iteration_bounds = array<i64: 2, 2>, scalar_prefetch = 0 : i64, scratch_operands = 2 : i64, tpu.core_type = #tpu.core_type<tc>, window_params = [{transform_indices = @transform_0, window_bounds = array<i64: 1, 32, 32>}, {transform_indices = @transform_1, window_bounds = array<i64: 1, 32, 8>}, {transform_indices = @transform_2, window_bounds = array<i64: 1, 32, 8>}, {pipeline_mode = #tpu.pipeline_mode<synchronous>, transform_indices = @transform_3, window_bounds = array<i64: 1, 32>}, {pipeline_mode = #tpu.pipeline_mode<synchronous>, transform_indices = @transform_4, window_bounds = array<i64: 1, 32>}, {pipeline_mode = #tpu.pipeline_mode<synchronous>, transform_indices = @transform_5, window_bounds = array<i64: 32, 32>}, {pipeline_mode = #tpu.pipeline_mode<synchronous>, transform_indices = @transform_6, window_bounds = array<i64: 32, 32>}, {pipeline_mode = #tpu.pipeline_mode<synchronous>, transform_indices = @transform_7, window_bounds = array<i64: 32, 32>}, {pipeline_mode = #tpu.pipeline_mode<synchronous>, transform_indices = @transform_8, window_bounds = array<i64: 1, 32>}, {pipeline_mode = #tpu.pipeline_mode<synchronous>, transform_indices = @transform_9, window_bounds = array<i64: 1, 32>}, {pipeline_mode = #tpu.pipeline_mode<synchronous>, transform_indices = @transform_10, window_bounds = array<i64: 1, 32>}, {pipeline_mode = #tpu.pipeline_mode<synchronous>, transform_indices = @transform_11, window_bounds = array<i64: 32, 32>}, {pipeline_mode = #tpu.pipeline_mode<synchronous>, transform_indices = @transform_12, window_bounds = array<i64: 1, 32>}, {pipeline_mode = #tpu.pipeline_mode<synchronous>, transform_indices = @transform_13, window_bounds = array<i64: 1, 32>}, {pipeline_mode = #tpu.pipeline_mode<synchronous>, transform_indices = @transform_14, window_bounds = array<i64: 1, 32>}, {pipeline_mode = #tpu.pipeline_mode<synchronous>, transform_indices = @transform_15, window_bounds = array<i64: 32, 64>}, {pipeline_mode = #tpu.pipeline_mode<synchronous>, transform_indices = @transform_16, window_bounds = array<i64: 32, 64>}, {pipeline_mode = #tpu.pipeline_mode<synchronous>, transform_indices = @transform_17, window_bounds = array<i64: 1, 64>}, {pipeline_mode = #tpu.pipeline_mode<synchronous>, transform_indices = @transform_18, window_bounds = array<i64: 1, 64>}, {pipeline_mode = #tpu.pipeline_mode<synchronous>, transform_indices = @transform_19, window_bounds = array<i64: 64, 32>}, {pipeline_mode = #tpu.pipeline_mode<synchronous>, transform_indices = @transform_20, window_bounds = array<i64: 1, 32>}, {transform_indices = @transform_21, window_bounds = array<i64: 1, 16, 32>}]} {
    %c16_i32 = arith.constant 16 : i32
    %0 = arith.muli %arg1, %c16_i32 : i32
    %1 = tpu.assume_multiple %0, 16 : i32
    %c0_i32 = arith.constant 0 : i32
    %2 = arith.cmpi eq, %arg1, %c0_i32 : i32
    %3 = arith.extui %2 : i1 to i32
    %c0_i32_0 = arith.constant 0 : i32
    %4 = arith.cmpi ne, %3, %c0_i32_0 : i32
    scf.if %4 {
      %c0_66 = arith.constant 0 : index
      %c0_67 = arith.constant 0 : index
      %c0_68 = arith.constant 0 : index
      %184 = vector.load %arg2[%c0_66, %c0_67, %c0_68] : memref<1x32x32xf32, #tpu.memory_space<vmem>>, vector<1x32x32xf32>
      %185 = vector.shape_cast %184 : vector<1x32x32xf32> to vector<32x32xf32>
      %c0_69 = arith.constant 0 : index
      %c0_70 = arith.constant 0 : index
      %186 = vector.load %arg5[%c0_69, %c0_70] : memref<1x32xf32, #tpu.memory_space<vmem>>, vector<1x32xf32>
      %187 = vector.shape_cast %186 : vector<1x32xf32> to vector<32xf32>
      %c0_71 = arith.constant 0 : index
      %c0_72 = arith.constant 0 : index
      %188 = vector.load %arg6[%c0_71, %c0_72] : memref<1x32xf32, #tpu.memory_space<vmem>>, vector<1x32xf32>
      %189 = vector.shape_cast %188 : vector<1x32xf32> to vector<32xf32>
      %cst_73 = arith.constant dense<0.000000e+00> : vector<32xf32>
      %190 = vector.multi_reduction <add>, %185, %cst_73 [1] : vector<32x32xf32> to vector<32xf32>
      %191 = vector.shape_cast %190 : vector<32xf32> to vector<32x1xf32>
      %cst_74 = arith.constant 3.200000e+01 : f32
      %192 = vector.broadcast %cst_74 : f32 to vector<32x1xf32>
      %193 = arith.divf %191, %192 : vector<32x1xf32>
      %194 = vector.broadcast %193 : vector<32x1xf32> to vector<32x32xf32>
      %195 = arith.subf %185, %194 : vector<32x32xf32>
      %196 = arith.mulf %195, %195 : vector<32x32xf32>
      %cst_75 = arith.constant dense<0.000000e+00> : vector<32xf32>
      %197 = vector.multi_reduction <add>, %196, %cst_75 [1] : vector<32x32xf32> to vector<32xf32>
      %198 = vector.shape_cast %197 : vector<32xf32> to vector<32x1xf32>
      %cst_76 = arith.constant 3.200000e+01 : f32
      %199 = vector.broadcast %cst_76 : f32 to vector<32x1xf32>
      %200 = arith.divf %198, %199 : vector<32x1xf32>
      %201 = vector.broadcast %193 : vector<32x1xf32> to vector<32x32xf32>
      %202 = arith.subf %185, %201 : vector<32x32xf32>
      %cst_77 = arith.constant 9.99999974E-6 : f32
      %203 = vector.broadcast %cst_77 : f32 to vector<32x1xf32>
      %204 = arith.addf %200, %203 : vector<32x1xf32>
      %205 = math.rsqrt %204 : vector<32x1xf32>
      %206 = vector.broadcast %205 : vector<32x1xf32> to vector<32x32xf32>
      %207 = arith.mulf %202, %206 : vector<32x32xf32>
      %208 = vector.shape_cast %187 : vector<32xf32> to vector<1x32xf32>
      %209 = vector.broadcast %208 : vector<1x32xf32> to vector<32x32xf32>
      %210 = arith.mulf %207, %209 : vector<32x32xf32>
      %211 = vector.shape_cast %189 : vector<32xf32> to vector<1x32xf32>
      %212 = vector.broadcast %211 : vector<1x32xf32> to vector<32x32xf32>
      %213 = arith.addf %210, %212 : vector<32x32xf32>
      %c0_78 = arith.constant 0 : index
      %c0_79 = arith.constant 0 : index
      %214 = vector.load %arg8[%c0_78, %c0_79] : memref<32x32xbf16, #tpu.memory_space<vmem>>, vector<32x32xbf16>
      %215 = arith.truncf %213 : vector<32x32xf32> to vector<32x32xbf16>
      %cst_80 = arith.constant dense<0.000000e+00> : vector<32x32xf32>
      %216 = tpu.matmul %215, %214, %cst_80 {dimension_numbers = #tpu.dot_dimension_numbers<[1], [0], [0], [1], [0, 0, 1, 1], [], []>} : vector<32x32xbf16>, vector<32x32xbf16>, vector<32x32xf32> -> vector<32x32xf32>
      %c0_81 = arith.constant 0 : index
      %c0_82 = arith.constant 0 : index
      %217 = vector.load %arg11[%c0_81, %c0_82] : memref<1x32xf32, #tpu.memory_space<vmem>>, vector<1x32xf32>
      %218 = vector.shape_cast %217 : vector<1x32xf32> to vector<32xf32>
      %219 = vector.shape_cast %218 : vector<32xf32> to vector<1x32xf32>
      %220 = vector.broadcast %219 : vector<1x32xf32> to vector<32x32xf32>
      %221 = arith.addf %216, %220 : vector<32x32xf32>
      %c0_83 = arith.constant 0 : index
      %c0_84 = arith.constant 0 : index
      %222 = vector.load %arg9[%c0_83, %c0_84] : memref<32x32xbf16, #tpu.memory_space<vmem>>, vector<32x32xbf16>
      %223 = arith.truncf %213 : vector<32x32xf32> to vector<32x32xbf16>
      %cst_85 = arith.constant dense<0.000000e+00> : vector<32x32xf32>
      %224 = tpu.matmul %223, %222, %cst_85 {dimension_numbers = #tpu.dot_dimension_numbers<[1], [0], [0], [1], [0, 0, 1, 1], [], []>} : vector<32x32xbf16>, vector<32x32xbf16>, vector<32x32xf32> -> vector<32x32xf32>
      %c0_86 = arith.constant 0 : index
      %c0_87 = arith.constant 0 : index
      %225 = vector.load %arg12[%c0_86, %c0_87] : memref<1x32xf32, #tpu.memory_space<vmem>>, vector<1x32xf32>
      %226 = vector.shape_cast %225 : vector<1x32xf32> to vector<32xf32>
      %227 = vector.shape_cast %226 : vector<32xf32> to vector<1x32xf32>
      %228 = vector.broadcast %227 : vector<1x32xf32> to vector<32x32xf32>
      %229 = arith.addf %224, %228 : vector<32x32xf32>
      %c0_88 = arith.constant 0 : index
      %c0_89 = arith.constant 0 : index
      %c0_90 = arith.constant 0 : index
      %230 = vector.load %arg3[%c0_88, %c0_89, %c0_90] : memref<1x32x8xf32, #tpu.memory_space<vmem>>, vector<1x32x8xf32>
      %231 = vector.shape_cast %230 : vector<1x32x8xf32> to vector<32x8xf32>
      %c0_91 = arith.constant 0 : index
      %c0_92 = arith.constant 0 : index
      %c0_93 = arith.constant 0 : index
      %232 = vector.load %arg4[%c0_91, %c0_92, %c0_93] : memref<1x32x8xf32, #tpu.memory_space<vmem>>, vector<1x32x8xf32>
      %233 = vector.shape_cast %232 : vector<1x32x8xf32> to vector<32x8xf32>
      %234 = vector.extract_strided_slice %221 {offsets = [0, 0], sizes = [32, 8], strides = [1, 1]} : vector<32x32xf32> to vector<32x8xf32>
      %235 = vector.extract_strided_slice %221 {offsets = [0, 8], sizes = [32, 8], strides = [1, 1]} : vector<32x32xf32> to vector<32x8xf32>
      %236 = arith.mulf %234, %231 : vector<32x8xf32>
      %237 = arith.mulf %235, %233 : vector<32x8xf32>
      %238 = arith.subf %236, %237 : vector<32x8xf32>
      %239 = arith.mulf %235, %231 : vector<32x8xf32>
      %240 = arith.mulf %234, %233 : vector<32x8xf32>
      %241 = arith.addf %239, %240 : vector<32x8xf32>
      %242 = vector.extract_strided_slice %221 {offsets = [0, 16], sizes = [32, 8], strides = [1, 1]} : vector<32x32xf32> to vector<32x8xf32>
      %243 = vector.extract_strided_slice %221 {offsets = [0, 24], sizes = [32, 8], strides = [1, 1]} : vector<32x32xf32> to vector<32x8xf32>
      %244 = arith.mulf %242, %231 : vector<32x8xf32>
      %245 = arith.mulf %243, %233 : vector<32x8xf32>
      %246 = arith.subf %244, %245 : vector<32x8xf32>
      %247 = arith.mulf %243, %231 : vector<32x8xf32>
      %248 = arith.mulf %242, %233 : vector<32x8xf32>
      %249 = arith.addf %247, %248 : vector<32x8xf32>
      %250 = tpu.concatenate %238, %241, %246, %249 in 1 : vector<32x8xf32>, vector<32x8xf32>, vector<32x8xf32>, vector<32x8xf32> -> vector<32x32xf32>
      %251 = arith.truncf %250 : vector<32x32xf32> to vector<32x32xbf16>
      %c0_94 = arith.constant 0 : index
      %c0_95 = arith.constant 0 : index
      %252 = vector.load %arg24[%c0_94, %c0_95] : memref<32x32xbf16, #tpu.memory_space<vmem>>, vector<32x32xbf16>
      tpu.vector_store %arg24[%c0_94, %c0_95], %251 {strides = array<i32>} : memref<32x32xbf16, #tpu.memory_space<vmem>>, vector<32x32xbf16>,
      %253 = arith.truncf %229 : vector<32x32xf32> to vector<32x32xbf16>
      %c0_96 = arith.constant 0 : index
      %c0_97 = arith.constant 0 : index
      %254 = vector.load %arg25[%c0_96, %c0_97] : memref<32x32xbf16, #tpu.memory_space<vmem>>, vector<32x32xbf16>
      tpu.vector_store %arg25[%c0_96, %c0_97], %253 {strides = array<i32>} : memref<32x32xbf16, #tpu.memory_space<vmem>>, vector<32x32xbf16>,
    } else {
    }
    %c0 = arith.constant 0 : index
    %5 = arith.index_cast %1 : i32 to index
    %c0_1 = arith.constant 0 : index
    %6 = vector.load %arg2[%c0, %5, %c0_1] : memref<1x32x32xf32, #tpu.memory_space<vmem>>, vector<1x16x32xf32>
    %7 = vector.shape_cast %6 : vector<1x16x32xf32> to vector<16x32xf32>
    %c0_2 = arith.constant 0 : index
    %c0_3 = arith.constant 0 : index
    %8 = vector.load %arg5[%c0_2, %c0_3] : memref<1x32xf32, #tpu.memory_space<vmem>>, vector<1x32xf32>
    %9 = vector.shape_cast %8 : vector<1x32xf32> to vector<32xf32>
    %c0_4 = arith.constant 0 : index
    %c0_5 = arith.constant 0 : index
    %10 = vector.load %arg6[%c0_4, %c0_5] : memref<1x32xf32, #tpu.memory_space<vmem>>, vector<1x32xf32>
    %11 = vector.shape_cast %10 : vector<1x32xf32> to vector<32xf32>
    %cst = arith.constant dense<0.000000e+00> : vector<16xf32>
    %12 = vector.multi_reduction <add>, %7, %cst [1] : vector<16x32xf32> to vector<16xf32>
    %13 = vector.shape_cast %12 : vector<16xf32> to vector<16x1xf32>
    %cst_6 = arith.constant 3.200000e+01 : f32
    %14 = vector.broadcast %cst_6 : f32 to vector<16x1xf32>
    %15 = arith.divf %13, %14 : vector<16x1xf32>
    %16 = vector.broadcast %15 : vector<16x1xf32> to vector<16x32xf32>
    %17 = arith.subf %7, %16 : vector<16x32xf32>
    %18 = arith.mulf %17, %17 : vector<16x32xf32>
    %cst_7 = arith.constant dense<0.000000e+00> : vector<16xf32>
    %19 = vector.multi_reduction <add>, %18, %cst_7 [1] : vector<16x32xf32> to vector<16xf32>
    %20 = vector.shape_cast %19 : vector<16xf32> to vector<16x1xf32>
    %cst_8 = arith.constant 3.200000e+01 : f32
    %21 = vector.broadcast %cst_8 : f32 to vector<16x1xf32>
    %22 = arith.divf %20, %21 : vector<16x1xf32>
    %23 = vector.broadcast %15 : vector<16x1xf32> to vector<16x32xf32>
    %24 = arith.subf %7, %23 : vector<16x32xf32>
    %cst_9 = arith.constant 9.99999974E-6 : f32
    %25 = vector.broadcast %cst_9 : f32 to vector<16x1xf32>
    %26 = arith.addf %22, %25 : vector<16x1xf32>
    %27 = math.rsqrt %26 : vector<16x1xf32>
    %28 = vector.broadcast %27 : vector<16x1xf32> to vector<16x32xf32>
    %29 = arith.mulf %24, %28 : vector<16x32xf32>
    %30 = vector.shape_cast %9 : vector<32xf32> to vector<1x32xf32>
    %31 = vector.broadcast %30 : vector<1x32xf32> to vector<16x32xf32>
    %32 = arith.mulf %29, %31 : vector<16x32xf32>
    %33 = vector.shape_cast %11 : vector<32xf32> to vector<1x32xf32>
    %34 = vector.broadcast %33 : vector<1x32xf32> to vector<16x32xf32>
    %35 = arith.addf %32, %34 : vector<16x32xf32>
    %c0_10 = arith.constant 0 : index
    %c0_11 = arith.constant 0 : index
    %36 = vector.load %arg7[%c0_10, %c0_11] : memref<32x32xbf16, #tpu.memory_space<vmem>>, vector<32x32xbf16>
    %37 = arith.truncf %35 : vector<16x32xf32> to vector<16x32xbf16>
    %cst_12 = arith.constant dense<0.000000e+00> : vector<16x32xf32>
    %38 = tpu.matmul %37, %36, %cst_12 {dimension_numbers = #tpu.dot_dimension_numbers<[1], [0], [0], [1], [0, 0, 1, 1], [], []>} : vector<16x32xbf16>, vector<32x32xbf16>, vector<16x32xf32> -> vector<16x32xf32>
    %c0_13 = arith.constant 0 : index
    %c0_14 = arith.constant 0 : index
    %39 = vector.load %arg10[%c0_13, %c0_14] : memref<1x32xf32, #tpu.memory_space<vmem>>, vector<1x32xf32>
    %40 = vector.shape_cast %39 : vector<1x32xf32> to vector<32xf32>
    %41 = vector.shape_cast %40 : vector<32xf32> to vector<1x32xf32>
    %42 = vector.broadcast %41 : vector<1x32xf32> to vector<16x32xf32>
    %43 = arith.addf %38, %42 : vector<16x32xf32>
    %c0_15 = arith.constant 0 : index
    %44 = arith.index_cast %1 : i32 to index
    %c0_16 = arith.constant 0 : index
    %45 = vector.load %arg3[%c0_15, %44, %c0_16] : memref<1x32x8xf32, #tpu.memory_space<vmem>>, vector<1x16x8xf32>
    %46 = vector.shape_cast %45 : vector<1x16x8xf32> to vector<16x8xf32>
    %c0_17 = arith.constant 0 : index
    %47 = arith.index_cast %1 : i32 to index
    %c0_18 = arith.constant 0 : index
    %48 = vector.load %arg4[%c0_17, %47, %c0_18] : memref<1x32x8xf32, #tpu.memory_space<vmem>>, vector<1x16x8xf32>
    %49 = vector.shape_cast %48 : vector<1x16x8xf32> to vector<16x8xf32>
    %50 = vector.extract_strided_slice %43 {offsets = [0, 0], sizes = [16, 8], strides = [1, 1]} : vector<16x32xf32> to vector<16x8xf32>
    %51 = vector.extract_strided_slice %43 {offsets = [0, 8], sizes = [16, 8], strides = [1, 1]} : vector<16x32xf32> to vector<16x8xf32>
    %52 = arith.mulf %50, %46 : vector<16x8xf32>
    %53 = arith.mulf %51, %49 : vector<16x8xf32>
    %54 = arith.subf %52, %53 : vector<16x8xf32>
    %55 = arith.mulf %51, %46 : vector<16x8xf32>
    %56 = arith.mulf %50, %49 : vector<16x8xf32>
    %57 = arith.addf %55, %56 : vector<16x8xf32>
    %58 = vector.extract_strided_slice %43 {offsets = [0, 16], sizes = [16, 8], strides = [1, 1]} : vector<16x32xf32> to vector<16x8xf32>
    %59 = vector.extract_strided_slice %43 {offsets = [0, 24], sizes = [16, 8], strides = [1, 1]} : vector<16x32xf32> to vector<16x8xf32>
    %60 = arith.mulf %58, %46 : vector<16x8xf32>
    %61 = arith.mulf %59, %49 : vector<16x8xf32>
    %62 = arith.subf %60, %61 : vector<16x8xf32>
    %63 = arith.mulf %59, %46 : vector<16x8xf32>
    %64 = arith.mulf %58, %49 : vector<16x8xf32>
    %65 = arith.addf %63, %64 : vector<16x8xf32>
    %66 = tpu.concatenate %54, %57, %62, %65 in 1 : vector<16x8xf32>, vector<16x8xf32>, vector<16x8xf32>, vector<16x8xf32> -> vector<16x32xf32>
    %67 = arith.truncf %66 : vector<16x32xf32> to vector<16x32xbf16>
    %68 = tpu.iota {dimensions = array<i32: 0>} : vector<16x32xi32>
    %69 = vector.broadcast %1 : i32 to vector<16x32xi32>
    %70 = arith.addi %68, %69 : vector<16x32xi32>
    %71 = tpu.iota {dimensions = array<i32: 1>} : vector<16x32xi32>
    %72 = arith.cmpi sge, %70, %71 : vector<16x32xi32>
    %c0_19 = arith.constant 0 : index
    %c0_20 = arith.constant 0 : index
    %73 = vector.load %arg24[%c0_19, %c0_20] : memref<32x32xbf16, #tpu.memory_space<vmem>>, vector<32x32xbf16>
    %c0_21 = arith.constant 0 : index
    %c0_22 = arith.constant 0 : index
    %74 = vector.load %arg25[%c0_21, %c0_22] : memref<32x32xbf16, #tpu.memory_space<vmem>>, vector<32x32xbf16>
    %75 = vector.extract_strided_slice %67 {offsets = [0, 0], sizes = [16, 16], strides = [1, 1]} : vector<16x32xbf16> to vector<16x16xbf16>
    %76 = vector.extract_strided_slice %73 {offsets = [0, 0], sizes = [32, 16], strides = [1, 1]} : vector<32x32xbf16> to vector<32x16xbf16>
    %cst_23 = arith.constant dense<0.000000e+00> : vector<16x32xf32>
    %77 = tpu.matmul %75, %76, %cst_23 {dimension_numbers = #tpu.dot_dimension_numbers<[1], [1], [0], [0], [0, 0, 1, 0], [], []>} : vector<16x16xbf16>, vector<32x16xbf16>, vector<16x32xf32> -> vector<16x32xf32>
    %cst_24 = arith.constant -1.000000e+30 : f32
    %78 = vector.broadcast %cst_24 : f32 to vector<16x32xf32>
    %79 = arith.select %72, %77, %78 : vector<16x32xi1>, vector<16x32xf32>
    %cst_25 = arith.constant dense<0xFF800000> : vector<16xf32>
    %80 = vector.multi_reduction <maximumf>, %79, %cst_25 [1] : vector<16x32xf32> to vector<16xf32>
    %81 = vector.shape_cast %80 : vector<16xf32> to vector<16x1xf32>
    %82 = vector.broadcast %81 : vector<16x1xf32> to vector<16x32xf32>
    %83 = arith.subf %79, %82 : vector<16x32xf32>
    %84 = math.exp %83 : vector<16x32xf32>
    %cst_26 = arith.constant dense<0.000000e+00> : vector<16xf32>
    %85 = vector.multi_reduction <add>, %84, %cst_26 [1] : vector<16x32xf32> to vector<16xf32>
    %86 = vector.shape_cast %85 : vector<16xf32> to vector<16x1xf32>
    %87 = tpu.reciprocal %86 {approx = true} : vector<16x1xf32> -> vector<16x1xf32>
    %88 = vector.broadcast %87 : vector<16x1xf32> to vector<16x32xf32>
    %89 = arith.mulf %84, %88 : vector<16x32xf32>
    %90 = vector.extract_strided_slice %74 {offsets = [0, 0], sizes = [32, 16], strides = [1, 1]} : vector<32x32xbf16> to vector<32x16xbf16>
    %91 = arith.truncf %89 : vector<16x32xf32> to vector<16x32xbf16>
    %cst_27 = arith.constant dense<0.000000e+00> : vector<16x16xf32>
    %92 = tpu.matmul %91, %90, %cst_27 {dimension_numbers = #tpu.dot_dimension_numbers<[1], [0], [0], [1], [0, 0, 1, 1], [], []>} : vector<16x32xbf16>, vector<32x16xbf16>, vector<16x16xf32> -> vector<16x16xf32>
    %93 = vector.extract_strided_slice %67 {offsets = [0, 16], sizes = [16, 16], strides = [1, 1]} : vector<16x32xbf16> to vector<16x16xbf16>
    %94 = vector.extract_strided_slice %73 {offsets = [0, 16], sizes = [32, 16], strides = [1, 1]} : vector<32x32xbf16> to vector<32x16xbf16>
    %cst_28 = arith.constant dense<0.000000e+00> : vector<16x32xf32>
    %95 = tpu.matmul %93, %94, %cst_28 {dimension_numbers = #tpu.dot_dimension_numbers<[1], [1], [0], [0], [0, 0, 1, 0], [], []>} : vector<16x16xbf16>, vector<32x16xbf16>, vector<16x32xf32> -> vector<16x32xf32>
    %cst_29 = arith.constant -1.000000e+30 : f32
    %96 = vector.broadcast %cst_29 : f32 to vector<16x32xf32>
    %97 = arith.select %72, %95, %96 : vector<16x32xi1>, vector<16x32xf32>
    %cst_30 = arith.constant dense<0xFF800000> : vector<16xf32>
    %98 = vector.multi_reduction <maximumf>, %97, %cst_30 [1] : vector<16x32xf32> to vector<16xf32>
    %99 = vector.shape_cast %98 : vector<16xf32> to vector<16x1xf32>
    %100 = vector.broadcast %99 : vector<16x1xf32> to vector<16x32xf32>
    %101 = arith.subf %97, %100 : vector<16x32xf32>
    %102 = math.exp %101 : vector<16x32xf32>
    %cst_31 = arith.constant dense<0.000000e+00> : vector<16xf32>
    %103 = vector.multi_reduction <add>, %102, %cst_31 [1] : vector<16x32xf32> to vector<16xf32>
    %104 = vector.shape_cast %103 : vector<16xf32> to vector<16x1xf32>
    %105 = tpu.reciprocal %104 {approx = true} : vector<16x1xf32> -> vector<16x1xf32>
    %106 = vector.broadcast %105 : vector<16x1xf32> to vector<16x32xf32>
    %107 = arith.mulf %102, %106 : vector<16x32xf32>
    %108 = vector.extract_strided_slice %74 {offsets = [0, 16], sizes = [32, 16], strides = [1, 1]} : vector<32x32xbf16> to vector<32x16xbf16>
    %109 = arith.truncf %107 : vector<16x32xf32> to vector<16x32xbf16>
    %cst_32 = arith.constant dense<0.000000e+00> : vector<16x16xf32>
    %110 = tpu.matmul %109, %108, %cst_32 {dimension_numbers = #tpu.dot_dimension_numbers<[1], [0], [0], [1], [0, 0, 1, 1], [], []>} : vector<16x32xbf16>, vector<32x16xbf16>, vector<16x16xf32> -> vector<16x16xf32>
    %111 = tpu.concatenate %92, %110 in 1 : vector<16x16xf32>, vector<16x16xf32> -> vector<16x32xf32>
    %c0_33 = arith.constant 0 : index
    %c0_34 = arith.constant 0 : index
    %112 = vector.load %arg13[%c0_33, %c0_34] : memref<32x32xbf16, #tpu.memory_space<vmem>>, vector<32x32xbf16>
    %113 = arith.truncf %111 : vector<16x32xf32> to vector<16x32xbf16>
    %cst_35 = arith.constant dense<0.000000e+00> : vector<16x32xf32>
    %114 = tpu.matmul %113, %112, %cst_35 {dimension_numbers = #tpu.dot_dimension_numbers<[1], [0], [0], [1], [0, 0, 1, 1], [], []>} : vector<16x32xbf16>, vector<32x32xbf16>, vector<16x32xf32> -> vector<16x32xf32>
    %115 = arith.addf %7, %114 : vector<16x32xf32>
    %c0_36 = arith.constant 0 : index
    %c0_37 = arith.constant 0 : index
    %116 = vector.load %arg14[%c0_36, %c0_37] : memref<1x32xf32, #tpu.memory_space<vmem>>, vector<1x32xf32>
    %117 = vector.shape_cast %116 : vector<1x32xf32> to vector<32xf32>
    %118 = vector.shape_cast %117 : vector<32xf32> to vector<1x32xf32>
    %119 = vector.broadcast %118 : vector<1x32xf32> to vector<16x32xf32>
    %120 = arith.addf %115, %119 : vector<16x32xf32>
    %c0_38 = arith.constant 0 : index
    %c0_39 = arith.constant 0 : index
    %121 = vector.load %arg15[%c0_38, %c0_39] : memref<1x32xf32, #tpu.memory_space<vmem>>, vector<1x32xf32>
    %122 = vector.shape_cast %121 : vector<1x32xf32> to vector<32xf32>
    %c0_40 = arith.constant 0 : index
    %c0_41 = arith.constant 0 : index
    %123 = vector.load %arg16[%c0_40, %c0_41] : memref<1x32xf32, #tpu.memory_space<vmem>>, vector<1x32xf32>
    %124 = vector.shape_cast %123 : vector<1x32xf32> to vector<32xf32>
    %cst_42 = arith.constant dense<0.000000e+00> : vector<16xf32>
    %125 = vector.multi_reduction <add>, %120, %cst_42 [1] : vector<16x32xf32> to vector<16xf32>
    %126 = vector.shape_cast %125 : vector<16xf32> to vector<16x1xf32>
    %cst_43 = arith.constant 3.200000e+01 : f32
    %127 = vector.broadcast %cst_43 : f32 to vector<16x1xf32>
    %128 = arith.divf %126, %127 : vector<16x1xf32>
    %129 = vector.broadcast %128 : vector<16x1xf32> to vector<16x32xf32>
    %130 = arith.subf %120, %129 : vector<16x32xf32>
    %131 = arith.mulf %130, %130 : vector<16x32xf32>
    %cst_44 = arith.constant dense<0.000000e+00> : vector<16xf32>
    %132 = vector.multi_reduction <add>, %131, %cst_44 [1] : vector<16x32xf32> to vector<16xf32>
    %133 = vector.shape_cast %132 : vector<16xf32> to vector<16x1xf32>
    %cst_45 = arith.constant 3.200000e+01 : f32
    %134 = vector.broadcast %cst_45 : f32 to vector<16x1xf32>
    %135 = arith.divf %133, %134 : vector<16x1xf32>
    %136 = vector.broadcast %128 : vector<16x1xf32> to vector<16x32xf32>
    %137 = arith.subf %120, %136 : vector<16x32xf32>
    %cst_46 = arith.constant 9.99999974E-6 : f32
    %138 = vector.broadcast %cst_46 : f32 to vector<16x1xf32>
    %139 = arith.addf %135, %138 : vector<16x1xf32>
    %140 = math.rsqrt %139 : vector<16x1xf32>
    %141 = vector.broadcast %140 : vector<16x1xf32> to vector<16x32xf32>
    %142 = arith.mulf %137, %141 : vector<16x32xf32>
    %143 = vector.shape_cast %122 : vector<32xf32> to vector<1x32xf32>
    %144 = vector.broadcast %143 : vector<1x32xf32> to vector<16x32xf32>
    %145 = arith.mulf %142, %144 : vector<16x32xf32>
    %146 = vector.shape_cast %124 : vector<32xf32> to vector<1x32xf32>
    %147 = vector.broadcast %146 : vector<1x32xf32> to vector<16x32xf32>
    %148 = arith.addf %145, %147 : vector<16x32xf32>
    %c0_47 = arith.constant 0 : index
    %c0_48 = arith.constant 0 : index
    %149 = vector.load %arg17[%c0_47, %c0_48] : memref<32x64xbf16, #tpu.memory_space<vmem>>, vector<32x64xbf16>
    %150 = arith.truncf %148 : vector<16x32xf32> to vector<16x32xbf16>
    %cst_49 = arith.constant dense<0.000000e+00> : vector<16x64xf32>
    %151 = tpu.matmul %150, %149, %cst_49 {dimension_numbers = #tpu.dot_dimension_numbers<[1], [0], [0], [1], [0, 0, 1, 1], [], []>} : vector<16x32xbf16>, vector<32x64xbf16>, vector<16x64xf32> -> vector<16x64xf32>
    %c0_50 = arith.constant 0 : index
    %c0_51 = arith.constant 0 : index
    %152 = vector.load %arg19[%c0_50, %c0_51] : memref<1x64xf32, #tpu.memory_space<vmem>>, vector<1x64xf32>
    %153 = vector.shape_cast %152 : vector<1x64xf32> to vector<64xf32>
    %154 = vector.shape_cast %153 : vector<64xf32> to vector<1x64xf32>
    %155 = vector.broadcast %154 : vector<1x64xf32> to vector<16x64xf32>
    %156 = arith.addf %151, %155 : vector<16x64xf32>
    %c0_52 = arith.constant 0 : index
    %c0_53 = arith.constant 0 : index
    %157 = vector.load %arg18[%c0_52, %c0_53] : memref<32x64xbf16, #tpu.memory_space<vmem>>, vector<32x64xbf16>
    %158 = arith.truncf %148 : vector<16x32xf32> to vector<16x32xbf16>
    %cst_54 = arith.constant dense<0.000000e+00> : vector<16x64xf32>
    %159 = tpu.matmul %158, %157, %cst_54 {dimension_numbers = #tpu.dot_dimension_numbers<[1], [0], [0], [1], [0, 0, 1, 1], [], []>} : vector<16x32xbf16>, vector<32x64xbf16>, vector<16x64xf32> -> vector<16x64xf32>
    %c0_55 = arith.constant 0 : index
    %c0_56 = arith.constant 0 : index
    %160 = vector.load %arg20[%c0_55, %c0_56] : memref<1x64xf32, #tpu.memory_space<vmem>>, vector<1x64xf32>
    %161 = vector.shape_cast %160 : vector<1x64xf32> to vector<64xf32>
    %162 = vector.shape_cast %161 : vector<64xf32> to vector<1x64xf32>
    %163 = vector.broadcast %162 : vector<1x64xf32> to vector<16x64xf32>
    %164 = arith.addf %159, %163 : vector<16x64xf32>
    %165 = arith.negf %164 : vector<16x64xf32>
    %166 = math.exp %165 : vector<16x64xf32>
    %cst_57 = arith.constant 1.000000e+00 : f32
    %167 = vector.broadcast %cst_57 : f32 to vector<16x64xf32>
    %168 = arith.addf %167, %166 : vector<16x64xf32>
    %169 = arith.divf %167, %168 : vector<16x64xf32>
    %170 = arith.mulf %164, %169 : vector<16x64xf32>
    %171 = arith.mulf %156, %170 : vector<16x64xf32>
    %c0_58 = arith.constant 0 : index
    %c0_59 = arith.constant 0 : index
    %172 = vector.load %arg21[%c0_58, %c0_59] : memref<64x32xbf16, #tpu.memory_space<vmem>>, vector<64x32xbf16>
    %173 = arith.truncf %171 : vector<16x64xf32> to vector<16x64xbf16>
    %cst_60 = arith.constant dense<0.000000e+00> : vector<16x32xf32>
    %174 = tpu.matmul %173, %172, %cst_60 {dimension_numbers = #tpu.dot_dimension_numbers<[1], [0], [0], [1], [0, 0, 1, 1], [], []>} : vector<16x64xbf16>, vector<64x32xbf16>, vector<16x32xf32> -> vector<16x32xf32>
    %175 = arith.addf %120, %174 : vector<16x32xf32>
    %c0_61 = arith.constant 0 : index
    %c0_62 = arith.constant 0 : index
    %176 = vector.load %arg22[%c0_61, %c0_62] : memref<1x32xf32, #tpu.memory_space<vmem>>, vector<1x32xf32>
    %177 = vector.shape_cast %176 : vector<1x32xf32> to vector<32xf32>
    %178 = vector.shape_cast %177 : vector<32xf32> to vector<1x32xf32>
    %179 = vector.broadcast %178 : vector<1x32xf32> to vector<16x32xf32>
    %180 = arith.addf %175, %179 : vector<16x32xf32>
    %c0_63 = arith.constant 0 : index
    %c0_64 = arith.constant 0 : index
    %c0_65 = arith.constant 0 : index
    %181 = vector.load %arg23[%c0_63, %c0_64, %c0_65] : memref<1x16x32xf32, #tpu.memory_space<vmem>>, vector<1x16x32xf32>
    %182 = vector.shape_cast %181 : vector<1x16x32xf32> to vector<16x32xf32>
    %183 = vector.shape_cast %180 : vector<16x32xf32> to vector<1x16x32xf32>
    tpu.vector_store %arg23[%c0_63, %c0_64, %c0_65], %183 {strides = array<i32>} : memref<1x16x32xf32, #tpu.memory_space<vmem>>, vector<1x16x32xf32>,
    return
  }
  func.func @transform_0(%arg0: i32, %arg1: i32) -> (i32, i32, i32) {
    %c0_i32 = arith.constant 0 : i32
    %c0_i32_0 = arith.constant 0 : i32
    %c0_i32_1 = arith.constant 0 : i32
    return %arg0, %c0_i32, %c0_i32_0 : i32, i32, i32
  }
  func.func @transform_1(%arg0: i32, %arg1: i32) -> (i32, i32, i32) {
    %c0_i32 = arith.constant 0 : i32
    %c0_i32_0 = arith.constant 0 : i32
    %c0_i32_1 = arith.constant 0 : i32
    return %arg0, %c0_i32, %c0_i32_0 : i32, i32, i32
  }
  func.func @transform_2(%arg0: i32, %arg1: i32) -> (i32, i32, i32) {
    %c0_i32 = arith.constant 0 : i32
    %c0_i32_0 = arith.constant 0 : i32
    %c0_i32_1 = arith.constant 0 : i32
    return %arg0, %c0_i32, %c0_i32_0 : i32, i32, i32
  }
  func.func @transform_3(%arg0: i32, %arg1: i32) -> (i32, i32) {
    %c0_i32 = arith.constant 0 : i32
    %c0_i32_0 = arith.constant 0 : i32
    %c0_i32_1 = arith.constant 0 : i32
    return %c0_i32, %c0_i32_0 : i32, i32
  }
  func.func @transform_4(%arg0: i32, %arg1: i32) -> (i32, i32) {
    %c0_i32 = arith.constant 0 : i32
    %c0_i32_0 = arith.constant 0 : i32
    %c0_i32_1 = arith.constant 0 : i32
    return %c0_i32, %c0_i32_0 : i32, i32
  }
  func.func @transform_5(%arg0: i32, %arg1: i32) -> (i32, i32) {
    %c0_i32 = arith.constant 0 : i32
    %c0_i32_0 = arith.constant 0 : i32
    %c0_i32_1 = arith.constant 0 : i32
    return %c0_i32, %c0_i32_0 : i32, i32
  }
  func.func @transform_6(%arg0: i32, %arg1: i32) -> (i32, i32) {
    %c0_i32 = arith.constant 0 : i32
    %c0_i32_0 = arith.constant 0 : i32
    %c0_i32_1 = arith.constant 0 : i32
    return %c0_i32, %c0_i32_0 : i32, i32
  }
  func.func @transform_7(%arg0: i32, %arg1: i32) -> (i32, i32) {
    %c0_i32 = arith.constant 0 : i32
    %c0_i32_0 = arith.constant 0 : i32
    %c0_i32_1 = arith.constant 0 : i32
    return %c0_i32, %c0_i32_0 : i32, i32
  }
  func.func @transform_8(%arg0: i32, %arg1: i32) -> (i32, i32) {
    %c0_i32 = arith.constant 0 : i32
    %c0_i32_0 = arith.constant 0 : i32
    %c0_i32_1 = arith.constant 0 : i32
    return %c0_i32, %c0_i32_0 : i32, i32
  }
  func.func @transform_9(%arg0: i32, %arg1: i32) -> (i32, i32) {
    %c0_i32 = arith.constant 0 : i32
    %c0_i32_0 = arith.constant 0 : i32
    %c0_i32_1 = arith.constant 0 : i32
    return %c0_i32, %c0_i32_0 : i32, i32
  }
  func.func @transform_10(%arg0: i32, %arg1: i32) -> (i32, i32) {
    %c0_i32 = arith.constant 0 : i32
    %c0_i32_0 = arith.constant 0 : i32
    %c0_i32_1 = arith.constant 0 : i32
    return %c0_i32, %c0_i32_0 : i32, i32
  }
  func.func @transform_11(%arg0: i32, %arg1: i32) -> (i32, i32) {
    %c0_i32 = arith.constant 0 : i32
    %c0_i32_0 = arith.constant 0 : i32
    %c0_i32_1 = arith.constant 0 : i32
    return %c0_i32, %c0_i32_0 : i32, i32
  }
  func.func @transform_12(%arg0: i32, %arg1: i32) -> (i32, i32) {
    %c0_i32 = arith.constant 0 : i32
    %c0_i32_0 = arith.constant 0 : i32
    %c0_i32_1 = arith.constant 0 : i32
    return %c0_i32, %c0_i32_0 : i32, i32
  }
  func.func @transform_13(%arg0: i32, %arg1: i32) -> (i32, i32) {
    %c0_i32 = arith.constant 0 : i32
    %c0_i32_0 = arith.constant 0 : i32
    %c0_i32_1 = arith.constant 0 : i32
    return %c0_i32, %c0_i32_0 : i32, i32
  }
  func.func @transform_14(%arg0: i32, %arg1: i32) -> (i32, i32) {
    %c0_i32 = arith.constant 0 : i32
    %c0_i32_0 = arith.constant 0 : i32
    %c0_i32_1 = arith.constant 0 : i32
    return %c0_i32, %c0_i32_0 : i32, i32
  }
  func.func @transform_15(%arg0: i32, %arg1: i32) -> (i32, i32) {
    %c0_i32 = arith.constant 0 : i32
    %c0_i32_0 = arith.constant 0 : i32
    %c0_i32_1 = arith.constant 0 : i32
    return %c0_i32, %c0_i32_0 : i32, i32
  }
  func.func @transform_16(%arg0: i32, %arg1: i32) -> (i32, i32) {
    %c0_i32 = arith.constant 0 : i32
    %c0_i32_0 = arith.constant 0 : i32
    %c0_i32_1 = arith.constant 0 : i32
    return %c0_i32, %c0_i32_0 : i32, i32
  }
  func.func @transform_17(%arg0: i32, %arg1: i32) -> (i32, i32) {
    %c0_i32 = arith.constant 0 : i32
    %c0_i32_0 = arith.constant 0 : i32
    %c0_i32_1 = arith.constant 0 : i32
    return %c0_i32, %c0_i32_0 : i32, i32
  }
  func.func @transform_18(%arg0: i32, %arg1: i32) -> (i32, i32) {
    %c0_i32 = arith.constant 0 : i32
    %c0_i32_0 = arith.constant 0 : i32
    %c0_i32_1 = arith.constant 0 : i32
    return %c0_i32, %c0_i32_0 : i32, i32
  }
  func.func @transform_19(%arg0: i32, %arg1: i32) -> (i32, i32) {
    %c0_i32 = arith.constant 0 : i32
    %c0_i32_0 = arith.constant 0 : i32
    %c0_i32_1 = arith.constant 0 : i32
    return %c0_i32, %c0_i32_0 : i32, i32
  }
  func.func @transform_20(%arg0: i32, %arg1: i32) -> (i32, i32) {
    %c0_i32 = arith.constant 0 : i32
    %c0_i32_0 = arith.constant 0 : i32
    %c0_i32_1 = arith.constant 0 : i32
    return %c0_i32, %c0_i32_0 : i32, i32
  }
  func.func @transform_21(%arg0: i32, %arg1: i32) -> (i32, i32, i32) {
    %c0_i32 = arith.constant 0 : i32
    %c0_i32_0 = arith.constant 0 : i32
    return %arg0, %arg1, %c0_i32 : i32, i32, i32
  }
}

</mosaic_0001>

<llo_original>
// kernel: tpu_custom_call.1
$region0: #{tpu_custom_call.1}
  #allocation0 [shape = 'u32[]', space=smem, size = 0x4, offset = 0x4, fixed_abs, tag = 'smem constant byte address 0x4 - core index']
  #allocation1 [shape = 'u32[144,128]{1,0:T(1,128)}', space=vmem, size = 0x12000, scoped, tag = 'internal scratch']
  #allocation2 [shape = 'bf16[32,32]{1,0:T(16,128)(2,1)}', space=vmem, size = 0x2000, scoped, tag = 'scratch operand']
  #allocation3 [shape = 'bf16[32,32]{1,0:T(16,128)(2,1)}', space=vmem, size = 0x2000, scoped, tag = 'scratch operand']
  %s0 = inlined_call_operand.vmem [shape: f32[2,32,32], index: 0, kind: input, shape index: {}]
  %s1 = inlined_call_operand.vmem [shape: f32[2,32,8], index: 1, kind: input, shape index: {}]
  %s2 = inlined_call_operand.vmem [shape: f32[2,32,8], index: 2, kind: input, shape index: {}]
  %s3 = inlined_call_operand.vmem [shape: f32[1,32], index: 3, kind: input, shape index: {}]
  %s4 = inlined_call_operand.vmem [shape: f32[1,32], index: 4, kind: input, shape index: {}]
  %s5 = inlined_call_operand.vmem [shape: bf16[32,32], index: 5, kind: input, shape index: {}]
  %s6 = inlined_call_operand.vmem [shape: bf16[32,32], index: 6, kind: input, shape index: {}]
  %s7 = inlined_call_operand.vmem [shape: bf16[32,32], index: 7, kind: input, shape index: {}]
  %s8 = inlined_call_operand.vmem [shape: f32[1,32], index: 8, kind: input, shape index: {}]
  %s9 = inlined_call_operand.vmem [shape: f32[1,32], index: 9, kind: input, shape index: {}]
  %s10 = inlined_call_operand.vmem [shape: f32[1,32], index: 10, kind: input, shape index: {}]
  %s11 = inlined_call_operand.vmem [shape: bf16[32,32], index: 11, kind: input, shape index: {}]
  %s12 = inlined_call_operand.vmem [shape: f32[1,32], index: 12, kind: input, shape index: {}]
  %s13 = inlined_call_operand.vmem [shape: f32[1,32], index: 13, kind: input, shape index: {}]
  %s14 = inlined_call_operand.vmem [shape: f32[1,32], index: 14, kind: input, shape index: {}]
  %s15 = inlined_call_operand.vmem [shape: bf16[32,64], index: 15, kind: input, shape index: {}]
  %s16 = inlined_call_operand.vmem [shape: bf16[32,64], index: 16, kind: input, shape index: {}]
  %s17 = inlined_call_operand.vmem [shape: f32[1,64], index: 17, kind: input, shape index: {}]
  %s18 = inlined_call_operand.vmem [shape: f32[1,64], index: 18, kind: input, shape index: {}]
  %s19 = inlined_call_operand.vmem [shape: bf16[64,32], index: 19, kind: input, shape index: {}]
  %s20 = inlined_call_operand.vmem [shape: f32[1,32], index: 20, kind: input, shape index: {}]
  %s21 = inlined_call_operand.hbm [shape: f32[2,32,32], index: 21, kind: output, shape index: {}]
  %s22 = sld [smem:[#allocation0]]
  $region121: #{tpu_custom_call.1} parent=0
    _
  %s24 = ssub.s32 1, %s22
  %s25 = scalar_select 0, %s24, %s22
  $region1: #{tpu_custom_call.1} parent=0
    #allocation4 [shape = 'u8[16384]{0}', space=vmem, size = 0x4000, scoped, tag = 'output window, operand 0']
    #allocation5 [shape = 's32[2]{0}', space=sflag, size = 0x8, scoped, tag = 'scoped memory for tpu_custom_call.1']
    %26 = vsyncpa [#allocation5], 0
    %s27 = scalar_lea.sflag [#allocation5], 1
    %28 = vsyncpa %s27, 0
    loop: start=0, step=1, limit=6
    $region2: #{tpu_custom_call.1} parent=1 // loop_pre_header
      _
    $region3: #{tpu_custom_call.1} parent=1 // loop_header
      %s30 = sphi 0, %s34
      %p31 = scmp.ge.s32.totalorder %s30, 6
      %s37 = sphi 0, %s49
      %s38 = sphi 0, %s45
      %s39 = sphi 0, %s37
      %s40 = sphi 0, %s38
      %s41 = sphi 0, %s39
      %s42 = sphi 0, %s40
      %s52 = sphi 0, %s54
      %s55 = sphi 0, %s52
      %s56 = sphi 0, %s55
      %s72 = sphi 0, %s56
      %s78 = sphi 0, %s80
      %s81 = sphi 0, %s78
      %s82 = sphi 0, %s81
      %s98 = sphi 0, %s82
      %s104 = sphi 0, %s106
      %s107 = sphi 0, %s104
      %s108 = sphi 0, %s107
      %s124 = sphi 0, %s108
      %s128 = sphi 0, %s128
      %s130 = sphi 0, %s128
      %s131 = sphi 0, %s130
      %s145 = sphi 0, %s131
      %s149 = sphi 0, %s149
      %s151 = sphi 0, %s149
      %s152 = sphi 0, %s151
      %s166 = sphi 0, %s152
      %s170 = sphi 0, %s170
      %s172 = sphi 0, %s170
      %s173 = sphi 0, %s172
      %s187 = sphi 0, %s173
      %s191 = sphi 0, %s191
      %s193 = sphi 0, %s191
      %s194 = sphi 0, %s193
      %s208 = sphi 0, %s194
      %s212 = sphi 0, %s212
      %s214 = sphi 0, %s212
      %s215 = sphi 0, %s214
      %s229 = sphi 0, %s215
      %s233 = sphi 0, %s233
      %s235 = sphi 0, %s233
      %s236 = sphi 0, %s235
      %s250 = sphi 0, %s236
      %s254 = sphi 0, %s254
      %s256 = sphi 0, %s254
      %s257 = sphi 0, %s256
      %s271 = sphi 0, %s257
      %s275 = sphi 0, %s275
      %s277 = sphi 0, %s275
      %s278 = sphi 0, %s277
      %s292 = sphi 0, %s278
      %s296 = sphi 0, %s296
      %s298 = sphi 0, %s296
      %s299 = sphi 0, %s298
      %s313 = sphi 0, %s299
      %s317 = sphi 0, %s317
      %s319 = sphi 0, %s317
      %s320 = sphi 0, %s319
      %s334 = sphi 0, %s320
      %s338 = sphi 0, %s338
      %s340 = sphi 0, %s338
      %s341 = sphi 0, %s340
      %s355 = sphi 0, %s341
      %s359 = sphi 0, %s359
      %s361 = sphi 0, %s359
      %s362 = sphi 0, %s361
      %s376 = sphi 0, %s362
      %s380 = sphi 0, %s380
      %s382 = sphi 0, %s380
      %s383 = sphi 0, %s382
      %s397 = sphi 0, %s383
      %s401 = sphi 0, %s401
      %s403 = sphi 0, %s401
      %s404 = sphi 0, %s403
      %s418 = sphi 0, %s404
      %s422 = sphi 0, %s422
      %s424 = sphi 0, %s422
      %s425 = sphi 0, %s424
      %s439 = sphi 0, %s425
      %s443 = sphi 0, %s443
      %s445 = sphi 0, %s443
      %s446 = sphi 0, %s445
      %s460 = sphi 0, %s446
      %s464 = sphi 0, %s464
      %s466 = sphi 0, %s464
      %s467 = sphi 0, %s466
      %s481 = sphi 0, %s467
      %s485 = sphi 0, %s485
      %s487 = sphi 0, %s485
      %s488 = sphi 0, %s487
      %s502 = sphi 0, %s488
      %s510 = sphi 0, %s512
      %s513 = sphi 0, %s510
      %s514 = sphi 0, %s513
      %s530 = sphi 0, %s514
    $region4: #{tpu_custom_call.1} parent=1 // loop_header_branch
      %33 = sbr.rel (%p31) target = $region8
    $region5: #{tpu_custom_call.1} parent=1 // loop_body
      %s35 = ssub.s32 %s30, 1
      %s36 = ssub.s32 %s30, 2
      %s43 = sadd.s32 1, %s38
      %p44 = scmp.ge.s32.totalorder %s43, 2
      %s45 = scalar_select %p44, 0, %s43
      %s46 = sadd.s32 1, %s37
      %s47 = scalar_select %p44, %s46, %s37
      %p48 = scmp.ge.s32.totalorder %s47, 2
      %s49 = scalar_select %p48, 0, %s47
      %s50 = ssub.s32 %s37, %s49
      %p51 = scmp.eq.s32.totalorder %s50, 0
      %s53 = sadd.s32 %s52, 1
      %s54 = scalar_select %p51, %s52, %s53
      %p57 = pneg %p51
      %p58 = scmp.eq.s32.totalorder %s30, 3
      %p59 = por %p57, %p58
      %p60 = scmp.ne.s32.totalorder %s52, %s55
      %p61 = scmp.eq.s32.totalorder %s30, 0
      %p62 = por %p60, %p61
      %p63 = scmp.ne.s32.totalorder %s52, %s55
      %p64 = scmp.eq.s32.totalorder %s35, 3
      %p65 = por %p63, %p64
      %p66 = scmp.ne.s32.totalorder %s55, %s56
      %p67 = scmp.eq.s32.totalorder %s35, 0
      %p68 = por %p66, %p67
      %p69 = scmp.ne.s32.totalorder %s55, %s56
      %p70 = scmp.eq.s32.totalorder %s36, 3
      %p71 = por %p69, %p70
      %p73 = scmp.ne.s32.totalorder %s56, %s72
      %p74 = scmp.eq.s32.totalorder %s36, 0
      %p75 = por %p73, %p74
      %s76 = ssub.s32 %s37, %s49
      %p77 = scmp.eq.s32.totalorder %s76, 0
      %s79 = sadd.s32 %s78, 1
      %s80 = scalar_select %p77, %s78, %s79
      %p83 = pneg %p77
      %p84 = scmp.eq.s32.totalorder %s30, 3
      %p85 = por %p83, %p84
      %p86 = scmp.ne.s32.totalorder %s78, %s81
      %p87 = scmp.eq.s32.totalorder %s30, 0
      %p88 = por %p86, %p87
      %p89 = scmp.ne.s32.totalorder %s78, %s81
      %p90 = scmp.eq.s32.totalorder %s35, 3
      %p91 = por %p89, %p90
      %p92 = scmp.ne.s32.totalorder %s81, %s82
      %p93 = scmp.eq.s32.totalorder %s35, 0
      %p94 = por %p92, %p93
      %p95 = scmp.ne.s32.totalorder %s81, %s82
      %p96 = scmp.eq.s32.totalorder %s36, 3
      %p97 = por %p95, %p96
      %p99 = scmp.ne.s32.totalorder %s82, %s98
      %p100 = scmp.eq.s32.totalorder %s36, 0
      %p101 = por %p99, %p100
      %s102 = ssub.s32 %s37, %s49
      %p103 = scmp.eq.s32.totalorder %s102, 0
      %s105 = sadd.s32 %s104, 1
      %s106 = scalar_select %p103, %s104, %s105
      %p109 = pneg %p103
      %p110 = scmp.eq.s32.totalorder %s30, 3
      %p111 = por %p109, %p110
      %p112 = scmp.ne.s32.totalorder %s104, %s107
      %p113 = scmp.eq.s32.totalorder %s30, 0
      %p114 = por %p112, %p113
      %p115 = scmp.ne.s32.totalorder %s104, %s107
      %p116 = scmp.eq.s32.totalorder %s35, 3
      %p117 = por %p115, %p116
      %p118 = scmp.ne.s32.totalorder %s107, %s108
      %p119 = scmp.eq.s32.totalorder %s35, 0
      %p120 = por %p118, %p119
      %p121 = scmp.ne.s32.totalorder %s107, %s108
      %p122 = scmp.eq.s32.totalorder %s36, 3
      %p123 = por %p121, %p122
      %p125 = scmp.ne.s32.totalorder %s108, %s124
      %p126 = scmp.eq.s32.totalorder %s36, 0
      %p127 = por %p125, %p126
      %s129 = sadd.s32 %s128, 1
      %p132 = scmp.eq.s32.totalorder %s30, 3
      %p133 = scmp.ne.s32.totalorder %s128, %s130
      %p134 = scmp.eq.s32.totalorder %s30, 0
      %p135 = por %p133, %p134
      %p136 = scmp.ne.s32.totalorder %s128, %s130
      %p137 = scmp.eq.s32.totalorder %s35, 3
      %p138 = por %p136, %p137
      %p139 = scmp.ne.s32.totalorder %s130, %s131
      %p140 = scmp.eq.s32.totalorder %s35, 0
      %p141 = por %p139, %p140
      %p142 = scmp.ne.s32.totalorder %s130, %s131
      %p143 = scmp.eq.s32.totalorder %s36, 3
      %p144 = por %p142, %p143
      %p146 = scmp.ne.s32.totalorder %s131, %s145
      %p147 = scmp.eq.s32.totalorder %s36, 0
      %p148 = por %p146, %p147
      %s150 = sadd.s32 %s149, 1
      %p153 = scmp.eq.s32.totalorder %s30, 3
      %p154 = scmp.ne.s32.totalorder %s149, %s151
      %p155 = scmp.eq.s32.totalorder %s30, 0
      %p156 = por %p154, %p155
      %p157 = scmp.ne.s32.totalorder %s149, %s151
      %p158 = scmp.eq.s32.totalorder %s35, 3
      %p159 = por %p157, %p158
      %p160 = scmp.ne.s32.totalorder %s151, %s152
      %p161 = scmp.eq.s32.totalorder %s35, 0
      %p162 = por %p160, %p161
      %p163 = scmp.ne.s32.totalorder %s151, %s152
      %p164 = scmp.eq.s32.totalorder %s36, 3
      %p165 = por %p163, %p164
      %p167 = scmp.ne.s32.totalorder %s152, %s166
      %p168 = scmp.eq.s32.totalorder %s36, 0
      %p169 = por %p167, %p168
      %s171 = sadd.s32 %s170, 1
      %p174 = scmp.eq.s32.totalorder %s30, 3
      %p175 = scmp.ne.s32.totalorder %s170, %s172
      %p176 = scmp.eq.s32.totalorder %s30, 0
      %p177 = por %p175, %p176
      %p178 = scmp.ne.s32.totalorder %s170, %s172
      %p179 = scmp.eq.s32.totalorder %s35, 3
      %p180 = por %p178, %p179
      %p181 = scmp.ne.s32.totalorder %s172, %s173
      %p182 = scmp.eq.s32.totalorder %s35, 0
      %p183 = por %p181, %p182
      %p184 = scmp.ne.s32.totalorder %s172, %s173
      %p185 = scmp.eq.s32.totalorder %s36, 3
      %p186 = por %p184, %p185
      %p188 = scmp.ne.s32.totalorder %s173, %s187
      %p189 = scmp.eq.s32.totalorder %s36, 0
      %p190 = por %p188, %p189
      %s192 = sadd.s32 %s191, 1
      %p195 = scmp.eq.s32.totalorder %s30, 3
      %p196 = scmp.ne.s32.totalorder %s191, %s193
      %p197 = scmp.eq.s32.totalorder %s30, 0
      %p198 = por %p196, %p197
      %p199 = scmp.ne.s32.totalorder %s191, %s193
      %p200 = scmp.eq.s32.totalorder %s35, 3
      %p201 = por %p199, %p200
      %p202 = scmp.ne.s32.totalorder %s193, %s194
      %p203 = scmp.eq.s32.totalorder %s35, 0
      %p204 = por %p202, %p203
      %p205 = scmp.ne.s32.totalorder %s193, %s194
      %p206 = scmp.eq.s32.totalorder %s36, 3
      %p207 = por %p205, %p206
      %p209 = scmp.ne.s32.totalorder %s194, %s208
      %p210 = scmp.eq.s32.totalorder %s36, 0
      %p211 = por %p209, %p210
      %s213 = sadd.s32 %s212, 1
      %p216 = scmp.eq.s32.totalorder %s30, 3
      %p217 = scmp.ne.s32.totalorder %s212, %s214
      %p218 = scmp.eq.s32.totalorder %s30, 0
      %p219 = por %p217, %p218
      %p220 = scmp.ne.s32.totalorder %s212, %s214
      %p221 = scmp.eq.s32.totalorder %s35, 3
      %p222 = por %p220, %p221
      %p223 = scmp.ne.s32.totalorder %s214, %s215
      %p224 = scmp.eq.s32.totalorder %s35, 0
      %p225 = por %p223, %p224
      %p226 = scmp.ne.s32.totalorder %s214, %s215
      %p227 = scmp.eq.s32.totalorder %s36, 3
      %p228 = por %p226, %p227
      %p230 = scmp.ne.s32.totalorder %s215, %s229
      %p231 = scmp.eq.s32.totalorder %s36, 0
      %p232 = por %p230, %p231
      %s234 = sadd.s32 %s233, 1
      %p237 = scmp.eq.s32.totalorder %s30, 3
      %p238 = scmp.ne.s32.totalorder %s233, %s235
      %p239 = scmp.eq.s32.totalorder %s30, 0
      %p240 = por %p238, %p239
      %p241 = scmp.ne.s32.totalorder %s233, %s235
      %p242 = scmp.eq.s32.totalorder %s35, 3
      %p243 = por %p241, %p242
      %p244 = scmp.ne.s32.totalorder %s235, %s236
      %p245 = scmp.eq.s32.totalorder %s35, 0
      %p246 = por %p244, %p245
      %p247 = scmp.ne.s32.totalorder %s235, %s236
      %p248 = scmp.eq.s32.totalorder %s36, 3
      %p249 = por %p247, %p248
      %p251 = scmp.ne.s32.totalorder %s236, %s250
      %p252 = scmp.eq.s32.totalorder %s36, 0
      %p253 = por %p251, %p252
      %s255 = sadd.s32 %s254, 1
      %p258 = scmp.eq.s32.totalorder %s30, 3
      %p259 = scmp.ne.s32.totalorder %s254, %s256
      %p260 = scmp.eq.s32.totalorder %s30, 0
      %p261 = por %p259, %p260
      %p262 = scmp.ne.s32.totalorder %s254, %s256
      %p263 = scmp.eq.s32.totalorder %s35, 3
      %p264 = por %p262, %p263
      %p265 = scmp.ne.s32.totalorder %s256, %s257
      %p266 = scmp.eq.s32.totalorder %s35, 0
      %p267 = por %p265, %p266
      %p268 = scmp.ne.s32.totalorder %s256, %s257
      %p269 = scmp.eq.s32.totalorder %s36, 3
      %p270 = por %p268, %p269
      %p272 = scmp.ne.s32.totalorder %s257, %s271
      %p273 = scmp.eq.s32.totalorder %s36, 0
      %p274 = por %p272, %p273
      %s276 = sadd.s32 %s275, 1
      %p279 = scmp.eq.s32.totalorder %s30, 3
      %p280 = scmp.ne.s32.totalorder %s275, %s277
      %p281 = scmp.eq.s32.totalorder %s30, 0
      %p282 = por %p280, %p281
      %p283 = scmp.ne.s32.totalorder %s275, %s277
      %p284 = scmp.eq.s32.totalorder %s35, 3
      %p285 = por %p283, %p284
      %p286 = scmp.ne.s32.totalorder %s277, %s278
      %p287 = scmp.eq.s32.totalorder %s35, 0
      %p288 = por %p286, %p287
      %p289 = scmp.ne.s32.totalorder %s277, %s278
      %p290 = scmp.eq.s32.totalorder %s36, 3
      %p291 = por %p289, %p290
      %p293 = scmp.ne.s32.totalorder %s278, %s292
      %p294 = scmp.eq.s32.totalorder %s36, 0
      %p295 = por %p293, %p294
      %s297 = sadd.s32 %s296, 1
      %p300 = scmp.eq.s32.totalorder %s30, 3
      %p301 = scmp.ne.s32.totalorder %s296, %s298
      %p302 = scmp.eq.s32.totalorder %s30, 0
      %p303 = por %p301, %p302
      %p304 = scmp.ne.s32.totalorder %s296, %s298
      %p305 = scmp.eq.s32.totalorder %s35, 3
      %p306 = por %p304, %p305
      %p307 = scmp.ne.s32.totalorder %s298, %s299
      %p308 = scmp.eq.s32.totalorder %s35, 0
      %p309 = por %p307, %p308
      %p310 = scmp.ne.s32.totalorder %s298, %s299
      %p311 = scmp.eq.s32.totalorder %s36, 3
      %p312 = por %p310, %p311
      %p314 = scmp.ne.s32.totalorder %s299, %s313
      %p315 = scmp.eq.s32.totalorder %s36, 0
      %p316 = por %p314, %p315
      %s318 = sadd.s32 %s317, 1
      %p321 = scmp.eq.s32.totalorder %s30, 3
      %p322 = scmp.ne.s32.totalorder %s317, %s319
      %p323 = scmp.eq.s32.totalorder %s30, 0
      %p324 = por %p322, %p323
      %p325 = scmp.ne.s32.totalorder %s317, %s319
      %p326 = scmp.eq.s32.totalorder %s35, 3
      %p327 = por %p325, %p326
      %p328 = scmp.ne.s32.totalorder %s319, %s320
      %p329 = scmp.eq.s32.totalorder %s35, 0
      %p330 = por %p328, %p329
      %p331 = scmp.ne.s32.totalorder %s319, %s320
      %p332 = scmp.eq.s32.totalorder %s36, 3
      %p333 = por %p331, %p332
      %p335 = scmp.ne.s32.totalorder %s320, %s334
      %p336 = scmp.eq.s32.totalorder %s36, 0
      %p337 = por %p335, %p336
      %s339 = sadd.s32 %s338, 1
      %p342 = scmp.eq.s32.totalorder %s30, 3
      %p343 = scmp.ne.s32.totalorder %s338, %s340
      %p344 = scmp.eq.s32.totalorder %s30, 0
      %p345 = por %p343, %p344
      %p346 = scmp.ne.s32.totalorder %s338, %s340
      %p347 = scmp.eq.s32.totalorder %s35, 3
      %p348 = por %p346, %p347
      %p349 = scmp.ne.s32.totalorder %s340, %s341
      %p350 = scmp.eq.s32.totalorder %s35, 0
      %p351 = por %p349, %p350
      %p352 = scmp.ne.s32.totalorder %s340, %s341
      %p353 = scmp.eq.s32.totalorder %s36, 3
      %p354 = por %p352, %p353
      %p356 = scmp.ne.s32.totalorder %s341, %s355
      %p357 = scmp.eq.s32.totalorder %s36, 0
      %p358 = por %p356, %p357
      %s360 = sadd.s32 %s359, 1
      %p363 = scmp.eq.s32.totalorder %s30, 3
      %p364 = scmp.ne.s32.totalorder %s359, %s361
      %p365 = scmp.eq.s32.totalorder %s30, 0
      %p366 = por %p364, %p365
      %p367 = scmp.ne.s32.totalorder %s359, %s361
      %p368 = scmp.eq.s32.totalorder %s35, 3
      %p369 = por %p367, %p368
      %p370 = scmp.ne.s32.totalorder %s361, %s362
      %p371 = scmp.eq.s32.totalorder %s35, 0
      %p372 = por %p370, %p371
      %p373 = scmp.ne.s32.totalorder %s361, %s362
      %p374 = scmp.eq.s32.totalorder %s36, 3
      %p375 = por %p373, %p374
      %p377 = scmp.ne.s32.totalorder %s362, %s376
      %p378 = scmp.eq.s32.totalorder %s36, 0
      %p379 = por %p377, %p378
      %s381 = sadd.s32 %s380, 1
      %p384 = scmp.eq.s32.totalorder %s30, 3
      %p385 = scmp.ne.s32.totalorder %s380, %s382
      %p386 = scmp.eq.s32.totalorder %s30, 0
      %p387 = por %p385, %p386
      %p388 = scmp.ne.s32.totalorder %s380, %s382
      %p389 = scmp.eq.s32.totalorder %s35, 3
      %p390 = por %p388, %p389
      %p391 = scmp.ne.s32.totalorder %s382, %s383
      %p392 = scmp.eq.s32.totalorder %s35, 0
      %p393 = por %p391, %p392
      %p394 = scmp.ne.s32.totalorder %s382, %s383
      %p395 = scmp.eq.s32.totalorder %s36, 3
      %p396 = por %p394, %p395
      %p398 = scmp.ne.s32.totalorder %s383, %s397
      %p399 = scmp.eq.s32.totalorder %s36, 0
      %p400 = por %p398, %p399
      %s402 = sadd.s32 %s401, 1
      %p405 = scmp.eq.s32.totalorder %s30, 3
      %p406 = scmp.ne.s32.totalorder %s401, %s403
      %p407 = scmp.eq.s32.totalorder %s30, 0
      %p408 = por %p406, %p407
      %p409 = scmp.ne.s32.totalorder %s401, %s403
      %p410 = scmp.eq.s32.totalorder %s35, 3
      %p411 = por %p409, %p410
      %p412 = scmp.ne.s32.totalorder %s403, %s404
      %p413 = scmp.eq.s32.totalorder %s35, 0
      %p414 = por %p412, %p413
      %p415 = scmp.ne.s32.totalorder %s403, %s404
      %p416 = scmp.eq.s32.totalorder %s36, 3
      %p417 = por %p415, %p416
      %p419 = scmp.ne.s32.totalorder %s404, %s418
      %p420 = scmp.eq.s32.totalorder %s36, 0
      %p421 = por %p419, %p420
      %s423 = sadd.s32 %s422, 1
      %p426 = scmp.eq.s32.totalorder %s30, 3
      %p427 = scmp.ne.s32.totalorder %s422, %s424
      %p428 = scmp.eq.s32.totalorder %s30, 0
      %p429 = por %p427, %p428
      %p430 = scmp.ne.s32.totalorder %s422, %s424
      %p431 = scmp.eq.s32.totalorder %s35, 3
      %p432 = por %p430, %p431
      %p433 = scmp.ne.s32.totalorder %s424, %s425
      %p434 = scmp.eq.s32.totalorder %s35, 0
      %p435 = por %p433, %p434
      %p436 = scmp.ne.s32.totalorder %s424, %s425
      %p437 = scmp.eq.s32.totalorder %s36, 3
      %p438 = por %p436, %p437
      %p440 = scmp.ne.s32.totalorder %s425, %s439
      %p441 = scmp.eq.s32.totalorder %s36, 0
      %p442 = por %p440, %p441
      %s444 = sadd.s32 %s443, 1
      %p447 = scmp.eq.s32.totalorder %s30, 3
      %p448 = scmp.ne.s32.totalorder %s443, %s445
      %p449 = scmp.eq.s32.totalorder %s30, 0
      %p450 = por %p448, %p449
      %p451 = scmp.ne.s32.totalorder %s443, %s445
      %p452 = scmp.eq.s32.totalorder %s35, 3
      %p453 = por %p451, %p452
      %p454 = scmp.ne.s32.totalorder %s445, %s446
      %p455 = scmp.eq.s32.totalorder %s35, 0
      %p456 = por %p454, %p455
      %p457 = scmp.ne.s32.totalorder %s445, %s446
      %p458 = scmp.eq.s32.totalorder %s36, 3
      %p459 = por %p457, %p458
      %p461 = scmp.ne.s32.totalorder %s446, %s460
      %p462 = scmp.eq.s32.totalorder %s36, 0
      %p463 = por %p461, %p462
      %s465 = sadd.s32 %s464, 1
      %p468 = scmp.eq.s32.totalorder %s30, 3
      %p469 = scmp.ne.s32.totalorder %s464, %s466
      %p470 = scmp.eq.s32.totalorder %s30, 0
      %p471 = por %p469, %p470
      %p472 = scmp.ne.s32.totalorder %s464, %s466
      %p473 = scmp.eq.s32.totalorder %s35, 3
      %p474 = por %p472, %p473
      %p475 = scmp.ne.s32.totalorder %s466, %s467
      %p476 = scmp.eq.s32.totalorder %s35, 0
      %p477 = por %p475, %p476
      %p478 = scmp.ne.s32.totalorder %s466, %s467
      %p479 = scmp.eq.s32.totalorder %s36, 3
      %p480 = por %p478, %p479
      %p482 = scmp.ne.s32.totalorder %s467, %s481
      %p483 = scmp.eq.s32.totalorder %s36, 0
      %p484 = por %p482, %p483
      %s486 = sadd.s32 %s485, 1
      %p489 = scmp.eq.s32.totalorder %s30, 3
      %p490 = scmp.ne.s32.totalorder %s485, %s487
      %p491 = scmp.eq.s32.totalorder %s30, 0
      %p492 = por %p490, %p491
      %p493 = scmp.ne.s32.totalorder %s485, %s487
      %p494 = scmp.eq.s32.totalorder %s35, 3
      %p495 = por %p493, %p494
      %p496 = scmp.ne.s32.totalorder %s487, %s488
      %p497 = scmp.eq.s32.totalorder %s35, 0
      %p498 = por %p496, %p497
      %p499 = scmp.ne.s32.totalorder %s487, %s488
      %p500 = scmp.eq.s32.totalorder %s36, 3
      %p501 = por %p499, %p500
      %p503 = scmp.ne.s32.totalorder %s488, %s502
      %p504 = scmp.eq.s32.totalorder %s36, 0
      %p505 = por %p503, %p504
      %s506 = ssub.s32 %s37, %s49
      %s507 = ssub.s32 %s38, %s45
      %s508 = sor.u32 %s506, %s507
      %p509 = scmp.eq.s32.totalorder %s508, 0
      %s511 = sadd.s32 %s510, 1
      %s512 = scalar_select %p509, %s510, %s511
      %p515 = pneg %p509
      %p516 = scmp.eq.s32.totalorder %s30, 3
      %p517 = por %p515, %p516
      %p518 = scmp.ne.s32.totalorder %s510, %s513
      %p519 = scmp.eq.s32.totalorder %s30, 0
      %p520 = por %p518, %p519
      %p521 = scmp.ne.s32.totalorder %s510, %s513
      %p522 = scmp.eq.s32.totalorder %s35, 3
      %p523 = por %p521, %p522
      %p524 = scmp.ne.s32.totalorder %s513, %s514
      %p525 = scmp.eq.s32.totalorder %s35, 0
      %p526 = por %p524, %p525
      %p527 = scmp.ne.s32.totalorder %s513, %s514
      %p528 = scmp.eq.s32.totalorder %s36, 3
      %p529 = por %p527, %p528
      %p531 = scmp.ne.s32.totalorder %s514, %s530
      %p532 = scmp.eq.s32.totalorder %s36, 0
      %p533 = por %p531, %p532
      %p534 = scmp.le.s32.totalorder 1, %s30
      %p535 = scmp.lt.s32.totalorder %s30, 5
      %p536 = pnand %p534, %p535
      %p537 = pneg %p536
      // Predicated region
      $region9: #{tpu_custom_call.1} parent=5 // pred_check
        _
      $region10: #{tpu_custom_call.1} parent=5 // pred_check_branch
        %539 = sbr.rel (%p536) target = $region12
      $region11: #{tpu_custom_call.1} parent=5 // pred_region
        %s540 = ssub.s32 %s30, 1
        // Predicated region
        $region13: #{tpu_custom_call.1} parent=11 // pred_check
          %p541 = pneg %p141
        $region14: #{tpu_custom_call.1} parent=11 // pred_check_branch
          %543 = sbr.rel (%p541) target = $region16
        $region15: #{tpu_custom_call.1} parent=11 // pred_region
          _
        $region16: #{tpu_custom_call.1} parent=11 // pred_fallthru
          _
        // Predicated region
        $region17: #{tpu_custom_call.1} parent=11 // pred_check
          %p544 = pneg %p162
        $region18: #{tpu_custom_call.1} parent=11 // pred_check_branch
          %546 = sbr.rel (%p544) target = $region20
        $region19: #{tpu_custom_call.1} parent=11 // pred_region
          _
        $region20: #{tpu_custom_call.1} parent=11 // pred_fallthru
          _
        // Predicated region
        $region21: #{tpu_custom_call.1} parent=11 // pred_check
          %p547 = pneg %p183
        $region22: #{tpu_custom_call.1} parent=11 // pred_check_branch
          %549 = sbr.rel (%p547) target = $region24
        $region23: #{tpu_custom_call.1} parent=11 // pred_region
          _
        $region24: #{tpu_custom_call.1} parent=11 // pred_fallthru
          _
        // Predicated region
        $region25: #{tpu_custom_call.1} parent=11 // pred_check
          %p550 = pneg %p204
        $region26: #{tpu_custom_call.1} parent=11 // pred_check_branch
          %552 = sbr.rel (%p550) target = $region28
        $region27: #{tpu_custom_call.1} parent=11 // pred_region
          _
        $region28: #{tpu_custom_call.1} parent=11 // pred_fallthru
          _
        // Predicated region
        $region29: #{tpu_custom_call.1} parent=11 // pred_check
          %p553 = pneg %p225
        $region30: #{tpu_custom_call.1} parent=11 // pred_check_branch
          %555 = sbr.rel (%p553) target = $region32
        $region31: #{tpu_custom_call.1} parent=11 // pred_region
          _
        $region32: #{tpu_custom_call.1} parent=11 // pred_fallthru
          _
        // Predicated region
        $region33: #{tpu_custom_call.1} parent=11 // pred_check
          %p556 = pneg %p246
        $region34: #{tpu_custom_call.1} parent=11 // pred_check_branch
          %558 = sbr.rel (%p556) target = $region36
        $region35: #{tpu_custom_call.1} parent=11 // pred_region
          _
        $region36: #{tpu_custom_call.1} parent=11 // pred_fallthru
          _
        // Predicated region
        $region37: #{tpu_custom_call.1} parent=11 // pred_check
          %p559 = pneg %p267
        $region38: #{tpu_custom_call.1} parent=11 // pred_check_branch
          %561 = sbr.rel (%p559) target = $region40
        $region39: #{tpu_custom_call.1} parent=11 // pred_region
          _
        $region40: #{tpu_custom_call.1} parent=11 // pred_fallthru
          _
        // Predicated region
        $region41: #{tpu_custom_call.1} parent=11 // pred_check
          %p562 = pneg %p288
        $region42: #{tpu_custom_call.1} parent=11 // pred_check_branch
          %564 = sbr.rel (%p562) target = $region44
        $region43: #{tpu_custom_call.1} parent=11 // pred_region
          _
        $region44: #{tpu_custom_call.1} parent=11 // pred_fallthru
          _
        // Predicated region
        $region45: #{tpu_custom_call.1} parent=11 // pred_check
          %p565 = pneg %p309
        $region46: #{tpu_custom_call.1} parent=11 // pred_check_branch
          %567 = sbr.rel (%p565) target = $region48
        $region47: #{tpu_custom_call.1} parent=11 // pred_region
          _
        $region48: #{tpu_custom_call.1} parent=11 // pred_fallthru
          _
        // Predicated region
        $region49: #{tpu_custom_call.1} parent=11 // pred_check
          %p568 = pneg %p330
        $region50: #{tpu_custom_call.1} parent=11 // pred_check_branch
          %570 = sbr.rel (%p568) target = $region52
        $region51: #{tpu_custom_call.1} parent=11 // pred_region
          _
        $region52: #{tpu_custom_call.1} parent=11 // pred_fallthru
          _
        // Predicated region
        $region53: #{tpu_custom_call.1} parent=11 // pred_check
          %p571 = pneg %p351
        $region54: #{tpu_custom_call.1} parent=11 // pred_check_branch
          %573 = sbr.rel (%p571) target = $region56
        $region55: #{tpu_custom_call.1} parent=11 // pred_region
          _
        $region56: #{tpu_custom_call.1} parent=11 // pred_fallthru
          _
        // Predicated region
        $region57: #{tpu_custom_call.1} parent=11 // pred_check
          %p574 = pneg %p372
        $region58: #{tpu_custom_call.1} parent=11 // pred_check_branch
          %576 = sbr.rel (%p574) target = $region60
        $region59: #{tpu_custom_call.1} parent=11 // pred_region
          _
        $region60: #{tpu_custom_call.1} parent=11 // pred_fallthru
          _
        // Predicated region
        $region61: #{tpu_custom_call.1} parent=11 // pred_check
          %p577 = pneg %p393
        $region62: #{tpu_custom_call.1} parent=11 // pred_check_branch
          %579 = sbr.rel (%p577) target = $region64
        $region63: #{tpu_custom_call.1} parent=11 // pred_region
          _
        $region64: #{tpu_custom_call.1} parent=11 // pred_fallthru
          _
        // Predicated region
        $region65: #{tpu_custom_call.1} parent=11 // pred_check
          %p580 = pneg %p414
        $region66: #{tpu_custom_call.1} parent=11 // pred_check_branch
          %582 = sbr.rel (%p580) target = $region68
        $region67: #{tpu_custom_call.1} parent=11 // pred_region
          _
        $region68: #{tpu_custom_call.1} parent=11 // pred_fallthru
          _
        // Predicated region
        $region69: #{tpu_custom_call.1} parent=11 // pred_check
          %p583 = pneg %p435
        $region70: #{tpu_custom_call.1} parent=11 // pred_check_branch
          %585 = sbr.rel (%p583) target = $region72
        $region71: #{tpu_custom_call.1} parent=11 // pred_region
          _
        $region72: #{tpu_custom_call.1} parent=11 // pred_fallthru
          _
        // Predicated region
        $region73: #{tpu_custom_call.1} parent=11 // pred_check
          %p586 = pneg %p456
        $region74: #{tpu_custom_call.1} parent=11 // pred_check_branch
          %588 = sbr.rel (%p586) target = $region76
        $region75: #{tpu_custom_call.1} parent=11 // pred_region
          _
        $region76: #{tpu_custom_call.1} parent=11 // pred_fallthru
          _
        // Predicated region
        $region77: #{tpu_custom_call.1} parent=11 // pred_check
          %p589 = pneg %p477
        $region78: #{tpu_custom_call.1} parent=11 // pred_check_branch
          %591 = sbr.rel (%p589) target = $region80
        $region79: #{tpu_custom_call.1} parent=11 // pred_region
          _
        $region80: #{tpu_custom_call.1} parent=11 // pred_fallthru
          _
        // Predicated region
        $region81: #{tpu_custom_call.1} parent=11 // pred_check
          %p592 = pneg %p498
        $region82: #{tpu_custom_call.1} parent=11 // pred_check_branch
          %594 = sbr.rel (%p592) target = $region84
        $region83: #{tpu_custom_call.1} parent=11 // pred_region
          _
        $region84: #{tpu_custom_call.1} parent=11 // pred_fallthru
          _
      $region12: #{tpu_custom_call.1} parent=5 // pred_fallthru
        _
      %p595 = scmp.lt.s32.totalorder %s30, 4
      // Predicated region
      $region85: #{tpu_custom_call.1} parent=5 // pred_check
        %p596 = pneg %p595
      $region86: #{tpu_custom_call.1} parent=5 // pred_check_branch
        %598 = sbr.rel (%p596) target = $region88
      $region87: #{tpu_custom_call.1} parent=5 // pred_region
        // Predicated region
        $region89: #{tpu_custom_call.1} parent=87 // pred_check
          %p599 = pneg %p62
        $region90: #{tpu_custom_call.1} parent=87 // pred_check_branch
          %601 = sbr.rel (%p599) target = $region92
        $region91: #{tpu_custom_call.1} parent=87 // pred_region
          %p602 = scmp.lt.s32.totalorder %s37, 1
          %s603 = scalar_select %p602, %s37, 1
          %s604 = smul.addr %s603, 4
          %s605 = smul.addr %s604, 8
          %s606 = scalar_lea.vmem %s0, %s605
        $region92: #{tpu_custom_call.1} parent=87 // pred_fallthru
          _
        // Predicated region
        $region93: #{tpu_custom_call.1} parent=87 // pred_check
          %p607 = pneg %p88
        $region94: #{tpu_custom_call.1} parent=87 // pred_check_branch
          %609 = sbr.rel (%p607) target = $region96
        $region95: #{tpu_custom_call.1} parent=87 // pred_region
          %p610 = scmp.lt.s32.totalorder %s37, 1
          %s611 = scalar_select %p610, %s37, 1
          %s612 = smul.addr %s611, 4
          %s613 = smul.addr %s612, 8
          %s614 = scalar_lea.vmem %s1, %s613
        $region96: #{tpu_custom_call.1} parent=87 // pred_fallthru
          _
        // Predicated region
        $region97: #{tpu_custom_call.1} parent=87 // pred_check
          %p615 = pneg %p114
        $region98: #{tpu_custom_call.1} parent=87 // pred_check_branch
          %617 = sbr.rel (%p615) target = $region100
        $region99: #{tpu_custom_call.1} parent=87 // pred_region
          %p618 = scmp.lt.s32.totalorder %s37, 1
          %s619 = scalar_select %p618, %s37, 1
          %s620 = smul.addr %s619, 4
          %s621 = smul.addr %s620, 8
          %s622 = scalar_lea.vmem %s2, %s621
        $region100: #{tpu_custom_call.1} parent=87 // pred_fallthru
          _
      $region88: #{tpu_custom_call.1} parent=5 // pred_fallthru
        _
      %p623 = scmp.le.s32.totalorder 1, %s30
      %p624 = scmp.lt.s32.totalorder %s30, 5
      %p625 = pnand %p623, %p624
      %p626 = pneg %p625
      // Predicated region
      $region101: #{tpu_custom_call.1} parent=5 // pred_check
        _
      $region102: #{tpu_custom_call.1} parent=5 // pred_check_branch
        %628 = sbr.rel (%p625) target = $region104
      $region103: #{tpu_custom_call.1} parent=5 // pred_region
        %s629 = ssub.s32 %s30, 1
        %p630 = scmp.lt.s32.totalorder %s39, 1
        %s631 = scalar_select %p630, %s39, 1
        %s632 = smul.addr %s631, 4
        %s633 = smul.addr %s632, 8
        %s634 = scalar_lea.vmem %s0, %s633
        %p635 = pneg %p68
        %p636 = pneg %p65
        %p637 = scmp.lt.s32.totalorder %s39, 1
        %s638 = scalar_select %p637, %s39, 1
        %s639 = smul.addr %s638, 4
        %s640 = smul.addr %s639, 8
        %s641 = scalar_lea.vmem %s1, %s640
        %p642 = pneg %p94
        %p643 = pneg %p91
        %p644 = scmp.lt.s32.totalorder %s39, 1
        %s645 = scalar_select %p644, %s39, 1
        %s646 = smul.addr %s645, 4
        %s647 = smul.addr %s646, 8
        %s648 = scalar_lea.vmem %s2, %s647
        %p649 = pneg %p120
        %p650 = pneg %p117
        %p651 = pneg %p141
        %p652 = pneg %p138
        %p653 = pneg %p162
        %p654 = pneg %p159
        %p655 = pneg %p183
        %p656 = pneg %p180
        %p657 = pneg %p204
        %p658 = pneg %p201
        %p659 = pneg %p225
        %p660 = pneg %p222
        %p661 = pneg %p246
        %p662 = pneg %p243
        %p663 = pneg %p267
        %p664 = pneg %p264
        %p665 = pneg %p288
        %p666 = pneg %p285
        %p667 = pneg %p309
        %p668 = pneg %p306
        %p669 = pneg %p330
        %p670 = pneg %p327
        %p671 = pneg %p351
        %p672 = pneg %p348
        %p673 = pneg %p372
        %p674 = pneg %p369
        %p675 = pneg %p393
        %p676 = pneg %p390
        %p677 = pneg %p414
        %p678 = pneg %p411
        %p679 = pneg %p435
        %p680 = pneg %p432
        %p681 = pneg %p456
        %p682 = pneg %p453
        %p683 = pneg %p477
        %p684 = pneg %p474
        %p685 = pneg %p498
        %p686 = pneg %p495
        %p687 = pneg %p526
        %p688 = pneg %p523
        %s689 = sand.u32 %s513, 1
        %s690 = scalar_lea.sflag [#allocation5], %s689
        %s691 = sand.u32 %s513, 1
        %s692 = smul.addr %s691, 16
        %s693 = scalar_lea.vmem [#allocation4], %s692
        %p694 = scmp.lt.s32.totalorder %s39, 1
        %s695 = scalar_select %p694, %s39, 1
        %s696 = smul.addr %s695, 4
        %s697 = smul.addr %s696, 8
        %s698 = scalar_lea.vmem %s0, %s697
        %p699 = scmp.lt.s32.totalorder %s39, 1
        %s700 = scalar_select %p699, %s39, 1
        %s701 = smul.addr %s700, 4
        %s702 = smul.addr %s701, 8
        %s703 = scalar_lea.vmem %s1, %s702
        %p704 = scmp.lt.s32.totalorder %s39, 1
        %s705 = scalar_select %p704, %s39, 1
        %s706 = smul.addr %s705, 4
        %s707 = smul.addr %s706, 8
        %s708 = scalar_lea.vmem %s2, %s707
        %s709 = smul.u32 2, %s40
        %s711 = smul.u32 %s40, 16
        %p712 = scmp.eq.s32.totalorder %s40, 0
        // Predicated region
        $region105: #{tpu_custom_call.1} parent=103 // pred_check
          %p713 = pneg %p712
        $region106: #{tpu_custom_call.1} parent=103 // pred_check_branch
          %715 = sbr.rel (%p713) target = $region108
        $region107: #{tpu_custom_call.1} parent=103 // pred_region
          %v716 = vld [vmem:[%s698] sm:$0xff]
          %v717 = vld [vmem:[%s698 + $0x8] sm:$0xff]
          %v718 = vld [vmem:[%s698 + $0x10] sm:$0xff]
          %v719 = vld [vmem:[%s698 + $0x18] sm:$0xff]
          %v720 = vld [vmem:[%s3] sm:$0x1]
          %v721 = vld [vmem:[%s4] sm:$0x1]
          %vm722 = vcmask 261120
          %v723 = vsel %vm722, %v716, 0.0
          %724 = vadd.xlane.f32.xlu0 %v723
          %v725 = vpop.xlane.xlu0 %724
          %v726 = vsel %vm722, %v717, 0.0
          %727 = vadd.xlane.f32.xlu0 %v726
          %v728 = vpop.xlane.xlu0 %727
          %v729 = vsel %vm722, %v718, 0.0
          %730 = vadd.xlane.f32.xlu0 %v729
          %v731 = vpop.xlane.xlu0 %730
          %v732 = vsel %vm722, %v719, 0.0
          %733 = vadd.xlane.f32.xlu0 %v732
          %v734 = vpop.xlane.xlu0 %733
          %v735 = vrcp.pop 32.0
          %v736 = vmul.f32 %v725, %v735
          %v737 = vmul.f32 %v728, %v735
          %v738 = vmul.f32 %v731, %v735
          %v739 = vmul.f32 %v734, %v735
          %v740 = vsub.f32 %v716, %v736
          %v741 = vsub.f32 %v717, %v737
          %v742 = vsub.f32 %v718, %v738
          %v743 = vsub.f32 %v719, %v739
          %v744 = vmul.f32 %v740, %v740
          %v745 = vmul.f32 %v741, %v741
          %v746 = vmul.f32 %v742, %v742
          %v747 = vmul.f32 %v743, %v743
          %v748 = vsel %vm722, %v744, 0.0
          %749 = vadd.xlane.f32.xlu0 %v748
          %v750 = vpop.xlane.xlu0 %749
          %v751 = vsel %vm722, %v745, 0.0
          %752 = vadd.xlane.f32.xlu0 %v751
          %v753 = vpop.xlane.xlu0 %752
          %v754 = vsel %vm722, %v746, 0.0
          %755 = vadd.xlane.f32.xlu0 %v754
          %v756 = vpop.xlane.xlu0 %755
          %v757 = vsel %vm722, %v747, 0.0
          %758 = vadd.xlane.f32.xlu0 %v757
          %v759 = vpop.xlane.xlu0 %758
          %v760 = vmul.f32 %v750, %v735
          %v761 = vmul.f32 %v753, %v735
          %v762 = vmul.f32 %v756, %v735
          %v763 = vmul.f32 %v759, %v735
          %v764 = vadd.f32 %v760, 1e-05
          %v765 = vadd.f32 %v761, 1e-05
          %v766 = vadd.f32 %v762, 1e-05
          %v767 = vadd.f32 %v763, 1e-05
          %v768 = vrsqrt.pop %v764
          %v769 = vrsqrt.pop %v765
          %v770 = vrsqrt.pop %v766
          %v771 = vrsqrt.pop %v767
          %v772 = vmul.f32 %v740, %v768
          %v773 = vmul.f32 %v741, %v769
          %v774 = vmul.f32 %v742, %v770
          %v775 = vmul.f32 %v743, %v771
          %v777 = vlaneseq
          %v778 = vshrl.u32 %v777, 7
          %v779 = vsub.s32 0, %v778
          %v780 = vrot.slane %v720, %v779
          %v782 = vmul.f32 %v772, %v780
          %v783 = vmul.f32 %v773, %v780
          %v784 = vmul.f32 %v774, %v780
          %v785 = vmul.f32 %v775, %v780
          %v787 = vlaneseq
          %v788 = vshrl.u32 %v787, 7
          %v789 = vsub.s32 0, %v788
          %v790 = vrot.slane %v721, %v789
          %v792 = vadd.f32 %v782, %v790
          %v793 = vadd.f32 %v783, %v790
          %v794 = vadd.f32 %v784, %v790
          %v795 = vadd.f32 %v785, %v790
          %v796 = vld [vmem:[%s6] sm:$0xf]
          %v797 = vld [vmem:[%s6 + $0x4] sm:$0xf]
          %v798 = vld [vmem:[%s6 + $0x8] sm:$0xf]
          %v799 = vld [vmem:[%s6 + $0xc] sm:$0xf]
          %v800 = vpack.c.bf16 %v793, %v792
          %v801 = vpack.c.bf16 %v795, %v794
          %v802 = vld [vmem:[%s9] sm:$0x1]
          %v804 = vlaneseq
          %v805 = vshrl.u32 %v804, 7
          %v806 = vsub.s32 0, %v805
          %v807 = vrot.slane %v802, %v806
          %v813 = vunpack.c.l.b16 %v796
          %v814 = vunpack.c.l.b16 %v797
          %v815 = vunpack.c.l.b16 %v798
          %v816 = vunpack.c.l.b16 %v799
          %v817 = vpack.c.b16 %v814, %v813
          %v818 = vpack.c.b16 %v816, %v815
          %v822 = vsel %vm722, %v800, 0
          %v825 = vsel %vm722, %v801, 0
          %827 = vmatprep.subr.bf16.mxu0 0
          %828 = vmatpush1.bf16.msra.mxu0 %v817
          %829 = vmatprep.subr.bf16.mxu0 0
          %830 = vmatpush1.bf16.msra.mxu0 %v818
          %831 = vmatprep.subr.bf16.mxu0 0
          %832 = vmatpush1.bf16.msra.mxu0 0
          %833 = vmatprep.subr.bf16.mxu0 0
          %834 = vmatpush1.bf16.msra.mxu0 0
          %835 = vmatprep.subr.bf16.mxu0 0
          %836 = vmatpush1.bf16.msra.mxu0 0
          %837 = vmatprep.subr.bf16.mxu0 0
          %838 = vmatpush1.bf16.msra.mxu0 0
          %839 = vmatprep.subr.bf16.mxu0 0
          %840 = vmatpush1.bf16.msra.mxu0 0
          %841 = vmatprep.subr.bf16.mxu0 0
          %842 = vmatpush1.bf16.msra.mxu0 0
          %843 = vmatprep.subr.bf16.mxu0 0
          %844 = vmatpush1.bf16.msra.mxu0 0
          %845 = vmatprep.subr.bf16.mxu0 0
          %846 = vmatpush1.bf16.msra.mxu0 0
          %847 = vmatprep.subr.bf16.mxu0 0
          %848 = vmatpush1.bf16.msra.mxu0 0
          %849 = vmatprep.subr.bf16.mxu0 0
          %850 = vmatpush1.bf16.msra.mxu0 0
          %851 = vmatprep.subr.bf16.mxu0 0
          %852 = vmatpush1.bf16.msra.mxu0 0
          %853 = vmatprep.subr.bf16.mxu0 0
          %854 = vmatpush1.bf16.msra.mxu0 0
          %855 = vmatprep.subr.bf16.mxu0 0
          %856 = vmatpush1.bf16.msra.mxu0 0
          %857 = vmatprep.subr.bf16.mxu0 0
          %858 = vmatpush1.bf16.msra.mxu0 0
          %859 = vmatprep.mubr.bf16.mxu0 0
          %860 = vmatmul.mubr.bf16.gmra.mrb[0].mxu0 %v822
          %v861 = vpop.f32.mrb[0].mxu0
          %v862 = vadd.f32 %v807, %v861
          %v863 = vpop.f32.mrb[0].mxu0
          %v864 = vpop.f32.mrb[0].mxu0
          %v865 = vadd.f32 %v807, %v864
          %v866 = vpop.f32.mrb[0].mxu0
          %867 = vmatprep.mubr.bf16.mxu0 0
          %868 = vmatmul.mubr.bf16.gmra.mrb[0].mxu0 %v825
          %v869 = vpop.f32.mrb[0].mxu0
          %v870 = vadd.f32 %v807, %v869
          %v871 = vpop.f32.mrb[0].mxu0
          %v872 = vpop.f32.mrb[0].mxu0
          %v873 = vadd.f32 %v807, %v872
          %v874 = vpop.f32.mrb[0].mxu0
          %875 = vdwg.mxu0
          %v876 = vld [vmem:[%s7] sm:$0xf]
          %v877 = vld [vmem:[%s7 + $0x4] sm:$0xf]
          %v878 = vld [vmem:[%s7 + $0x8] sm:$0xf]
          %v879 = vld [vmem:[%s7 + $0xc] sm:$0xf]
          %v880 = vld [vmem:[%s10] sm:$0x1]
          %v882 = vlaneseq
          %v883 = vshrl.u32 %v882, 7
          %v884 = vsub.s32 0, %v883
          %v885 = vrot.slane %v880, %v884
          %v891 = vunpack.c.l.b16 %v876
          %v892 = vunpack.c.l.b16 %v877
          %v893 = vunpack.c.l.b16 %v878
          %v894 = vunpack.c.l.b16 %v879
          %v895 = vpack.c.b16 %v892, %v891
          %v896 = vpack.c.b16 %v894, %v893
          %899 = vmatprep.subr.bf16.mxu0 0
          %900 = vmatpush1.bf16.msra.mxu0 %v895
          %901 = vmatprep.subr.bf16.mxu0 0
          %902 = vmatpush1.bf16.msra.mxu0 %v896
          %903 = vmatprep.subr.bf16.mxu0 0
          %904 = vmatpush1.bf16.msra.mxu0 0
          %905 = vmatprep.subr.bf16.mxu0 0
          %906 = vmatpush1.bf16.msra.mxu0 0
          %907 = vmatprep.subr.bf16.mxu0 0
          %908 = vmatpush1.bf16.msra.mxu0 0
          %909 = vmatprep.subr.bf16.mxu0 0
          %910 = vmatpush1.bf16.msra.mxu0 0
          %911 = vmatprep.subr.bf16.mxu0 0
          %912 = vmatpush1.bf16.msra.mxu0 0
          %913 = vmatprep.subr.bf16.mxu0 0
          %914 = vmatpush1.bf16.msra.mxu0 0
          %915 = vmatprep.subr.bf16.mxu0 0
          %916 = vmatpush1.bf16.msra.mxu0 0
          %917 = vmatprep.subr.bf16.mxu0 0
          %918 = vmatpush1.bf16.msra.mxu0 0
          %919 = vmatprep.subr.bf16.mxu0 0
          %920 = vmatpush1.bf16.msra.mxu0 0
          %921 = vmatprep.subr.bf16.mxu0 0
          %922 = vmatpush1.bf16.msra.mxu0 0
          %923 = vmatprep.subr.bf16.mxu0 0
          %924 = vmatpush1.bf16.msra.mxu0 0
          %925 = vmatprep.subr.bf16.mxu0 0
          %926 = vmatpush1.bf16.msra.mxu0 0
          %927 = vmatprep.subr.bf16.mxu0 0
          %928 = vmatpush1.bf16.msra.mxu0 0
          %929 = vmatprep.subr.bf16.mxu0 0
          %930 = vmatpush1.bf16.msra.mxu0 0
          %931 = vmatprep.mubr.bf16.mxu0 0
          %932 = vmatmul.mubr.bf16.gmra.mrb[0].mxu0 %v822
          %v933 = vpop.f32.mrb[0].mxu0
          %v934 = vadd.f32 %v885, %v933
          %v935 = vpop.f32.mrb[0].mxu0
          %v936 = vpop.f32.mrb[0].mxu0
          %v937 = vadd.f32 %v885, %v936
          %v938 = vpop.f32.mrb[0].mxu0
          %939 = vmatprep.mubr.bf16.mxu0 0
          %940 = vmatmul.mubr.bf16.gmra.mrb[0].mxu0 %v825
          %v941 = vpop.f32.mrb[0].mxu0
          %v942 = vadd.f32 %v885, %v941
          %v943 = vpop.f32.mrb[0].mxu0
          %v944 = vpop.f32.mrb[0].mxu0
          %v945 = vadd.f32 %v885, %v944
          %v946 = vpop.f32.mrb[0].mxu0
          %947 = vdwg.mxu0
          %v948 = vld [vmem:[%s703] sm:$0xff]
          %v949 = vld [vmem:[%s703 + $0x8] sm:$0xff]
          %v950 = vld [vmem:[%s703 + $0x10] sm:$0xff]
          %v951 = vld [vmem:[%s703 + $0x18] sm:$0xff]
          %v952 = vld [vmem:[%s708] sm:$0xff]
          %v953 = vld [vmem:[%s708 + $0x8] sm:$0xff]
          %v954 = vld [vmem:[%s708 + $0x10] sm:$0xff]
          %v955 = vld [vmem:[%s708 + $0x18] sm:$0xff]
          %v956 = vmul.f32 %v862, %v948
          %v957 = vmul.f32 %v865, %v949
          %v958 = vmul.f32 %v870, %v950
          %v959 = vmul.f32 %v873, %v951
          %964 = vrot.lane.b32.xlu0 %v952, 8
          %v965 = vpop.permute.xlu0 %964
          %966 = vrot.lane.b32.xlu0 %v953, 8
          %v967 = vpop.permute.xlu0 %966
          %968 = vrot.lane.b32.xlu0 %v954, 8
          %v969 = vpop.permute.xlu0 %968
          %970 = vrot.lane.b32.xlu0 %v955, 8
          %v971 = vpop.permute.xlu0 %970
          %v976 = vmul.f32 %v862, %v965
          %v977 = vmul.f32 %v865, %v967
          %v978 = vmul.f32 %v870, %v969
          %v979 = vmul.f32 %v873, %v971
          %984 = vrot.lane.b32.xlu0 %v976, 120
          %v985 = vpop.permute.xlu0 %984
          %986 = vrot.lane.b32.xlu0 %v977, 120
          %v987 = vpop.permute.xlu0 %986
          %988 = vrot.lane.b32.xlu0 %v978, 120
          %v989 = vpop.permute.xlu0 %988
          %990 = vrot.lane.b32.xlu0 %v979, 120
          %v991 = vpop.permute.xlu0 %990
          %v996 = vsub.f32 %v956, %v985
          %v997 = vsub.f32 %v957, %v987
          %v998 = vsub.f32 %v958, %v989
          %v999 = vsub.f32 %v959, %v991
          %1004 = vrot.lane.b32.xlu0 %v948, 8
          %v1005 = vpop.permute.xlu0 %1004
          %1006 = vrot.lane.b32.xlu0 %v949, 8
          %v1007 = vpop.permute.xlu0 %1006
          %1008 = vrot.lane.b32.xlu0 %v950, 8
          %v1009 = vpop.permute.xlu0 %1008
          %1010 = vrot.lane.b32.xlu0 %v951, 8
          %v1011 = vpop.permute.xlu0 %1010
          %v1016 = vmul.f32 %v862, %v1005
          %v1017 = vmul.f32 %v865, %v1007
          %v1018 = vmul.f32 %v870, %v1009
          %v1019 = vmul.f32 %v873, %v1011
          %v1020 = vmul.f32 %v862, %v952
          %v1021 = vmul.f32 %v865, %v953
          %v1022 = vmul.f32 %v870, %v954
          %v1023 = vmul.f32 %v873, %v955
          %1028 = vrot.lane.b32.xlu0 %v1020, 8
          %v1029 = vpop.permute.xlu0 %1028
          %1030 = vrot.lane.b32.xlu0 %v1021, 8
          %v1031 = vpop.permute.xlu0 %1030
          %1032 = vrot.lane.b32.xlu0 %v1022, 8
          %v1033 = vpop.permute.xlu0 %1032
          %1034 = vrot.lane.b32.xlu0 %v1023, 8
          %v1035 = vpop.permute.xlu0 %1034
          %v1040 = vadd.f32 %v1016, %v1029
          %v1041 = vadd.f32 %v1017, %v1031
          %v1042 = vadd.f32 %v1018, %v1033
          %v1043 = vadd.f32 %v1019, %v1035
          %1044 = vrot.lane.b32.xlu0 %v948, 16
          %v1045 = vpop.permute.xlu0 %1044
          %1046 = vrot.lane.b32.xlu0 %v949, 16
          %v1047 = vpop.permute.xlu0 %1046
          %1048 = vrot.lane.b32.xlu0 %v950, 16
          %v1049 = vpop.permute.xlu0 %1048
          %1050 = vrot.lane.b32.xlu0 %v951, 16
          %v1051 = vpop.permute.xlu0 %1050
          %v1056 = vmul.f32 %v862, %v1045
          %v1057 = vmul.f32 %v865, %v1047
          %v1058 = vmul.f32 %v870, %v1049
          %v1059 = vmul.f32 %v873, %v1051
          %1060 = vrot.lane.b32.xlu0 %v952, 24
          %v1061 = vpop.permute.xlu0 %1060
          %1062 = vrot.lane.b32.xlu0 %v953, 24
          %v1063 = vpop.permute.xlu0 %1062
          %1064 = vrot.lane.b32.xlu0 %v954, 24
          %v1065 = vpop.permute.xlu0 %1064
          %1066 = vrot.lane.b32.xlu0 %v955, 24
          %v1067 = vpop.permute.xlu0 %1066
          %v1072 = vmul.f32 %v862, %v1061
          %v1073 = vmul.f32 %v865, %v1063
          %v1074 = vmul.f32 %v870, %v1065
          %v1075 = vmul.f32 %v873, %v1067
          %1080 = vrot.lane.b32.xlu0 %v1072, 120
          %v1081 = vpop.permute.xlu0 %1080
          %1082 = vrot.lane.b32.xlu0 %v1073, 120
          %v1083 = vpop.permute.xlu0 %1082
          %1084 = vrot.lane.b32.xlu0 %v1074, 120
          %v1085 = vpop.permute.xlu0 %1084
          %1086 = vrot.lane.b32.xlu0 %v1075, 120
          %v1087 = vpop.permute.xlu0 %1086
          %v1092 = vsub.f32 %v1056, %v1081
          %v1093 = vsub.f32 %v1057, %v1083
          %v1094 = vsub.f32 %v1058, %v1085
          %v1095 = vsub.f32 %v1059, %v1087
          %1096 = vrot.lane.b32.xlu0 %v948, 24
          %v1097 = vpop.permute.xlu0 %1096
          %1098 = vrot.lane.b32.xlu0 %v949, 24
          %v1099 = vpop.permute.xlu0 %1098
          %1100 = vrot.lane.b32.xlu0 %v950, 24
          %v1101 = vpop.permute.xlu0 %1100
          %1102 = vrot.lane.b32.xlu0 %v951, 24
          %v1103 = vpop.permute.xlu0 %1102
          %v1108 = vmul.f32 %v862, %v1097
          %v1109 = vmul.f32 %v865, %v1099
          %v1110 = vmul.f32 %v870, %v1101
          %v1111 = vmul.f32 %v873, %v1103
          %1112 = vrot.lane.b32.xlu0 %v952, 16
          %v1113 = vpop.permute.xlu0 %1112
          %1114 = vrot.lane.b32.xlu0 %v953, 16
          %v1115 = vpop.permute.xlu0 %1114
          %1116 = vrot.lane.b32.xlu0 %v954, 16
          %v1117 = vpop.permute.xlu0 %1116
          %1118 = vrot.lane.b32.xlu0 %v955, 16
          %v1119 = vpop.permute.xlu0 %1118
          %v1124 = vmul.f32 %v862, %v1113
          %v1125 = vmul.f32 %v865, %v1115
          %v1126 = vmul.f32 %v870, %v1117
          %v1127 = vmul.f32 %v873, %v1119
          %1132 = vrot.lane.b32.xlu0 %v1124, 8
          %v1133 = vpop.permute.xlu0 %1132
          %1134 = vrot.lane.b32.xlu0 %v1125, 8
          %v1135 = vpop.permute.xlu0 %1134
          %1136 = vrot.lane.b32.xlu0 %v1126, 8
          %v1137 = vpop.permute.xlu0 %1136
          %1138 = vrot.lane.b32.xlu0 %v1127, 8
          %v1139 = vpop.permute.xlu0 %1138
          %v1144 = vadd.f32 %v1108, %v1133
          %v1145 = vadd.f32 %v1109, %v1135
          %v1146 = vadd.f32 %v1110, %v1137
          %v1147 = vadd.f32 %v1111, %v1139
          %vm1148 = vcmask 64512
          %v1149 = vsel %vm1148, %v996, %v1040
          %v1150 = vsel %vm1148, %v997, %v1041
          %v1151 = vsel %vm1148, %v998, %v1042
          %v1152 = vsel %vm1148, %v999, %v1043
          %vm1153 = vcmask 130048
          %v1154 = vsel %vm1153, %v1149, %v1092
          %v1155 = vsel %vm1153, %v1150, %v1093
          %v1156 = vsel %vm1153, %v1151, %v1094
          %v1157 = vsel %vm1153, %v1152, %v1095
          %vm1158 = vcmask 195584
          %v1159 = vsel %vm1158, %v1154, %v1144
          %v1160 = vsel %vm1158, %v1155, %v1145
          %v1161 = vsel %vm1158, %v1156, %v1146
          %v1162 = vsel %vm1158, %v1157, %v1147
          %v1163 = vpack.c.bf16 %v1160, %v1159
          %v1164 = vpack.c.bf16 %v1162, %v1161
          %1165 = vst.msk [vmem:[#allocation2] sm:$0xff] %vm722, %v1163
          %1166 = vst.msk [vmem:[#allocation2 + $0x8] sm:$0xff] %vm722, %v1164
          %v1167 = vpack.c.bf16 %v937, %v934
          %v1168 = vpack.c.bf16 %v945, %v942
          %1169 = vst.msk [vmem:[#allocation3] sm:$0xff] %vm722, %v1167
          %1170 = vst.msk [vmem:[#allocation3 + $0x8] sm:$0xff] %vm722, %v1168
        $region108: #{tpu_custom_call.1} parent=103 // pred_fallthru
          _
        %s1171 = scalar_lea.vmem %s698, %s711
        %v1172 = vld [vmem:[%s1171] sm:$0xff]
        %v1173 = vld [vmem:[%s1171 + $0x8] sm:$0xff]
        %v1174 = vld [vmem:[%s3] sm:$0x1]
        %v1175 = vld [vmem:[%s4] sm:$0x1]
        %vm1176 = vcmask 261120
        %v1177 = vsel %vm1176, %v1172, 0.0
        %1178 = vadd.xlane.f32.xlu0 %v1177
        %v1179 = vpop.xlane.xlu0 %1178
        %v1180 = vsel %vm1176, %v1173, 0.0
        %1181 = vadd.xlane.f32.xlu0 %v1180
        %v1182 = vpop.xlane.xlu0 %1181
        %v1183 = vrcp.pop 32.0
        %v1184 = vmul.f32 %v1179, %v1183
        %v1185 = vmul.f32 %v1182, %v1183
        %v1186 = vsub.f32 %v1172, %v1184
        %v1187 = vsub.f32 %v1173, %v1185
        %v1188 = vmul.f32 %v1186, %v1186
        %v1189 = vmul.f32 %v1187, %v1187
        %v1190 = vsel %vm1176, %v1188, 0.0
        %1191 = vadd.xlane.f32.xlu0 %v1190
        %v1192 = vpop.xlane.xlu0 %1191
        %v1193 = vsel %vm1176, %v1189, 0.0
        %1194 = vadd.xlane.f32.xlu0 %v1193
        %v1195 = vpop.xlane.xlu0 %1194
        %v1196 = vmul.f32 %v1192, %v1183
        %v1197 = vmul.f32 %v1195, %v1183
        %v1198 = vadd.f32 %v1196, 1e-05
        %v1199 = vadd.f32 %v1197, 1e-05
        %v1200 = vrsqrt.pop %v1198
        %v1201 = vrsqrt.pop %v1199
        %v1202 = vmul.f32 %v1186, %v1200
        %v1203 = vmul.f32 %v1187, %v1201
        %v1205 = vlaneseq
        %v1206 = vshrl.u32 %v1205, 7
        %v1207 = vsub.s32 0, %v1206
        %v1208 = vrot.slane %v1174, %v1207
        %v1210 = vmul.f32 %v1202, %v1208
        %v1211 = vmul.f32 %v1203, %v1208
        %v1213 = vlaneseq
        %v1214 = vshrl.u32 %v1213, 7
        %v1215 = vsub.s32 0, %v1214
        %v1216 = vrot.slane %v1175, %v1215
        %v1218 = vadd.f32 %v1210, %v1216
        %v1219 = vadd.f32 %v1211, %v1216
        %v1220 = vld [vmem:[%s5] sm:$0xf]
        %v1221 = vld [vmem:[%s5 + $0x4] sm:$0xf]
        %v1222 = vld [vmem:[%s5 + $0x8] sm:$0xf]
        %v1223 = vld [vmem:[%s5 + $0xc] sm:$0xf]
        %v1224 = vpack.c.bf16 %v1219, %v1218
        %v1225 = vld [vmem:[%s8] sm:$0x1]
        %v1227 = vlaneseq
        %v1228 = vshrl.u32 %v1227, 7
        %v1229 = vsub.s32 0, %v1228
        %v1230 = vrot.slane %v1225, %v1229
        %v1236 = vunpack.c.l.b16 %v1220
        %v1237 = vunpack.c.l.b16 %v1221
        %v1238 = vunpack.c.l.b16 %v1222
        %v1239 = vunpack.c.l.b16 %v1223
        %v1240 = vpack.c.b16 %v1237, %v1236
        %v1241 = vpack.c.b16 %v1239, %v1238
        %v1245 = vsel %vm1176, %v1224, 0
        %1247 = vmatprep.subr.bf16.mxu0 0
        %1248 = vmatpush1.bf16.msra.mxu0 %v1240
        %1249 = vmatprep.subr.bf16.mxu0 0
        %1250 = vmatpush1.bf16.msra.mxu0 %v1241
        %1251 = vmatprep.subr.bf16.mxu0 0
        %1252 = vmatpush1.bf16.msra.mxu0 0
        %1253 = vmatprep.subr.bf16.mxu0 0
        %1254 = vmatpush1.bf16.msra.mxu0 0
        %1255 = vmatprep.subr.bf16.mxu0 0
        %1256 = vmatpush1.bf16.msra.mxu0 0
        %1257 = vmatprep.subr.bf16.mxu0 0
        %1258 = vmatpush1.bf16.msra.mxu0 0
        %1259 = vmatprep.subr.bf16.mxu0 0
        %1260 = vmatpush1.bf16.msra.mxu0 0
        %1261 = vmatprep.subr.bf16.mxu0 0
        %1262 = vmatpush1.bf16.msra.mxu0 0
        %1263 = vmatprep.subr.bf16.mxu0 0
        %1264 = vmatpush1.bf16.msra.mxu0 0
        %1265 = vmatprep.subr.bf16.mxu0 0
        %1266 = vmatpush1.bf16.msra.mxu0 0
        %1267 = vmatprep.subr.bf16.mxu0 0
        %1268 = vmatpush1.bf16.msra.mxu0 0
        %1269 = vmatprep.subr.bf16.mxu0 0
        %1270 = vmatpush1.bf16.msra.mxu0 0
        %1271 = vmatprep.subr.bf16.mxu0 0
        %1272 = vmatpush1.bf16.msra.mxu0 0
        %1273 = vmatprep.subr.bf16.mxu0 0
        %1274 = vmatpush1.bf16.msra.mxu0 0
        %1275 = vmatprep.subr.bf16.mxu0 0
        %1276 = vmatpush1.bf16.msra.mxu0 0
        %1277 = vmatprep.subr.bf16.mxu0 0
        %1278 = vmatpush1.bf16.msra.mxu0 0
        %1279 = vmatprep.mubr.bf16.mxu0 0
        %1280 = vmatmul.mubr.bf16.gmra.mrb[0].mxu0 %v1245
        %v1281 = vpop.f32.mrb[0].mxu0
        %v1282 = vadd.f32 %v1230, %v1281
        %v1283 = vpop.f32.mrb[0].mxu0
        %v1284 = vpop.f32.mrb[0].mxu0
        %v1285 = vadd.f32 %v1230, %v1284
        %v1286 = vpop.f32.mrb[0].mxu0
        %1287 = vdwg.mxu0
        %s1288 = scalar_lea.vmem %s703, %s711
        %v1289 = vld [vmem:[%s1288] sm:$0xff]
        %v1290 = vld [vmem:[%s1288 + $0x8] sm:$0xff]
        %s1291 = scalar_lea.vmem %s708, %s711
        %v1292 = vld [vmem:[%s1291] sm:$0xff]
        %v1293 = vld [vmem:[%s1291 + $0x8] sm:$0xff]
        %v1294 = vmul.f32 %v1282, %v1289
        %v1295 = vmul.f32 %v1285, %v1290
        %1298 = vrot.lane.b32.xlu0 %v1292, 8
        %v1299 = vpop.permute.xlu0 %1298
        %1300 = vrot.lane.b32.xlu0 %v1293, 8
        %v1301 = vpop.permute.xlu0 %1300
        %v1304 = vmul.f32 %v1282, %v1299
        %v1305 = vmul.f32 %v1285, %v1301
        %1308 = vrot.lane.b32.xlu0 %v1304, 120
        %v1309 = vpop.permute.xlu0 %1308
        %1310 = vrot.lane.b32.xlu0 %v1305, 120
        %v1311 = vpop.permute.xlu0 %1310
        %v1314 = vsub.f32 %v1294, %v1309
        %v1315 = vsub.f32 %v1295, %v1311
        %1318 = vrot.lane.b32.xlu0 %v1289, 8
        %v1319 = vpop.permute.xlu0 %1318
        %1320 = vrot.lane.b32.xlu0 %v1290, 8
        %v1321 = vpop.permute.xlu0 %1320
        %v1324 = vmul.f32 %v1282, %v1319
        %v1325 = vmul.f32 %v1285, %v1321
        %v1326 = vmul.f32 %v1282, %v1292
        %v1327 = vmul.f32 %v1285, %v1293
        %1330 = vrot.lane.b32.xlu0 %v1326, 8
        %v1331 = vpop.permute.xlu0 %1330
        %1332 = vrot.lane.b32.xlu0 %v1327, 8
        %v1333 = vpop.permute.xlu0 %1332
        %v1336 = vadd.f32 %v1324, %v1331
        %v1337 = vadd.f32 %v1325, %v1333
        %1338 = vrot.lane.b32.xlu0 %v1289, 16
        %v1339 = vpop.permute.xlu0 %1338
        %1340 = vrot.lane.b32.xlu0 %v1290, 16
        %v1341 = vpop.permute.xlu0 %1340
        %v1344 = vmul.f32 %v1282, %v1339
        %v1345 = vmul.f32 %v1285, %v1341
        %1346 = vrot.lane.b32.xlu0 %v1292, 24
        %v1347 = vpop.permute.xlu0 %1346
        %1348 = vrot.lane.b32.xlu0 %v1293, 24
        %v1349 = vpop.permute.xlu0 %1348
        %v1352 = vmul.f32 %v1282, %v1347
        %v1353 = vmul.f32 %v1285, %v1349
        %1356 = vrot.lane.b32.xlu0 %v1352, 120
        %v1357 = vpop.permute.xlu0 %1356
        %1358 = vrot.lane.b32.xlu0 %v1353, 120
        %v1359 = vpop.permute.xlu0 %1358
        %v1362 = vsub.f32 %v1344, %v1357
        %v1363 = vsub.f32 %v1345, %v1359
        %1364 = vrot.lane.b32.xlu0 %v1289, 24
        %v1365 = vpop.permute.xlu0 %1364
        %1366 = vrot.lane.b32.xlu0 %v1290, 24
        %v1367 = vpop.permute.xlu0 %1366
        %v1370 = vmul.f32 %v1282, %v1365
        %v1371 = vmul.f32 %v1285, %v1367
        %1372 = vrot.lane.b32.xlu0 %v1292, 16
        %v1373 = vpop.permute.xlu0 %1372
        %1374 = vrot.lane.b32.xlu0 %v1293, 16
        %v1375 = vpop.permute.xlu0 %1374
        %v1378 = vmul.f32 %v1282, %v1373
        %v1379 = vmul.f32 %v1285, %v1375
        %1382 = vrot.lane.b32.xlu0 %v1378, 8
        %v1383 = vpop.permute.xlu0 %1382
        %1384 = vrot.lane.b32.xlu0 %v1379, 8
        %v1385 = vpop.permute.xlu0 %1384
        %v1388 = vadd.f32 %v1370, %v1383
        %v1389 = vadd.f32 %v1371, %v1385
        %vm1390 = vcmask 64512
        %v1391 = vsel %vm1390, %v1314, %v1336
        %v1392 = vsel %vm1390, %v1315, %v1337
        %vm1393 = vcmask 130048
        %v1394 = vsel %vm1393, %v1391, %v1362
        %v1395 = vsel %vm1393, %v1392, %v1363
        %vm1396 = vcmask 195584
        %v1397 = vsel %vm1396, %v1394, %v1388
        %v1398 = vsel %vm1396, %v1395, %v1389
        %v1399 = vpack.c.bf16 %v1398, %v1397
        %v1400 = vlaneseq
        %v1401 = vshrl.u32 %v1400, 7
        %v1402 = vadd.s32 %v1401, 8
        %v1403 = vstv %s711
        %v1404 = vadd.s32 %v1401, %v1403
        %v1405 = vadd.s32 %v1402, %v1403
        %v1406 = vlaneseq
        %v1407 = vand.u32 %v1406, 127
        %vm1408 = vcmp.ge.s32.totalorder %v1404, %v1407
        %vm1409 = vcmp.ge.s32.totalorder %v1405, %v1407
        %v1410 = vld [vmem:[#allocation2] sm:$0xff]
        %v1411 = vld [vmem:[#allocation2 + $0x8] sm:$0xff]
        %v1412 = vld [vmem:[#allocation3] sm:$0xff]
        %v1413 = vld [vmem:[#allocation3 + $0x8] sm:$0xff]
        %v1415 = vsel %vm1393, %v1399, 0
        %v1418 = vsel %vm1393, %v1410, 0
        %v1421 = vsel %vm1393, %v1411, 0
        %1423 = vmatprep.subr.bf16.mxu0 0
        %1424 = vmatpush1.bf16.xpose.msra.mxu0 %v1418
        %1425 = vmatprep.subr.bf16.mxu0 0
        %1426 = vmatpush1.bf16.xpose.msra.mxu0 %v1421
        %1427 = vmatprep.subr.bf16.mxu0 0
        %1428 = vmatpush1.bf16.xpose.msra.mxu0 0
        %1429 = vmatprep.subr.bf16.mxu0 0
        %1430 = vmatpush1.bf16.xpose.msra.mxu0 0
        %1431 = vmatprep.subr.bf16.mxu0 0
        %1432 = vmatpush1.bf16.xpose.msra.mxu0 0
        %1433 = vmatprep.subr.bf16.mxu0 0
        %1434 = vmatpush1.bf16.xpose.msra.mxu0 0
        %1435 = vmatprep.subr.bf16.mxu0 0
        %1436 = vmatpush1.bf16.xpose.msra.mxu0 0
        %1437 = vmatprep.subr.bf16.mxu0 0
        %1438 = vmatpush1.bf16.xpose.msra.mxu0 0
        %1439 = vmatprep.subr.bf16.mxu0 0
        %1440 = vmatpush1.bf16.xpose.msra.mxu0 0
        %1441 = vmatprep.subr.bf16.mxu0 0
        %1442 = vmatpush1.bf16.xpose.msra.mxu0 0
        %1443 = vmatprep.subr.bf16.mxu0 0
        %1444 = vmatpush1.bf16.xpose.msra.mxu0 0
        %1445 = vmatprep.subr.bf16.mxu0 0
        %1446 = vmatpush1.bf16.xpose.msra.mxu0 0
        %1447 = vmatprep.subr.bf16.mxu0 0
        %1448 = vmatpush1.bf16.xpose.msra.mxu0 0
        %1449 = vmatprep.subr.bf16.mxu0 0
        %1450 = vmatpush1.bf16.xpose.msra.mxu0 0
        %1451 = vmatprep.subr.bf16.mxu0 0
        %1452 = vmatpush1.bf16.xpose.msra.mxu0 0
        %1453 = vmatprep.subr.bf16.mxu0 0
        %1454 = vmatpush1.bf16.xpose.msra.mxu0 0
        %1455 = vmatprep.mubr.bf16.mxu0 0
        %1456 = vmatmul.mubr.bf16.gmra.mrb[0].mxu0 %v1415
        %v1457 = vpop.f32.mrb[0].mxu0
        %v1458 = vadd.f32 0.0, %v1457
        %v1459 = vpop.f32.mrb[0].mxu0
        %v1460 = vpop.f32.mrb[0].mxu0
        %v1461 = vadd.f32 0.0, %v1460
        %v1462 = vpop.f32.mrb[0].mxu0
        %1463 = vdwg.mxu0
        %v1464 = vsel %vm1408, %v1458, -1e+30
        %v1465 = vsel %vm1409, %v1461, -1e+30
        %v1466 = vsel %vm1176, %v1464, -inf
        %1467 = vmax.xlane.f32.xlu0 %v1466
        %v1468 = vpop.xlane.xlu0 %1467
        %v1469 = vsel %vm1176, %v1465, -inf
        %1470 = vmax.xlane.f32.xlu0 %v1469
        %v1471 = vpop.xlane.xlu0 %1470
        %v1472 = vsub.f32 %v1464, %v1468
        %v1473 = vsub.f32 %v1465, %v1471
        %v1474 = vmul.f32 %v1472, 1.442695
        %v1475 = vpow.pop %v1474
        %v1476 = vmul.f32 %v1473, 1.442695
        %v1477 = vpow.pop %v1476
        %v1478 = vsel %vm1176, %v1475, 0.0
        %1479 = vadd.xlane.f32.xlu0 %v1478
        %v1480 = vpop.xlane.xlu0 %1479
        %v1481 = vsel %vm1176, %v1477, 0.0
        %1482 = vadd.xlane.f32.xlu0 %v1481
        %v1483 = vpop.xlane.xlu0 %1482
        %v1484 = vrcp.pop %v1480
        %v1485 = vrcp.pop %v1483
        %v1486 = vmul.f32 %v1475, %v1484
        %v1487 = vmul.f32 %v1477, %v1485
        %v1488 = vpack.c.bf16 %v1487, %v1486
        %v1490 = vsel %vm1176, %v1488, 0
        %1492 = vmatprep.subr.bf16.mxu0 0
        %1493 = vmatpush1.bf16.msra.mxu0 %v1412
        %1494 = vmatprep.subr.bf16.mxu0 0
        %1495 = vmatpush1.bf16.msra.mxu0 %v1413
        %1496 = vmatprep.subr.bf16.mxu0 0
        %1497 = vmatpush1.bf16.msra.mxu0 0
        %1498 = vmatprep.subr.bf16.mxu0 0
        %1499 = vmatpush1.bf16.msra.mxu0 0
        %1500 = vmatprep.subr.bf16.mxu0 0
        %1501 = vmatpush1.bf16.msra.mxu0 0
        %1502 = vmatprep.subr.bf16.mxu0 0
        %1503 = vmatpush1.bf16.msra.mxu0 0
        %1504 = vmatprep.subr.bf16.mxu0 0
        %1505 = vmatpush1.bf16.msra.mxu0 0
        %1506 = vmatprep.subr.bf16.mxu0 0
        %1507 = vmatpush1.bf16.msra.mxu0 0
        %1508 = vmatprep.subr.bf16.mxu0 0
        %1509 = vmatpush1.bf16.msra.mxu0 0
        %1510 = vmatprep.subr.bf16.mxu0 0
        %1511 = vmatpush1.bf16.msra.mxu0 0
        %1512 = vmatprep.subr.bf16.mxu0 0
        %1513 = vmatpush1.bf16.msra.mxu0 0
        %1514 = vmatprep.subr.bf16.mxu0 0
        %1515 = vmatpush1.bf16.msra.mxu0 0
        %1516 = vmatprep.subr.bf16.mxu0 0
        %1517 = vmatpush1.bf16.msra.mxu0 0
        %1518 = vmatprep.subr.bf16.mxu0 0
        %1519 = vmatpush1.bf16.msra.mxu0 0
        %1520 = vmatprep.subr.bf16.mxu0 0
        %1521 = vmatpush1.bf16.msra.mxu0 0
        %1522 = vmatprep.subr.bf16.mxu0 0
        %1523 = vmatpush1.bf16.msra.mxu0 0
        %1524 = vmatprep.mubr.bf16.mxu0 0
        %1525 = vmatmul.mubr.bf16.gmra.mrb[0].mxu0 %v1490
        %v1526 = vpop.f32.mrb[0].mxu0
        %v1527 = vadd.f32 0.0, %v1526
        %v1528 = vpop.f32.mrb[0].mxu0
        %v1529 = vpop.f32.mrb[0].mxu0
        %v1530 = vadd.f32 0.0, %v1529
        %v1531 = vpop.f32.mrb[0].mxu0
        %1532 = vdwg.mxu0
        %1534 = vrot.lane.b32.xlu0 %v1399, 112
        %v1535 = vpop.permute.xlu0 %1534
        %1538 = vrot.lane.b32.xlu0 %v1410, 112
        %v1539 = vpop.permute.xlu0 %1538
        %1540 = vrot.lane.b32.xlu0 %v1411, 112
        %v1541 = vpop.permute.xlu0 %1540
        %v1543 = vsel %vm1393, %v1535, 0
        %v1546 = vsel %vm1393, %v1539, 0
        %v1549 = vsel %vm1393, %v1541, 0
        %1551 = vmatprep.subr.bf16.mxu0 0
        %1552 = vmatpush1.bf16.xpose.msra.mxu0 %v1546
        %1553 = vmatprep.subr.bf16.mxu0 0
        %1554 = vmatpush1.bf16.xpose.msra.mxu0 %v1549
        %1555 = vmatprep.subr.bf16.mxu0 0
        %1556 = vmatpush1.bf16.xpose.msra.mxu0 0
        %1557 = vmatprep.subr.bf16.mxu0 0
        %1558 = vmatpush1.bf16.xpose.msra.mxu0 0
        %1559 = vmatprep.subr.bf16.mxu0 0
        %1560 = vmatpush1.bf16.xpose.msra.mxu0 0
        %1561 = vmatprep.subr.bf16.mxu0 0
        %1562 = vmatpush1.bf16.xpose.msra.mxu0 0
        %1563 = vmatprep.subr.bf16.mxu0 0
        %1564 = vmatpush1.bf16.xpose.msra.mxu0 0
        %1565 = vmatprep.subr.bf16.mxu0 0
        %1566 = vmatpush1.bf16.xpose.msra.mxu0 0
        %1567 = vmatprep.subr.bf16.mxu0 0
        %1568 = vmatpush1.bf16.xpose.msra.mxu0 0
        %1569 = vmatprep.subr.bf16.mxu0 0
        %1570 = vmatpush1.bf16.xpose.msra.mxu0 0
        %1571 = vmatprep.subr.bf16.mxu0 0
        %1572 = vmatpush1.bf16.xpose.msra.mxu0 0
        %1573 = vmatprep.subr.bf16.mxu0 0
        %1574 = vmatpush1.bf16.xpose.msra.mxu0 0
        %1575 = vmatprep.subr.bf16.mxu0 0
        %1576 = vmatpush1.bf16.xpose.msra.mxu0 0
        %1577 = vmatprep.subr.bf16.mxu0 0
        %1578 = vmatpush1.bf16.xpose.msra.mxu0 0
        %1579 = vmatprep.subr.bf16.mxu0 0
        %1580 = vmatpush1.bf16.xpose.msra.mxu0 0
        %1581 = vmatprep.subr.bf16.mxu0 0
        %1582 = vmatpush1.bf16.xpose.msra.mxu0 0
        %1583 = vmatprep.mubr.bf16.mxu0 0
        %1584 = vmatmul.mubr.bf16.gmra.mrb[0].mxu0 %v1543
        %v1585 = vpop.f32.mrb[0].mxu0
        %v1586 = vadd.f32 0.0, %v1585
        %v1587 = vpop.f32.mrb[0].mxu0
        %v1588 = vpop.f32.mrb[0].mxu0
        %v1589 = vadd.f32 0.0, %v1588
        %v1590 = vpop.f32.mrb[0].mxu0
        %1591 = vdwg.mxu0
        %v1592 = vsel %vm1408, %v1586, -1e+30
        %v1593 = vsel %vm1409, %v1589, -1e+30
        %v1594 = vsel %vm1176, %v1592, -inf
        %1595 = vmax.xlane.f32.xlu0 %v1594
        %v1596 = vpop.xlane.xlu0 %1595
        %v1597 = vsel %vm1176, %v1593, -inf
        %1598 = vmax.xlane.f32.xlu0 %v1597
        %v1599 = vpop.xlane.xlu0 %1598
        %v1600 = vsub.f32 %v1592, %v1596
        %v1601 = vsub.f32 %v1593, %v1599
        %v1602 = vmul.f32 %v1600, 1.442695
        %v1603 = vpow.pop %v1602
        %v1604 = vmul.f32 %v1601, 1.442695
        %v1605 = vpow.pop %v1604
        %v1606 = vsel %vm1176, %v1603, 0.0
        %1607 = vadd.xlane.f32.xlu0 %v1606
        %v1608 = vpop.xlane.xlu0 %1607
        %v1609 = vsel %vm1176, %v1605, 0.0
        %1610 = vadd.xlane.f32.xlu0 %v1609
        %v1611 = vpop.xlane.xlu0 %1610
        %v1612 = vrcp.pop %v1608
        %v1613 = vrcp.pop %v1611
        %v1614 = vmul.f32 %v1603, %v1612
        %v1615 = vmul.f32 %v1605, %v1613
        %v1616 = vpack.c.bf16 %v1615, %v1614
        %1619 = vrot.lane.b32.xlu0 %v1412, 112
        %v1620 = vpop.permute.xlu0 %1619
        %1621 = vrot.lane.b32.xlu0 %v1413, 112
        %v1622 = vpop.permute.xlu0 %1621
        %v1626 = vsel %vm1176, %v1616, 0
        %1628 = vmatprep.subr.bf16.mxu0 0
        %1629 = vmatpush1.bf16.msra.mxu0 %v1620
        %1630 = vmatprep.subr.bf16.mxu0 0
        %1631 = vmatpush1.bf16.msra.mxu0 %v1622
        %1632 = vmatprep.subr.bf16.mxu0 0
        %1633 = vmatpush1.bf16.msra.mxu0 0
        %1634 = vmatprep.subr.bf16.mxu0 0
        %1635 = vmatpush1.bf16.msra.mxu0 0
        %1636 = vmatprep.subr.bf16.mxu0 0
        %1637 = vmatpush1.bf16.msra.mxu0 0
        %1638 = vmatprep.subr.bf16.mxu0 0
        %1639 = vmatpush1.bf16.msra.mxu0 0
        %1640 = vmatprep.subr.bf16.mxu0 0
        %1641 = vmatpush1.bf16.msra.mxu0 0
        %1642 = vmatprep.subr.bf16.mxu0 0
        %1643 = vmatpush1.bf16.msra.mxu0 0
        %1644 = vmatprep.subr.bf16.mxu0 0
        %1645 = vmatpush1.bf16.msra.mxu0 0
        %1646 = vmatprep.subr.bf16.mxu0 0
        %1647 = vmatpush1.bf16.msra.mxu0 0
        %1648 = vmatprep.subr.bf16.mxu0 0
        %1649 = vmatpush1.bf16.msra.mxu0 0
        %1650 = vmatprep.subr.bf16.mxu0 0
        %1651 = vmatpush1.bf16.msra.mxu0 0
        %1652 = vmatprep.subr.bf16.mxu0 0
        %1653 = vmatpush1.bf16.msra.mxu0 0
        %1654 = vmatprep.subr.bf16.mxu0 0
        %1655 = vmatpush1.bf16.msra.mxu0 0
        %1656 = vmatprep.subr.bf16.mxu0 0
        %1657 = vmatpush1.bf16.msra.mxu0 0
        %1658 = vmatprep.subr.bf16.mxu0 0
        %1659 = vmatpush1.bf16.msra.mxu0 0
        %1660 = vmatprep.mubr.bf16.mxu0 0
        %1661 = vmatmul.mubr.bf16.gmra.mrb[0].mxu0 %v1626
        %v1662 = vpop.f32.mrb[0].mxu0
        %v1663 = vadd.f32 0.0, %v1662
        %v1664 = vpop.f32.mrb[0].mxu0
        %v1665 = vpop.f32.mrb[0].mxu0
        %v1666 = vadd.f32 0.0, %v1665
        %v1667 = vpop.f32.mrb[0].mxu0
        %1668 = vdwg.mxu0
        %1671 = vrot.lane.b32.xlu0 %v1663, 16
        %v1672 = vpop.permute.xlu0 %1671
        %1673 = vrot.lane.b32.xlu0 %v1666, 16
        %v1674 = vpop.permute.xlu0 %1673
        %v1677 = vsel %vm1393, %v1527, %v1672
        %v1678 = vsel %vm1393, %v1530, %v1674
        %v1679 = vld [vmem:[%s11] sm:$0xf]
        %v1680 = vld [vmem:[%s11 + $0x4] sm:$0xf]
        %v1681 = vld [vmem:[%s11 + $0x8] sm:$0xf]
        %v1682 = vld [vmem:[%s11 + $0xc] sm:$0xf]
        %v1683 = vpack.c.bf16 %v1678, %v1677
        %v1688 = vunpack.c.l.b16 %v1679
        %v1689 = vunpack.c.l.b16 %v1680
        %v1690 = vunpack.c.l.b16 %v1681
        %v1691 = vunpack.c.l.b16 %v1682
        %v1692 = vpack.c.b16 %v1689, %v1688
        %v1693 = vpack.c.b16 %v1691, %v1690
        %v1697 = vsel %vm1176, %v1683, 0
        %1699 = vmatprep.subr.bf16.mxu0 0
        %1700 = vmatpush1.bf16.msra.mxu0 %v1692
        %1701 = vmatprep.subr.bf16.mxu0 0
        %1702 = vmatpush1.bf16.msra.mxu0 %v1693
        %1703 = vmatprep.subr.bf16.mxu0 0
        %1704 = vmatpush1.bf16.msra.mxu0 0
        %1705 = vmatprep.subr.bf16.mxu0 0
        %1706 = vmatpush1.bf16.msra.mxu0 0
        %1707 = vmatprep.subr.bf16.mxu0 0
        %1708 = vmatpush1.bf16.msra.mxu0 0
        %1709 = vmatprep.subr.bf16.mxu0 0
        %1710 = vmatpush1.bf16.msra.mxu0 0
        %1711 = vmatprep.subr.bf16.mxu0 0
        %1712 = vmatpush1.bf16.msra.mxu0 0
        %1713 = vmatprep.subr.bf16.mxu0 0
        %1714 = vmatpush1.bf16.msra.mxu0 0
        %1715 = vmatprep.subr.bf16.mxu0 0
        %1716 = vmatpush1.bf16.msra.mxu0 0
        %1717 = vmatprep.subr.bf16.mxu0 0
        %1718 = vmatpush1.bf16.msra.mxu0 0
        %1719 = vmatprep.subr.bf16.mxu0 0
        %1720 = vmatpush1.bf16.msra.mxu0 0
        %1721 = vmatprep.subr.bf16.mxu0 0
        %1722 = vmatpush1.bf16.msra.mxu0 0
        %1723 = vmatprep.subr.bf16.mxu0 0
        %1724 = vmatpush1.bf16.msra.mxu0 0
        %1725 = vmatprep.subr.bf16.mxu0 0
        %1726 = vmatpush1.bf16.msra.mxu0 0
        %1727 = vmatprep.subr.bf16.mxu0 0
        %1728 = vmatpush1.bf16.msra.mxu0 0
        %1729 = vmatprep.subr.bf16.mxu0 0
        %1730 = vmatpush1.bf16.msra.mxu0 0
        %1731 = vmatprep.mubr.bf16.mxu0 0
        %1732 = vmatmul.mubr.bf16.gmra.mrb[0].mxu0 %v1697
        %v1733 = vpop.f32.mrb[0].mxu0
        %v1734 = vadd.f32 0.0, %v1733
        %v1735 = vpop.f32.mrb[0].mxu0
        %v1736 = vpop.f32.mrb[0].mxu0
        %v1737 = vadd.f32 0.0, %v1736
        %v1738 = vpop.f32.mrb[0].mxu0
        %1739 = vdwg.mxu0
        %v1740 = vadd.f32 %v1172, %v1734
        %v1741 = vadd.f32 %v1173, %v1737
        %v1742 = vld [vmem:[%s12] sm:$0x1]
        %v1744 = vlaneseq
        %v1745 = vshrl.u32 %v1744, 7
        %v1746 = vsub.s32 0, %v1745
        %v1747 = vrot.slane %v1742, %v1746
        %v1749 = vadd.f32 %v1740, %v1747
        %v1750 = vadd.f32 %v1741, %v1747
        %v1751 = vld [vmem:[%s13] sm:$0x1]
        %v1752 = vld [vmem:[%s14] sm:$0x1]
        %v1753 = vsel %vm1176, %v1749, 0.0
        %1754 = vadd.xlane.f32.xlu0 %v1753
        %v1755 = vpop.xlane.xlu0 %1754
        %v1756 = vsel %vm1176, %v1750, 0.0
        %1757 = vadd.xlane.f32.xlu0 %v1756
        %v1758 = vpop.xlane.xlu0 %1757
        %v1759 = vmul.f32 %v1755, %v1183
        %v1760 = vmul.f32 %v1758, %v1183
        %v1761 = vsub.f32 %v1749, %v1759
        %v1762 = vsub.f32 %v1750, %v1760
        %v1763 = vmul.f32 %v1761, %v1761
        %v1764 = vmul.f32 %v1762, %v1762
        %v1765 = vsel %vm1176, %v1763, 0.0
        %1766 = vadd.xlane.f32.xlu0 %v1765
        %v1767 = vpop.xlane.xlu0 %1766
        %v1768 = vsel %vm1176, %v1764, 0.0
        %1769 = vadd.xlane.f32.xlu0 %v1768
        %v1770 = vpop.xlane.xlu0 %1769
        %v1771 = vmul.f32 %v1767, %v1183
        %v1772 = vmul.f32 %v1770, %v1183
        %v1773 = vadd.f32 %v1771, 1e-05
        %v1774 = vadd.f32 %v1772, 1e-05
        %v1775 = vrsqrt.pop %v1773
        %v1776 = vrsqrt.pop %v1774
        %v1777 = vmul.f32 %v1761, %v1775
        %v1778 = vmul.f32 %v1762, %v1776
        %v1780 = vlaneseq
        %v1781 = vshrl.u32 %v1780, 7
        %v1782 = vsub.s32 0, %v1781
        %v1783 = vrot.slane %v1751, %v1782
        %v1785 = vmul.f32 %v1777, %v1783
        %v1786 = vmul.f32 %v1778, %v1783
        %v1788 = vlaneseq
        %v1789 = vshrl.u32 %v1788, 7
        %v1790 = vsub.s32 0, %v1789
        %v1791 = vrot.slane %v1752, %v1790
        %v1793 = vadd.f32 %v1785, %v1791
        %v1794 = vadd.f32 %v1786, %v1791
        %v1795 = vld [vmem:[%s15] sm:$0xf]
        %v1796 = vld [vmem:[%s15 + $0x4] sm:$0xf]
        %v1797 = vld [vmem:[%s15 + $0x8] sm:$0xf]
        %v1798 = vld [vmem:[%s15 + $0xc] sm:$0xf]
        %v1799 = vpack.c.bf16 %v1794, %v1793
        %v1800 = vld [vmem:[%s17] sm:$0x1]
        %v1802 = vlaneseq
        %v1803 = vshrl.u32 %v1802, 7
        %v1804 = vsub.s32 0, %v1803
        %v1805 = vrot.slane %v1800, %v1804
        %v1811 = vunpack.c.l.b16 %v1795
        %v1812 = vunpack.c.l.b16 %v1796
        %v1813 = vunpack.c.l.b16 %v1797
        %v1814 = vunpack.c.l.b16 %v1798
        %v1815 = vpack.c.b16 %v1812, %v1811
        %v1816 = vpack.c.b16 %v1814, %v1813
        %v1820 = vsel %vm1176, %v1799, 0
        %1822 = vmatprep.subr.bf16.mxu0 0
        %1823 = vmatpush1.bf16.msra.mxu0 %v1815
        %1824 = vmatprep.subr.bf16.mxu0 0
        %1825 = vmatpush1.bf16.msra.mxu0 %v1816
        %1826 = vmatprep.subr.bf16.mxu0 0
        %1827 = vmatpush1.bf16.msra.mxu0 0
        %1828 = vmatprep.subr.bf16.mxu0 0
        %1829 = vmatpush1.bf16.msra.mxu0 0
        %1830 = vmatprep.subr.bf16.mxu0 0
        %1831 = vmatpush1.bf16.msra.mxu0 0
        %1832 = vmatprep.subr.bf16.mxu0 0
        %1833 = vmatpush1.bf16.msra.mxu0 0
        %1834 = vmatprep.subr.bf16.mxu0 0
        %1835 = vmatpush1.bf16.msra.mxu0 0
        %1836 = vmatprep.subr.bf16.mxu0 0
        %1837 = vmatpush1.bf16.msra.mxu0 0
        %1838 = vmatprep.subr.bf16.mxu0 0
        %1839 = vmatpush1.bf16.msra.mxu0 0
        %1840 = vmatprep.subr.bf16.mxu0 0
        %1841 = vmatpush1.bf16.msra.mxu0 0
        %1842 = vmatprep.subr.bf16.mxu0 0
        %1843 = vmatpush1.bf16.msra.mxu0 0
        %1844 = vmatprep.subr.bf16.mxu0 0
        %1845 = vmatpush1.bf16.msra.mxu0 0
        %1846 = vmatprep.subr.bf16.mxu0 0
        %1847 = vmatpush1.bf16.msra.mxu0 0
        %1848 = vmatprep.subr.bf16.mxu0 0
        %1849 = vmatpush1.bf16.msra.mxu0 0
        %1850 = vmatprep.subr.bf16.mxu0 0
        %1851 = vmatpush1.bf16.msra.mxu0 0
        %1852 = vmatprep.subr.bf16.mxu0 0
        %1853 = vmatpush1.bf16.msra.mxu0 0
        %1854 = vmatprep.mubr.bf16.mxu0 0
        %1855 = vmatmul.mubr.bf16.gmra.mrb[0].mxu0 %v1820
        %v1856 = vpop.f32.mrb[0].mxu0
        %v1857 = vadd.f32 %v1805, %v1856
        %v1858 = vpop.f32.mrb[0].mxu0
        %v1859 = vpop.f32.mrb[0].mxu0
        %v1860 = vadd.f32 %v1805, %v1859
        %v1861 = vpop.f32.mrb[0].mxu0
        %1862 = vdwg.mxu0
        %v1863 = vld [vmem:[%s16] sm:$0xf]
        %v1864 = vld [vmem:[%s16 + $0x4] sm:$0xf]
        %v1865 = vld [vmem:[%s16 + $0x8] sm:$0xf]
        %v1866 = vld [vmem:[%s16 + $0xc] sm:$0xf]
        %v1867 = vld [vmem:[%s18] sm:$0x1]
        %v1869 = vlaneseq
        %v1870 = vshrl.u32 %v1869, 7
        %v1871 = vsub.s32 0, %v1870
        %v1872 = vrot.slane %v1867, %v1871
        %v1878 = vunpack.c.l.b16 %v1863
        %v1879 = vunpack.c.l.b16 %v1864
        %v1880 = vunpack.c.l.b16 %v1865
        %v1881 = vunpack.c.l.b16 %v1866
        %v1882 = vpack.c.b16 %v1879, %v1878
        %v1883 = vpack.c.b16 %v1881, %v1880
        %1886 = vmatprep.subr.bf16.mxu0 0
        %1887 = vmatpush1.bf16.msra.mxu0 %v1882
        %1888 = vmatprep.subr.bf16.mxu0 0
        %1889 = vmatpush1.bf16.msra.mxu0 %v1883
        %1890 = vmatprep.subr.bf16.mxu0 0
        %1891 = vmatpush1.bf16.msra.mxu0 0
        %1892 = vmatprep.subr.bf16.mxu0 0
        %1893 = vmatpush1.bf16.msra.mxu0 0
        %1894 = vmatprep.subr.bf16.mxu0 0
        %1895 = vmatpush1.bf16.msra.mxu0 0
        %1896 = vmatprep.subr.bf16.mxu0 0
        %1897 = vmatpush1.bf16.msra.mxu0 0
        %1898 = vmatprep.subr.bf16.mxu0 0
        %1899 = vmatpush1.bf16.msra.mxu0 0
        %1900 = vmatprep.subr.bf16.mxu0 0
        %1901 = vmatpush1.bf16.msra.mxu0 0
        %1902 = vmatprep.subr.bf16.mxu0 0
        %1903 = vmatpush1.bf16.msra.mxu0 0
        %1904 = vmatprep.subr.bf16.mxu0 0
        %1905 = vmatpush1.bf16.msra.mxu0 0
        %1906 = vmatprep.subr.bf16.mxu0 0
        %1907 = vmatpush1.bf16.msra.mxu0 0
        %1908 = vmatprep.subr.bf16.mxu0 0
        %1909 = vmatpush1.bf16.msra.mxu0 0
        %1910 = vmatprep.subr.bf16.mxu0 0
        %1911 = vmatpush1.bf16.msra.mxu0 0
        %1912 = vmatprep.subr.bf16.mxu0 0
        %1913 = vmatpush1.bf16.msra.mxu0 0
        %1914 = vmatprep.subr.bf16.mxu0 0
        %1915 = vmatpush1.bf16.msra.mxu0 0
        %1916 = vmatprep.subr.bf16.mxu0 0
        %1917 = vmatpush1.bf16.msra.mxu0 0
        %1918 = vmatprep.mubr.bf16.mxu0 0
        %1919 = vmatmul.mubr.bf16.gmra.mrb[0].mxu0 %v1820
        %v1920 = vpop.f32.mrb[0].mxu0
        %v1921 = vadd.f32 %v1872, %v1920
        %v1922 = vpop.f32.mrb[0].mxu0
        %v1923 = vpop.f32.mrb[0].mxu0
        %v1924 = vadd.f32 %v1872, %v1923
        %v1925 = vpop.f32.mrb[0].mxu0
        %1926 = vdwg.mxu0
        %v1927 = vxor.u32 %v1921, 2147483648
        %v1928 = vxor.u32 %v1924, 2147483648
        %v1929 = vmul.f32 %v1927, 1.442695
        %v1930 = vpow.pop %v1929
        %v1931 = vmul.f32 %v1928, 1.442695
        %v1932 = vpow.pop %v1931
        %v1933 = vadd.f32 %v1930, 1.0
        %v1934 = vadd.f32 %v1932, 1.0
        %v1935 = vrcp.pop %v1933
        %v1936 = vmul.f32 1.0, %v1935
        %v1937 = vrcp.pop %v1934
        %v1938 = vmul.f32 1.0, %v1937
        %v1939 = vmul.f32 %v1921, %v1936
        %v1940 = vmul.f32 %v1924, %v1938
        %v1941 = vmul.f32 %v1857, %v1939
        %v1942 = vmul.f32 %v1860, %v1940
        %v1943 = vld [vmem:[%s19] sm:$0xf]
        %v1944 = vld [vmem:[%s19 + $0x4] sm:$0xf]
        %v1945 = vld [vmem:[%s19 + $0x8] sm:$0xf]
        %v1946 = vld [vmem:[%s19 + $0xc] sm:$0xf]
        %v1947 = vld [vmem:[%s19 + $0x10] sm:$0xf]
        %v1948 = vld [vmem:[%s19 + $0x14] sm:$0xf]
        %v1949 = vld [vmem:[%s19 + $0x18] sm:$0xf]
        %v1950 = vld [vmem:[%s19 + $0x1c] sm:$0xf]
        %v1951 = vpack.c.bf16 %v1942, %v1941
        %v1960 = vunpack.c.l.b16 %v1943
        %v1961 = vunpack.c.l.b16 %v1944
        %v1962 = vunpack.c.l.b16 %v1945
        %v1963 = vunpack.c.l.b16 %v1946
        %v1964 = vunpack.c.l.b16 %v1947
        %v1965 = vunpack.c.l.b16 %v1948
        %v1966 = vunpack.c.l.b16 %v1949
        %v1967 = vunpack.c.l.b16 %v1950
        %v1968 = vpack.c.b16 %v1961, %v1960
        %v1969 = vpack.c.b16 %v1963, %v1962
        %v1970 = vpack.c.b16 %v1965, %v1964
        %v1971 = vpack.c.b16 %v1967, %v1966
        %vm1976 = vcmask 523264
        %v1978 = vsel %vm1976, %v1951, 0
        %1980 = vmatprep.subr.bf16.mxu0 0
        %1981 = vmatpush1.bf16.msra.mxu0 %v1968
        %1982 = vmatprep.subr.bf16.mxu0 0
        %1983 = vmatpush1.bf16.msra.mxu0 %v1969
        %1984 = vmatprep.subr.bf16.mxu0 0
        %1985 = vmatpush1.bf16.msra.mxu0 %v1970
        %1986 = vmatprep.subr.bf16.mxu0 0
        %1987 = vmatpush1.bf16.msra.mxu0 %v1971
        %1988 = vmatprep.subr.bf16.mxu0 0
        %1989 = vmatpush1.bf16.msra.mxu0 0
        %1990 = vmatprep.subr.bf16.mxu0 0
        %1991 = vmatpush1.bf16.msra.mxu0 0
        %1992 = vmatprep.subr.bf16.mxu0 0
        %1993 = vmatpush1.bf16.msra.mxu0 0
        %1994 = vmatprep.subr.bf16.mxu0 0
        %1995 = vmatpush1.bf16.msra.mxu0 0
        %1996 = vmatprep.subr.bf16.mxu0 0
        %1997 = vmatpush1.bf16.msra.mxu0 0
        %1998 = vmatprep.subr.bf16.mxu0 0
        %1999 = vmatpush1.bf16.msra.mxu0 0
        %2000 = vmatprep.subr.bf16.mxu0 0
        %2001 = vmatpush1.bf16.msra.mxu0 0
        %2002 = vmatprep.subr.bf16.mxu0 0
        %2003 = vmatpush1.bf16.msra.mxu0 0
        %2004 = vmatprep.subr.bf16.mxu0 0
        %2005 = vmatpush1.bf16.msra.mxu0 0
        %2006 = vmatprep.subr.bf16.mxu0 0
        %2007 = vmatpush1.bf16.msra.mxu0 0
        %2008 = vmatprep.subr.bf16.mxu0 0
        %2009 = vmatpush1.bf16.msra.mxu0 0
        %2010 = vmatprep.subr.bf16.mxu0 0
        %2011 = vmatpush1.bf16.msra.mxu0 0
        %2012 = vmatprep.mubr.bf16.mxu0 0
        %2013 = vmatmul.mubr.bf16.gmra.mrb[0].mxu0 %v1978
        %v2014 = vpop.f32.mrb[0].mxu0
        %v2015 = vadd.f32 0.0, %v2014
        %v2016 = vpop.f32.mrb[0].mxu0
        %v2017 = vpop.f32.mrb[0].mxu0
        %v2018 = vadd.f32 0.0, %v2017
        %v2019 = vpop.f32.mrb[0].mxu0
        %2020 = vdwg.mxu0
        %v2021 = vadd.f32 %v1749, %v2015
        %v2022 = vadd.f32 %v1750, %v2018
        %v2023 = vld [vmem:[%s20] sm:$0x1]
        %v2025 = vlaneseq
        %v2026 = vshrl.u32 %v2025, 7
        %v2027 = vsub.s32 0, %v2026
        %v2028 = vrot.slane %v2023, %v2027
        %v2030 = vadd.f32 %v2021, %v2028
        %v2031 = vadd.f32 %v2022, %v2028
        %2032 = vst.msk [vmem:[%s693] sm:$0xff] %vm1176, %v2030
        %2033 = vst.msk [vmem:[%s693 + $0x8] sm:$0xff] %vm1176, %v2031
        %s2034 = sand.u32 %s513, 1
        %s2035 = scalar_lea.sflag [#allocation5], %s2034
        %s2036 = sand.u32 %s513, 1
        %s2037 = smul.addr %s2036, 16
        %s2038 = scalar_lea.vmem [#allocation4], %s2037
        // Predicated region
        $region109: #{tpu_custom_call.1} parent=103 // pred_check
          %p2039 = pneg %p523
        $region110: #{tpu_custom_call.1} parent=103 // pred_check_branch
          %2041 = sbr.rel (%p2039) target = $region112
        $region111: #{tpu_custom_call.1} parent=103 // pred_region
          %s2042 = smul.u32 2, %s40
          %s2044 = ssub.s32 256, 256
          %2045 = vsyncadd %s2035, %s2044
          %s2046 = smul.addr %s39, 4
          %s2047 = sadd.s32 %s2042, %s2046
          %s2048 = smul.addr %s2047, 128
          %s2049 = scalar_lea.hbm %s21, %s2048
          %s2050 = sshll.u32 %s2038, 4
          %s2051 = int_to_ptr.vmem [resolvable:$true] %s2050
          %2056 = dma.vmem_to_hbm [thread:$0]  %s2051, 256, %s2049, %s2035, 128, 128, 8
        $region112: #{tpu_custom_call.1} parent=103 // pred_fallthru
          _
      $region104: #{tpu_custom_call.1} parent=5 // pred_fallthru
        _
      %p2057 = scmp.le.s32.totalorder 2, %s30
      // Predicated region
      $region113: #{tpu_custom_call.1} parent=5 // pred_check
        %p2058 = pneg %p2057
      $region114: #{tpu_custom_call.1} parent=5 // pred_check_branch
        %2060 = sbr.rel (%p2058) target = $region116
      $region115: #{tpu_custom_call.1} parent=5 // pred_region
        %s2061 = ssub.s32 %s30, 2
        // Predicated region
        $region117: #{tpu_custom_call.1} parent=115 // pred_check
          %p2062 = pneg %p529
        $region118: #{tpu_custom_call.1} parent=115 // pred_check_branch
          %2064 = sbr.rel (%p2062) target = $region120
        $region119: #{tpu_custom_call.1} parent=115 // pred_region
          %s2065 = sand.u32 %s514, 1
          %s2066 = scalar_lea.sflag [#allocation5], %s2065
          %s2067 = sand.u32 %s514, 1
          %s2068 = smul.addr %s2067, 16
          %s2069 = scalar_lea.vmem [#allocation4], %s2068
          %2070 = dma.done %s2066, 256
        $region120: #{tpu_custom_call.1} parent=115 // pred_fallthru
          _
      $region116: #{tpu_custom_call.1} parent=5 // pred_fallthru
        _
    $region6: #{tpu_custom_call.1} parent=1 // loop_footer
      %s34 = sadd.s32 1, %s30
    $region7: #{tpu_custom_call.1} parent=1 // loop_footer_branch
      %29 = sbr.rel target = $region3
    $region8: #{tpu_custom_call.1} parent=1 // loop_exit
      _
    %2071 = vsyncpa [#allocation5], 1
    %s2072 = scalar_lea.sflag [#allocation5], 1
    %2073 = vsyncpa %s2072, 1

// kernel: tpu_custom_call.1
$region0: #{tpu_custom_call.1}
  #allocation0 [shape = 'u32[]', space=smem, size = 0x4, offset = 0x4, fixed_abs, tag = 'smem constant byte address 0x4 - core index']
  #allocation1 [shape = 'u32[144,128]{1,0:T(1,128)}', space=vmem, size = 0x12000, scoped, tag = 'internal scratch']
  #allocation2 [shape = 'bf16[32,32]{1,0:T(16,128)(2,1)}', space=vmem, size = 0x2000, scoped, tag = 'scratch operand']
  #allocation3 [shape = 'bf16[32,32]{1,0:T(16,128)(2,1)}', space=vmem, size = 0x2000, scoped, tag = 'scratch operand']
  %s0 = inlined_call_operand.vmem [shape: f32[2,32,32], index: 0, kind: input, shape index: {}]
  %s1 = inlined_call_operand.vmem [shape: f32[2,32,8], index: 1, kind: input, shape index: {}]
  %s2 = inlined_call_operand.vmem [shape: f32[2,32,8], index: 2, kind: input, shape index: {}]
  %s3 = inlined_call_operand.vmem [shape: f32[1,32], index: 3, kind: input, shape index: {}]
  %s4 = inlined_call_operand.vmem [shape: f32[1,32], index: 4, kind: input, shape index: {}]
  %s5 = inlined_call_operand.vmem [shape: bf16[32,32], index: 5, kind: input, shape index: {}]
  %s6 = inlined_call_operand.vmem [shape: bf16[32,32], index: 6, kind: input, shape index: {}]
  %s7 = inlined_call_operand.vmem [shape: bf16[32,32], index: 7, kind: input, shape index: {}]
  %s8 = inlined_call_operand.vmem [shape: f32[1,32], index: 8, kind: input, shape index: {}]
  %s9 = inlined_call_operand.vmem [shape: f32[1,32], index: 9, kind: input, shape index: {}]
  %s10 = inlined_call_operand.vmem [shape: f32[1,32], index: 10, kind: input, shape index: {}]
  %s11 = inlined_call_operand.vmem [shape: bf16[32,32], index: 11, kind: input, shape index: {}]
  %s12 = inlined_call_operand.vmem [shape: f32[1,32], index: 12, kind: input, shape index: {}]
  %s13 = inlined_call_operand.vmem [shape: f32[1,32], index: 13, kind: input, shape index: {}]
  %s14 = inlined_call_operand.vmem [shape: f32[1,32], index: 14, kind: input, shape index: {}]
  %s15 = inlined_call_operand.vmem [shape: bf16[32,64], index: 15, kind: input, shape index: {}]
  %s16 = inlined_call_operand.vmem [shape: bf16[32,64], index: 16, kind: input, shape index: {}]
  %s17 = inlined_call_operand.vmem [shape: f32[1,64], index: 17, kind: input, shape index: {}]
  %s18 = inlined_call_operand.vmem [shape: f32[1,64], index: 18, kind: input, shape index: {}]
  %s19 = inlined_call_operand.vmem [shape: bf16[64,32], index: 19, kind: input, shape index: {}]
  %s20 = inlined_call_operand.vmem [shape: f32[1,32], index: 20, kind: input, shape index: {}]
  %s21 = inlined_call_operand.hbm [shape: f32[2,32,32], index: 21, kind: output, shape index: {}]
  %s22 = sld [smem:[#allocation0]]
  $region121: #{tpu_custom_call.1} parent=0
    _
  %s24 = ssub.s32 1, %s22
  %s25 = scalar_select 0, %s24, %s22
  $region1: #{tpu_custom_call.1} parent=0
    #allocation4 [shape = 'u8[16384]{0}', space=vmem, size = 0x4000, scoped, tag = 'output window, operand 0']
    #allocation5 [shape = 's32[2]{0}', space=sflag, size = 0x8, scoped, tag = 'scoped memory for tpu_custom_call.1']
    %26 = vsyncpa [#allocation5], 0
    %s27 = scalar_lea.sflag [#allocation5], 1
    %28 = vsyncpa %s27, 0
    loop: start=0, step=1, limit=6
    $region2: #{tpu_custom_call.1} parent=1 // loop_pre_header
      _
    $region3: #{tpu_custom_call.1} parent=1 // loop_header
      %s30 = sphi 0, %s34
      %p31 = scmp.ge.s32.totalorder %s30, 6
      %s37 = sphi 0, %s49
      %s38 = sphi 0, %s45
      %s39 = sphi 0, %s37
      %s40 = sphi 0, %s38
      %s41 = sphi 0, %s39
      %s42 = sphi 0, %s40
      %s52 = sphi 0, %s54
      %s55 = sphi 0, %s52
      %s56 = sphi 0, %s55
      %s72 = sphi 0, %s56
      %s78 = sphi 0, %s80
      %s81 = sphi 0, %s78
      %s82 = sphi 0, %s81
      %s98 = sphi 0, %s82
      %s104 = sphi 0, %s106
      %s107 = sphi 0, %s104
      %s108 = sphi 0, %s107
      %s124 = sphi 0, %s108
      %s128 = sphi 0, %s128
      %s130 = sphi 0, %s128
      %s131 = sphi 0, %s130
      %s145 = sphi 0, %s131
      %s149 = sphi 0, %s149
      %s151 = sphi 0, %s149
      %s152 = sphi 0, %s151
      %s166 = sphi 0, %s152
      %s170 = sphi 0, %s170
      %s172 = sphi 0, %s170
      %s173 = sphi 0, %s172
      %s187 = sphi 0, %s173
      %s191 = sphi 0, %s191
      %s193 = sphi 0, %s191
      %s194 = sphi 0, %s193
      %s208 = sphi 0, %s194
      %s212 = sphi 0, %s212
      %s214 = sphi 0, %s212
      %s215 = sphi 0, %s214
      %s229 = sphi 0, %s215
      %s233 = sphi 0, %s233
      %s235 = sphi 0, %s233
      %s236 = sphi 0, %s235
      %s250 = sphi 0, %s236
      %s254 = sphi 0, %s254
      %s256 = sphi 0, %s254
      %s257 = sphi 0, %s256
      %s271 = sphi 0, %s257
      %s275 = sphi 0, %s275
      %s277 = sphi 0, %s275
      %s278 = sphi 0, %s277
      %s292 = sphi 0, %s278
      %s296 = sphi 0, %s296
      %s298 = sphi 0, %s296
      %s299 = sphi 0, %s298
      %s313 = sphi 0, %s299
      %s317 = sphi 0, %s317
      %s319 = sphi 0, %s317
      %s320 = sphi 0, %s319
      %s334 = sphi 0, %s320
      %s338 = sphi 0, %s338
      %s340 = sphi 0, %s338
      %s341 = sphi 0, %s340
      %s355 = sphi 0, %s341
      %s359 = sphi 0, %s359
      %s361 = sphi 0, %s359
      %s362 = sphi 0, %s361
      %s376 = sphi 0, %s362
      %s380 = sphi 0, %s380
      %s382 = sphi 0, %s380
      %s383 = sphi 0, %s382
      %s397 = sphi 0, %s383
      %s401 = sphi 0, %s401
      %s403 = sphi 0, %s401
      %s404 = sphi 0, %s403
      %s418 = sphi 0, %s404
      %s422 = sphi 0, %s422
      %s424 = sphi 0, %s422
      %s425 = sphi 0, %s424
      %s439 = sphi 0, %s425
      %s443 = sphi 0, %s443
      %s445 = sphi 0, %s443
      %s446 = sphi 0, %s445
      %s460 = sphi 0, %s446
      %s464 = sphi 0, %s464
      %s466 = sphi 0, %s464
      %s467 = sphi 0, %s466
      %s481 = sphi 0, %s467
      %s485 = sphi 0, %s485
      %s487 = sphi 0, %s485
      %s488 = sphi 0, %s487
      %s502 = sphi 0, %s488
      %s510 = sphi 0, %s512
      %s513 = sphi 0, %s510
      %s514 = sphi 0, %s513
      %s530 = sphi 0, %s514
    $region4: #{tpu_custom_call.1} parent=1 // loop_header_branch
      %33 = sbr.rel (%p31) target = $region8
    $region5: #{tpu_custom_call.1} parent=1 // loop_body
      %s35 = ssub.s32 %s30, 1
      %s36 = ssub.s32 %s30, 2
      %s43 = sadd.s32 1, %s38
      %p44 = scmp.ge.s32.totalorder %s43, 2
      %s45 = scalar_select %p44, 0, %s43
      %s46 = sadd.s32 1, %s37
      %s47 = scalar_select %p44, %s46, %s37
      %p48 = scmp.ge.s32.totalorder %s47, 2
      %s49 = scalar_select %p48, 0, %s47
      %s50 = ssub.s32 %s37, %s49
      %p51 = scmp.eq.s32.totalorder %s50, 0
      %s53 = sadd.s32 %s52, 1
      %s54 = scalar_select %p51, %s52, %s53
      %p57 = pneg %p51
      %p58 = scmp.eq.s32.totalorder %s30, 3
      %p59 = por %p57, %p58
      %p60 = scmp.ne.s32.totalorder %s52, %s55
      %p61 = scmp.eq.s32.totalorder %s30, 0
      %p62 = por %p60, %p61
      %p63 = scmp.ne.s32.totalorder %s52, %s55
      %p64 = scmp.eq.s32.totalorder %s35, 3
      %p65 = por %p63, %p64
      %p66 = scmp.ne.s32.totalorder %s55, %s56
      %p67 = scmp.eq.s32.totalorder %s35, 0
      %p68 = por %p66, %p67
      %p69 = scmp.ne.s32.totalorder %s55, %s56
      %p70 = scmp.eq.s32.totalorder %s36, 3
      %p71 = por %p69, %p70
      %p73 = scmp.ne.s32.totalorder %s56, %s72
      %p74 = scmp.eq.s32.totalorder %s36, 0
      %p75 = por %p73, %p74
      %s76 = ssub.s32 %s37, %s49
      %p77 = scmp.eq.s32.totalorder %s76, 0
      %s79 = sadd.s32 %s78, 1
      %s80 = scalar_select %p77, %s78, %s79
      %p83 = pneg %p77
      %p84 = scmp.eq.s32.totalorder %s30, 3
      %p85 = por %p83, %p84
      %p86 = scmp.ne.s32.totalorder %s78, %s81
      %p87 = scmp.eq.s32.totalorder %s30, 0
      %p88 = por %p86, %p87
      %p89 = scmp.ne.s32.totalorder %s78, %s81
      %p90 = scmp.eq.s32.totalorder %s35, 3
      %p91 = por %p89, %p90
      %p92 = scmp.ne.s32.totalorder %s81, %s82
      %p93 = scmp.eq.s32.totalorder %s35, 0
      %p94 = por %p92, %p93
      %p95 = scmp.ne.s32.totalorder %s81, %s82
      %p96 = scmp.eq.s32.totalorder %s36, 3
      %p97 = por %p95, %p96
      %p99 = scmp.ne.s32.totalorder %s82, %s98
      %p100 = scmp.eq.s32.totalorder %s36, 0
      %p101 = por %p99, %p100
      %s102 = ssub.s32 %s37, %s49
      %p103 = scmp.eq.s32.totalorder %s102, 0
      %s105 = sadd.s32 %s104, 1
      %s106 = scalar_select %p103, %s104, %s105
      %p109 = pneg %p103
      %p110 = scmp.eq.s32.totalorder %s30, 3
      %p111 = por %p109, %p110
      %p112 = scmp.ne.s32.totalorder %s104, %s107
      %p113 = scmp.eq.s32.totalorder %s30, 0
      %p114 = por %p112, %p113
      %p115 = scmp.ne.s32.totalorder %s104, %s107
      %p116 = scmp.eq.s32.totalorder %s35, 3
      %p117 = por %p115, %p116
      %p118 = scmp.ne.s32.totalorder %s107, %s108
      %p119 = scmp.eq.s32.totalorder %s35, 0
      %p120 = por %p118, %p119
      %p121 = scmp.ne.s32.totalorder %s107, %s108
      %p122 = scmp.eq.s32.totalorder %s36, 3
      %p123 = por %p121, %p122
      %p125 = scmp.ne.s32.totalorder %s108, %s124
      %p126 = scmp.eq.s32.totalorder %s36, 0
      %p127 = por %p125, %p126
      %s129 = sadd.s32 %s128, 1
      %p132 = scmp.eq.s32.totalorder %s30, 3
      %p133 = scmp.ne.s32.totalorder %s128, %s130
      %p134 = scmp.eq.s32.totalorder %s30, 0
      %p135 = por %p133, %p134
      %p136 = scmp.ne.s32.totalorder %s128, %s130
      %p137 = scmp.eq.s32.totalorder %s35, 3
      %p138 = por %p136, %p137
      %p139 = scmp.ne.s32.totalorder %s130, %s131
      %p140 = scmp.eq.s32.totalorder %s35, 0
      %p141 = por %p139, %p140
      %p142 = scmp.ne.s32.totalorder %s130, %s131
      %p143 = scmp.eq.s32.totalorder %s36, 3
      %p144 = por %p142, %p143
      %p146 = scmp.ne.s32.totalorder %s131, %s145
      %p147 = scmp.eq.s32.totalorder %s36, 0
      %p148 = por %p146, %p147
      %s150 = sadd.s32 %s149, 1
      %p153 = scmp.eq.s32.totalorder %s30, 3
      %p154 = scmp.ne.s32.totalorder %s149, %s151
      %p155 = scmp.eq.s32.totalorder %s30, 0
      %p156 = por %p154, %p155
      %p157 = scmp.ne.s32.totalorder %s149, %s151
      %p158 = scmp.eq.s32.totalorder %s35, 3
      %p159 = por %p157, %p158
      %p160 = scmp.ne.s32.totalorder %s151, %s152
      %p161 = scmp.eq.s32.totalorder %s35, 0
      %p162 = por %p160, %p161
      %p163 = scmp.ne.s32.totalorder %s151, %s152
      %p164 = scmp.eq.s32.totalorder %s36, 3
      %p165 = por %p163, %p164
      %p167 = scmp.ne.s32.totalorder %s152, %s166
      %p168 = scmp.eq.s32.totalorder %s36, 0
      %p169 = por %p167, %p168
      %s171 = sadd.s32 %s170, 1
      %p174 = scmp.eq.s32.totalorder %s30, 3
      %p175 = scmp.ne.s32.totalorder %s170, %s172
      %p176 = scmp.eq.s32.totalorder %s30, 0
      %p177 = por %p175, %p176
      %p178 = scmp.ne.s32.totalorder %s170, %s172
      %p179 = scmp.eq.s32.totalorder %s35, 3
      %p180 = por %p178, %p179
      %p181 = scmp.ne.s32.totalorder %s172, %s173
      %p182 = scmp.eq.s32.totalorder %s35, 0
      %p183 = por %p181, %p182
      %p184 = scmp.ne.s32.totalorder %s172, %s173
      %p185 = scmp.eq.s32.totalorder %s36, 3
      %p186 = por %p184, %p185
      %p188 = scmp.ne.s32.totalorder %s173, %s187
      %p189 = scmp.eq.s32.totalorder %s36, 0
      %p190 = por %p188, %p189
      %s192 = sadd.s32 %s191, 1
      %p195 = scmp.eq.s32.totalorder %s30, 3
      %p196 = scmp.ne.s32.totalorder %s191, %s193
      %p197 = scmp.eq.s32.totalorder %s30, 0
      %p198 = por %p196, %p197
      %p199 = scmp.ne.s32.totalorder %s191, %s193
      %p200 = scmp.eq.s32.totalorder %s35, 3
      %p201 = por %p199, %p200
      %p202 = scmp.ne.s32.totalorder %s193, %s194
      %p203 = scmp.eq.s32.totalorder %s35, 0
      %p204 = por %p202, %p203
      %p205 = scmp.ne.s32.totalorder %s193, %s194
      %p206 = scmp.eq.s32.totalorder %s36, 3
      %p207 = por %p205, %p206
      %p209 = scmp.ne.s32.totalorder %s194, %s208
      %p210 = scmp.eq.s32.totalorder %s36, 0
      %p211 = por %p209, %p210
      %s213 = sadd.s32 %s212, 1
      %p216 = scmp.eq.s32.totalorder %s30, 3
      %p217 = scmp.ne.s32.totalorder %s212, %s214
      %p218 = scmp.eq.s32.totalorder %s30, 0
      %p219 = por %p217, %p218
      %p220 = scmp.ne.s32.totalorder %s212, %s214
      %p221 = scmp.eq.s32.totalorder %s35, 3
      %p222 = por %p220, %p221
      %p223 = scmp.ne.s32.totalorder %s214, %s215
      %p224 = scmp.eq.s32.totalorder %s35, 0
      %p225 = por %p223, %p224
      %p226 = scmp.ne.s32.totalorder %s214, %s215
      %p227 = scmp.eq.s32.totalorder %s36, 3
      %p228 = por %p226, %p227
      %p230 = scmp.ne.s32.totalorder %s215, %s229
      %p231 = scmp.eq.s32.totalorder %s36, 0
      %p232 = por %p230, %p231
      %s234 = sadd.s32 %s233, 1
      %p237 = scmp.eq.s32.totalorder %s30, 3
      %p238 = scmp.ne.s32.totalorder %s233, %s235
      %p239 = scmp.eq.s32.totalorder %s30, 0
      %p240 = por %p238, %p239
      %p241 = scmp.ne.s32.totalorder %s233, %s235
      %p242 = scmp.eq.s32.totalorder %s35, 3
      %p243 = por %p241, %p242
      %p244 = scmp.ne.s32.totalorder %s235, %s236
      %p245 = scmp.eq.s32.totalorder %s35, 0
      %p246 = por %p244, %p245
      %p247 = scmp.ne.s32.totalorder %s235, %s236
      %p248 = scmp.eq.s32.totalorder %s36, 3
      %p249 = por %p247, %p248
      %p251 = scmp.ne.s32.totalorder %s236, %s250
      %p252 = scmp.eq.s32.totalorder %s36, 0
      %p253 = por %p251, %p252
      %s255 = sadd.s32 %s254, 1
      %p258 = scmp.eq.s32.totalorder %s30, 3
      %p259 = scmp.ne.s32.totalorder %s254, %s256
      %p260 = scmp.eq.s32.totalorder %s30, 0
      %p261 = por %p259, %p260
      %p262 = scmp.ne.s32.totalorder %s254, %s256
      %p263 = scmp.eq.s32.totalorder %s35, 3
      %p264 = por %p262, %p263
      %p265 = scmp.ne.s32.totalorder %s256, %s257
      %p266 = scmp.eq.s32.totalorder %s35, 0
      %p267 = por %p265, %p266
      %p268 = scmp.ne.s32.totalorder %s256, %s257
      %p269 = scmp.eq.s32.totalorder %s36, 3
      %p270 = por %p268, %p269
      %p272 = scmp.ne.s32.totalorder %s257, %s271
      %p273 = scmp.eq.s32.totalorder %s36, 0
      %p274 = por %p272, %p273
      %s276 = sadd.s32 %s275, 1
      %p279 = scmp.eq.s32.totalorder %s30, 3
      %p280 = scmp.ne.s32.totalorder %s275, %s277
      %p281 = scmp.eq.s32.totalorder %s30, 0
      %p282 = por %p280, %p281
      %p283 = scmp.ne.s32.totalorder %s275, %s277
      %p284 = scmp.eq.s32.totalorder %s35, 3
      %p285 = por %p283, %p284
      %p286 = scmp.ne.s32.totalorder %s277, %s278
      %p287 = scmp.eq.s32.totalorder %s35, 0
      %p288 = por %p286, %p287
      %p289 = scmp.ne.s32.totalorder %s277, %s278
      %p290 = scmp.eq.s32.totalorder %s36, 3
      %p291 = por %p289, %p290
      %p293 = scmp.ne.s32.totalorder %s278, %s292
      %p294 = scmp.eq.s32.totalorder %s36, 0
      %p295 = por %p293, %p294
      %s297 = sadd.s32 %s296, 1
      %p300 = scmp.eq.s32.totalorder %s30, 3
      %p301 = scmp.ne.s32.totalorder %s296, %s298
      %p302 = scmp.eq.s32.totalorder %s30, 0
      %p303 = por %p301, %p302
      %p304 = scmp.ne.s32.totalorder %s296, %s298
      %p305 = scmp.eq.s32.totalorder %s35, 3
      %p306 = por %p304, %p305
      %p307 = scmp.ne.s32.totalorder %s298, %s299
      %p308 = scmp.eq.s32.totalorder %s35, 0
      %p309 = por %p307, %p308
      %p310 = scmp.ne.s32.totalorder %s298, %s299
      %p311 = scmp.eq.s32.totalorder %s36, 3
      %p312 = por %p310, %p311
      %p314 = scmp.ne.s32.totalorder %s299, %s313
      %p315 = scmp.eq.s32.totalorder %s36, 0
      %p316 = por %p314, %p315
      %s318 = sadd.s32 %s317, 1
      %p321 = scmp.eq.s32.totalorder %s30, 3
      %p322 = scmp.ne.s32.totalorder %s317, %s319
      %p323 = scmp.eq.s32.totalorder %s30, 0
      %p324 = por %p322, %p323
      %p325 = scmp.ne.s32.totalorder %s317, %s319
      %p326 = scmp.eq.s32.totalorder %s35, 3
      %p327 = por %p325, %p326
      %p328 = scmp.ne.s32.totalorder %s319, %s320
      %p329 = scmp.eq.s32.totalorder %s35, 0
      %p330 = por %p328, %p329
      %p331 = scmp.ne.s32.totalorder %s319, %s320
      %p332 = scmp.eq.s32.totalorder %s36, 3
      %p333 = por %p331, %p332
      %p335 = scmp.ne.s32.totalorder %s320, %s334
      %p336 = scmp.eq.s32.totalorder %s36, 0
      %p337 = por %p335, %p336
      %s339 = sadd.s32 %s338, 1
      %p342 = scmp.eq.s32.totalorder %s30, 3
      %p343 = scmp.ne.s32.totalorder %s338, %s340
      %p344 = scmp.eq.s32.totalorder %s30, 0
      %p345 = por %p343, %p344
      %p346 = scmp.ne.s32.totalorder %s338, %s340
      %p347 = scmp.eq.s32.totalorder %s35, 3
      %p348 = por %p346, %p347
      %p349 = scmp.ne.s32.totalorder %s340, %s341
      %p350 = scmp.eq.s32.totalorder %s35, 0
      %p351 = por %p349, %p350
      %p352 = scmp.ne.s32.totalorder %s340, %s341
      %p353 = scmp.eq.s32.totalorder %s36, 3
      %p354 = por %p352, %p353
      %p356 = scmp.ne.s32.totalorder %s341, %s355
      %p357 = scmp.eq.s32.totalorder %s36, 0
      %p358 = por %p356, %p357
      %s360 = sadd.s32 %s359, 1
      %p363 = scmp.eq.s32.totalorder %s30, 3
      %p364 = scmp.ne.s32.totalorder %s359, %s361
      %p365 = scmp.eq.s32.totalorder %s30, 0
      %p366 = por %p364, %p365
      %p367 = scmp.ne.s32.totalorder %s359, %s361
      %p368 = scmp.eq.s32.totalorder %s35, 3
      %p369 = por %p367, %p368
      %p370 = scmp.ne.s32.totalorder %s361, %s362
      %p371 = scmp.eq.s32.totalorder %s35, 0
      %p372 = por %p370, %p371
      %p373 = scmp.ne.s32.totalorder %s361, %s362
      %p374 = scmp.eq.s32.totalorder %s36, 3
      %p375 = por %p373, %p374
      %p377 = scmp.ne.s32.totalorder %s362, %s376
      %p378 = scmp.eq.s32.totalorder %s36, 0
      %p379 = por %p377, %p378
      %s381 = sadd.s32 %s380, 1
      %p384 = scmp.eq.s32.totalorder %s30, 3
      %p385 = scmp.ne.s32.totalorder %s380, %s382
      %p386 = scmp.eq.s32.totalorder %s30, 0
      %p387 = por %p385, %p386
      %p388 = scmp.ne.s32.totalorder %s380, %s382
      %p389 = scmp.eq.s32.totalorder %s35, 3
      %p390 = por %p388, %p389
      %p391 = scmp.ne.s32.totalorder %s382, %s383
      %p392 = scmp.eq.s32.totalorder %s35, 0
      %p393 = por %p391, %p392
      %p394 = scmp.ne.s32.totalorder %s382, %s383
      %p395 = scmp.eq.s32.totalorder %s36, 3
      %p396 = por %p394, %p395
      %p398 = scmp.ne.s32.totalorder %s383, %s397
      %p399 = scmp.eq.s32.totalorder %s36, 0
      %p400 = por %p398, %p399
      %s402 = sadd.s32 %s401, 1
      %p405 = scmp.eq.s32.totalorder %s30, 3
      %p406 = scmp.ne.s32.totalorder %s401, %s403
      %p407 = scmp.eq.s32.totalorder %s30, 0
      %p408 = por %p406, %p407
      %p409 = scmp.ne.s32.totalorder %s401, %s403
      %p410 = scmp.eq.s32.totalorder %s35, 3
      %p411 = por %p409, %p410
      %p412 = scmp.ne.s32.totalorder %s403, %s404
      %p413 = scmp.eq.s32.totalorder %s35, 0
      %p414 = por %p412, %p413
      %p415 = scmp.ne.s32.totalorder %s403, %s404
      %p416 = scmp.eq.s32.totalorder %s36, 3
      %p417 = por %p415, %p416
      %p419 = scmp.ne.s32.totalorder %s404, %s418
      %p420 = scmp.eq.s32.totalorder %s36, 0
      %p421 = por %p419, %p420
      %s423 = sadd.s32 %s422, 1
      %p426 = scmp.eq.s32.totalorder %s30, 3
      %p427 = scmp.ne.s32.totalorder %s422, %s424
      %p428 = scmp.eq.s32.totalorder %s30, 0
      %p429 = por %p427, %p428
      %p430 = scmp.ne.s32.totalorder %s422, %s424
      %p431 = scmp.eq.s32.totalorder %s35, 3
      %p432 = por %p430, %p431
      %p433 = scmp.ne.s32.totalorder %s424, %s425
      %p434 = scmp.eq.s32.totalorder %s35, 0
      %p435 = por %p433, %p434
      %p436 = scmp.ne.s32.totalorder %s424, %s425
      %p437 = scmp.eq.s32.totalorder %s36, 3
      %p438 = por %p436, %p437
      %p440 = scmp.ne.s32.totalorder %s425, %s439
      %p441 = scmp.eq.s32.totalorder %s36, 0
      %p442 = por %p440, %p441
      %s444 = sadd.s32 %s443, 1
      %p447 = scmp.eq.s32.totalorder %s30, 3
      %p448 = scmp.ne.s32.totalorder %s443, %s445
      %p449 = scmp.eq.s32.totalorder %s30, 0
      %p450 = por %p448, %p449
      %p451 = scmp.ne.s32.totalorder %s443, %s445
      %p452 = scmp.eq.s32.totalorder %s35, 3
      %p453 = por %p451, %p452
      %p454 = scmp.ne.s32.totalorder %s445, %s446
      %p455 = scmp.eq.s32.totalorder %s35, 0
      %p456 = por %p454, %p455
      %p457 = scmp.ne.s32.totalorder %s445, %s446
      %p458 = scmp.eq.s32.totalorder %s36, 3
      %p459 = por %p457, %p458
      %p461 = scmp.ne.s32.totalorder %s446, %s460
      %p462 = scmp.eq.s32.totalorder %s36, 0
      %p463 = por %p461, %p462
      %s465 = sadd.s32 %s464, 1
      %p468 = scmp.eq.s32.totalorder %s30, 3
      %p469 = scmp.ne.s32.totalorder %s464, %s466
      %p470 = scmp.eq.s32.totalorder %s30, 0
      %p471 = por %p469, %p470
      %p472 = scmp.ne.s32.totalorder %s464, %s466
      %p473 = scmp.eq.s32.totalorder %s35, 3
      %p474 = por %p472, %p473
      %p475 = scmp.ne.s32.totalorder %s466, %s467
      %p476 = scmp.eq.s32.totalorder %s35, 0
      %p477 = por %p475, %p476
      %p478 = scmp.ne.s32.totalorder %s466, %s467
      %p479 = scmp.eq.s32.totalorder %s36, 3
      %p480 = por %p478, %p479
      %p482 = scmp.ne.s32.totalorder %s467, %s481
      %p483 = scmp.eq.s32.totalorder %s36, 0
      %p484 = por %p482, %p483
      %s486 = sadd.s32 %s485, 1
      %p489 = scmp.eq.s32.totalorder %s30, 3
      %p490 = scmp.ne.s32.totalorder %s485, %s487
      %p491 = scmp.eq.s32.totalorder %s30, 0
      %p492 = por %p490, %p491
      %p493 = scmp.ne.s32.totalorder %s485, %s487
      %p494 = scmp.eq.s32.totalorder %s35, 3
      %p495 = por %p493, %p494
      %p496 = scmp.ne.s32.totalorder %s487, %s488
      %p497 = scmp.eq.s32.totalorder %s35, 0
      %p498 = por %p496, %p497
      %p499 = scmp.ne.s32.totalorder %s487, %s488
      %p500 = scmp.eq.s32.totalorder %s36, 3
      %p501 = por %p499, %p500
      %p503 = scmp.ne.s32.totalorder %s488, %s502
      %p504 = scmp.eq.s32.totalorder %s36, 0
      %p505 = por %p503, %p504
      %s506 = ssub.s32 %s37, %s49
      %s507 = ssub.s32 %s38, %s45
      %s508 = sor.u32 %s506, %s507
      %p509 = scmp.eq.s32.totalorder %s508, 0
      %s511 = sadd.s32 %s510, 1
      %s512 = scalar_select %p509, %s510, %s511
      %p515 = pneg %p509
      %p516 = scmp.eq.s32.totalorder %s30, 3
      %p517 = por %p515, %p516
      %p518 = scmp.ne.s32.totalorder %s510, %s513
      %p519 = scmp.eq.s32.totalorder %s30, 0
      %p520 = por %p518, %p519
      %p521 = scmp.ne.s32.totalorder %s510, %s513
      %p522 = scmp.eq.s32.totalorder %s35, 3
      %p523 = por %p521, %p522
      %p524 = scmp.ne.s32.totalorder %s513, %s514
      %p525 = scmp.eq.s32.totalorder %s35, 0
      %p526 = por %p524, %p525
      %p527 = scmp.ne.s32.totalorder %s513, %s514
      %p528 = scmp.eq.s32.totalorder %s36, 3
      %p529 = por %p527, %p528
      %p531 = scmp.ne.s32.totalorder %s514, %s530
      %p532 = scmp.eq.s32.totalorder %s36, 0
      %p533 = por %p531, %p532
      %p534 = scmp.le.s32.totalorder 1, %s30
      %p535 = scmp.lt.s32.totalorder %s30, 5
      %p536 = pnand %p534, %p535
      %p537 = pneg %p536
      // Predicated region
      $region9: #{tpu_custom_call.1} parent=5 // pred_check
        _
      $region10: #{tpu_custom_call.1} parent=5 // pred_check_branch
        %539 = sbr.rel (%p536) target = $region12
      $region11: #{tpu_custom_call.1} parent=5 // pred_region
        %s540 = ssub.s32 %s30, 1
        // Predicated region
        $region13: #{tpu_custom_call.1} parent=11 // pred_check
          %p541 = pneg %p141
        $region14: #{tpu_custom_call.1} parent=11 // pred_check_branch
          %543 = sbr.rel (%p541) target = $region16
        $region15: #{tpu_custom_call.1} parent=11 // pred_region
          _
        $region16: #{tpu_custom_call.1} parent=11 // pred_fallthru
          _
        // Predicated region
        $region17: #{tpu_custom_call.1} parent=11 // pred_check
          %p544 = pneg %p162
        $region18: #{tpu_custom_call.1} parent=11 // pred_check_branch
          %546 = sbr.rel (%p544) target = $region20
        $region19: #{tpu_custom_call.1} parent=11 // pred_region
          _
        $region20: #{tpu_custom_call.1} parent=11 // pred_fallthru
          _
        // Predicated region
        $region21: #{tpu_custom_call.1} parent=11 // pred_check
          %p547 = pneg %p183
        $region22: #{tpu_custom_call.1} parent=11 // pred_check_branch
          %549 = sbr.rel (%p547) target = $region24
        $region23: #{tpu_custom_call.1} parent=11 // pred_region
          _
        $region24: #{tpu_custom_call.1} parent=11 // pred_fallthru
          _
        // Predicated region
        $region25: #{tpu_custom_call.1} parent=11 // pred_check
          %p550 = pneg %p204
        $region26: #{tpu_custom_call.1} parent=11 // pred_check_branch
          %552 = sbr.rel (%p550) target = $region28
        $region27: #{tpu_custom_call.1} parent=11 // pred_region
          _
        $region28: #{tpu_custom_call.1} parent=11 // pred_fallthru
          _
        // Predicated region
        $region29: #{tpu_custom_call.1} parent=11 // pred_check
          %p553 = pneg %p225
        $region30: #{tpu_custom_call.1} parent=11 // pred_check_branch
          %555 = sbr.rel (%p553) target = $region32
        $region31: #{tpu_custom_call.1} parent=11 // pred_region
          _
        $region32: #{tpu_custom_call.1} parent=11 // pred_fallthru
          _
        // Predicated region
        $region33: #{tpu_custom_call.1} parent=11 // pred_check
          %p556 = pneg %p246
        $region34: #{tpu_custom_call.1} parent=11 // pred_check_branch
          %558 = sbr.rel (%p556) target = $region36
        $region35: #{tpu_custom_call.1} parent=11 // pred_region
          _
        $region36: #{tpu_custom_call.1} parent=11 // pred_fallthru
          _
        // Predicated region
        $region37: #{tpu_custom_call.1} parent=11 // pred_check
          %p559 = pneg %p267
        $region38: #{tpu_custom_call.1} parent=11 // pred_check_branch
          %561 = sbr.rel (%p559) target = $region40
        $region39: #{tpu_custom_call.1} parent=11 // pred_region
          _
        $region40: #{tpu_custom_call.1} parent=11 // pred_fallthru
          _
        // Predicated region
        $region41: #{tpu_custom_call.1} parent=11 // pred_check
          %p562 = pneg %p288
        $region42: #{tpu_custom_call.1} parent=11 // pred_check_branch
          %564 = sbr.rel (%p562) target = $region44
        $region43: #{tpu_custom_call.1} parent=11 // pred_region
          _
        $region44: #{tpu_custom_call.1} parent=11 // pred_fallthru
          _
        // Predicated region
        $region45: #{tpu_custom_call.1} parent=11 // pred_check
          %p565 = pneg %p309
        $region46: #{tpu_custom_call.1} parent=11 // pred_check_branch
          %567 = sbr.rel (%p565) target = $region48
        $region47: #{tpu_custom_call.1} parent=11 // pred_region
          _
        $region48: #{tpu_custom_call.1} parent=11 // pred_fallthru
          _
        // Predicated region
        $region49: #{tpu_custom_call.1} parent=11 // pred_check
          %p568 = pneg %p330
        $region50: #{tpu_custom_call.1} parent=11 // pred_check_branch
          %570 = sbr.rel (%p568) target = $region52
        $region51: #{tpu_custom_call.1} parent=11 // pred_region
          _
        $region52: #{tpu_custom_call.1} parent=11 // pred_fallthru
          _
        // Predicated region
        $region53: #{tpu_custom_call.1} parent=11 // pred_check
          %p571 = pneg %p351
        $region54: #{tpu_custom_call.1} parent=11 // pred_check_branch
          %573 = sbr.rel (%p571) target = $region56
        $region55: #{tpu_custom_call.1} parent=11 // pred_region
          _
        $region56: #{tpu_custom_call.1} parent=11 // pred_fallthru
          _
        // Predicated region
        $region57: #{tpu_custom_call.1} parent=11 // pred_check
          %p574 = pneg %p372
        $region58: #{tpu_custom_call.1} parent=11 // pred_check_branch
          %576 = sbr.rel (%p574) target = $region60
        $region59: #{tpu_custom_call.1} parent=11 // pred_region
          _
        $region60: #{tpu_custom_call.1} parent=11 // pred_fallthru
          _
        // Predicated region
        $region61: #{tpu_custom_call.1} parent=11 // pred_check
          %p577 = pneg %p393
        $region62: #{tpu_custom_call.1} parent=11 // pred_check_branch
          %579 = sbr.rel (%p577) target = $region64
        $region63: #{tpu_custom_call.1} parent=11 // pred_region
          _
        $region64: #{tpu_custom_call.1} parent=11 // pred_fallthru
          _
        // Predicated region
        $region65: #{tpu_custom_call.1} parent=11 // pred_check
          %p580 = pneg %p414
        $region66: #{tpu_custom_call.1} parent=11 // pred_check_branch
          %582 = sbr.rel (%p580) target = $region68
        $region67: #{tpu_custom_call.1} parent=11 // pred_region
          _
        $region68: #{tpu_custom_call.1} parent=11 // pred_fallthru
          _
        // Predicated region
        $region69: #{tpu_custom_call.1} parent=11 // pred_check
          %p583 = pneg %p435
        $region70: #{tpu_custom_call.1} parent=11 // pred_check_branch
          %585 = sbr.rel (%p583) target = $region72
        $region71: #{tpu_custom_call.1} parent=11 // pred_region
          _
        $region72: #{tpu_custom_call.1} parent=11 // pred_fallthru
          _
        // Predicated region
        $region73: #{tpu_custom_call.1} parent=11 // pred_check
          %p586 = pneg %p456
        $region74: #{tpu_custom_call.1} parent=11 // pred_check_branch
          %588 = sbr.rel (%p586) target = $region76
        $region75: #{tpu_custom_call.1} parent=11 // pred_region
          _
        $region76: #{tpu_custom_call.1} parent=11 // pred_fallthru
          _
        // Predicated region
        $region77: #{tpu_custom_call.1} parent=11 // pred_check
          %p589 = pneg %p477
        $region78: #{tpu_custom_call.1} parent=11 // pred_check_branch
          %591 = sbr.rel (%p589) target = $region80
        $region79: #{tpu_custom_call.1} parent=11 // pred_region
          _
        $region80: #{tpu_custom_call.1} parent=11 // pred_fallthru
          _
        // Predicated region
        $region81: #{tpu_custom_call.1} parent=11 // pred_check
          %p592 = pneg %p498
        $region82: #{tpu_custom_call.1} parent=11 // pred_check_branch
          %594 = sbr.rel (%p592) target = $region84
        $region83: #{tpu_custom_call.1} parent=11 // pred_region
          _
        $region84: #{tpu_custom_call.1} parent=11 // pred_fallthru
          _
      $region12: #{tpu_custom_call.1} parent=5 // pred_fallthru
        _
      %p595 = scmp.lt.s32.totalorder %s30, 4
      // Predicated region
      $region85: #{tpu_custom_call.1} parent=5 // pred_check
        %p596 = pneg %p595
      $region86: #{tpu_custom_call.1} parent=5 // pred_check_branch
        %598 = sbr.rel (%p596) target = $region88
      $region87: #{tpu_custom_call.1} parent=5 // pred_region
        // Predicated region
        $region89: #{tpu_custom_call.1} parent=87 // pred_check
          %p599 = pneg %p62
        $region90: #{tpu_custom_call.1} parent=87 // pred_check_branch
          %601 = sbr.rel (%p599) target = $region92
        $region91: #{tpu_custom_call.1} parent=87 // pred_region
          %p602 = scmp.lt.s32.totalorder %s37, 1
          %s603 = scalar_select %p602, %s37, 1
          %s604 = smul.addr %s603, 4
          %s605 = smul.addr %s604, 8
          %s606 = scalar_lea.vmem %s0, %s605
        $region92: #{tpu_custom_call.1} parent=87 // pred_fallthru
          _
        // Predicated region
        $region93: #{tpu_custom_call.1} parent=87 // pred_check
          %p607 = pneg %p88
        $region94: #{tpu_custom_call.1} parent=87 // pred_check_branch
          %609 = sbr.rel (%p607) target = $region96
        $region95: #{tpu_custom_call.1} parent=87 // pred_region
          %p610 = scmp.lt.s32.totalorder %s37, 1
          %s611 = scalar_select %p610, %s37, 1
          %s612 = smul.addr %s611, 4
          %s613 = smul.addr %s612, 8
          %s614 = scalar_lea.vmem %s1, %s613
        $region96: #{tpu_custom_call.1} parent=87 // pred_fallthru
          _
        // Predicated region
        $region97: #{tpu_custom_call.1} parent=87 // pred_check
          %p615 = pneg %p114
        $region98: #{tpu_custom_call.1} parent=87 // pred_check_branch
          %617 = sbr.rel (%p615) target = $region100
        $region99: #{tpu_custom_call.1} parent=87 // pred_region
          %p618 = scmp.lt.s32.totalorder %s37, 1
          %s619 = scalar_select %p618, %s37, 1
          %s620 = smul.addr %s619, 4
          %s621 = smul.addr %s620, 8
          %s622 = scalar_lea.vmem %s2, %s621
        $region100: #{tpu_custom_call.1} parent=87 // pred_fallthru
          _
      $region88: #{tpu_custom_call.1} parent=5 // pred_fallthru
        _
      %p623 = scmp.le.s32.totalorder 1, %s30
      %p624 = scmp.lt.s32.totalorder %s30, 5
      %p625 = pnand %p623, %p624
      %p626 = pneg %p625
      // Predicated region
      $region101: #{tpu_custom_call.1} parent=5 // pred_check
        _
      $region102: #{tpu_custom_call.1} parent=5 // pred_check_branch
        %628 = sbr.rel (%p625) target = $region104
      $region103: #{tpu_custom_call.1} parent=5 // pred_region
        %s629 = ssub.s32 %s30, 1
        %p630 = scmp.lt.s32.totalorder %s39, 1
        %s631 = scalar_select %p630, %s39, 1
        %s632 = smul.addr %s631, 4
        %s633 = smul.addr %s632, 8
        %s634 = scalar_lea.vmem %s0, %s633
        %p635 = pneg %p68
        %p636 = pneg %p65
        %p637 = scmp.lt.s32.totalorder %s39, 1
        %s638 = scalar_select %p637, %s39, 1
        %s639 = smul.addr %s638, 4
        %s640 = smul.addr %s639, 8
        %s641 = scalar_lea.vmem %s1, %s640
        %p642 = pneg %p94
        %p643 = pneg %p91
        %p644 = scmp.lt.s32.totalorder %s39, 1
        %s645 = scalar_select %p644, %s39, 1
        %s646 = smul.addr %s645, 4
        %s647 = smul.addr %s646, 8
        %s648 = scalar_lea.vmem %s2, %s647
        %p649 = pneg %p120
        %p650 = pneg %p117
        %p651 = pneg %p141
        %p652 = pneg %p138
        %p653 = pneg %p162
        %p654 = pneg %p159
        %p655 = pneg %p183
        %p656 = pneg %p180
        %p657 = pneg %p204
        %p658 = pneg %p201
        %p659 = pneg %p225
        %p660 = pneg %p222
        %p661 = pneg %p246
        %p662 = pneg %p243
        %p663 = pneg %p267
        %p664 = pneg %p264
        %p665 = pneg %p288
        %p666 = pneg %p285
        %p667 = pneg %p309
        %p668 = pneg %p306
        %p669 = pneg %p330
        %p670 = pneg %p327
        %p671 = pneg %p351
        %p672 = pneg %p348
        %p673 = pneg %p372
        %p674 = pneg %p369
        %p675 = pneg %p393
        %p676 = pneg %p390
        %p677 = pneg %p414
        %p678 = pneg %p411
        %p679 = pneg %p435
        %p680 = pneg %p432
        %p681 = pneg %p456
        %p682 = pneg %p453
        %p683 = pneg %p477
        %p684 = pneg %p474
        %p685 = pneg %p498
        %p686 = pneg %p495
        %p687 = pneg %p526
        %p688 = pneg %p523
        %s689 = sand.u32 %s513, 1
        %s690 = scalar_lea.sflag [#allocation5], %s689
        %s691 = sand.u32 %s513, 1
        %s692 = smul.addr %s691, 16
        %s693 = scalar_lea.vmem [#allocation4], %s692
        %p694 = scmp.lt.s32.totalorder %s39, 1
        %s695 = scalar_select %p694, %s39, 1
        %s696 = smul.addr %s695, 4
        %s697 = smul.addr %s696, 8
        %s698 = scalar_lea.vmem %s0, %s697
        %p699 = scmp.lt.s32.totalorder %s39, 1
        %s700 = scalar_select %p699, %s39, 1
        %s701 = smul.addr %s700, 4
        %s702 = smul.addr %s701, 8
        %s703 = scalar_lea.vmem %s1, %s702
        %p704 = scmp.lt.s32.totalorder %s39, 1
        %s705 = scalar_select %p704, %s39, 1
        %s706 = smul.addr %s705, 4
        %s707 = smul.addr %s706, 8
        %s708 = scalar_lea.vmem %s2, %s707
        %s709 = smul.u32 2, %s40
        %s711 = smul.u32 %s40, 16
        %p712 = scmp.eq.s32.totalorder %s40, 0
        // Predicated region
        $region105: #{tpu_custom_call.1} parent=103 // pred_check
          %p713 = pneg %p712
        $region106: #{tpu_custom_call.1} parent=103 // pred_check_branch
          %715 = sbr.rel (%p713) target = $region108
        $region107: #{tpu_custom_call.1} parent=103 // pred_region
          %v716 = vld [vmem:[%s698] sm:$0xff]
          %v717 = vld [vmem:[%s698 + $0x8] sm:$0xff]
          %v718 = vld [vmem:[%s698 + $0x10] sm:$0xff]
          %v719 = vld [vmem:[%s698 + $0x18] sm:$0xff]
          %v720 = vld [vmem:[%s3] sm:$0x1]
          %v721 = vld [vmem:[%s4] sm:$0x1]
          %vm722 = vcmask 261120
          %v723 = vsel %vm722, %v716, 0.0
          %724 = vadd.xlane.f32.xlu0 %v723
          %v725 = vpop.xlane.xlu0 %724
          %v726 = vsel %vm722, %v717, 0.0
          %727 = vadd.xlane.f32.xlu0 %v726
          %v728 = vpop.xlane.xlu0 %727
          %v729 = vsel %vm722, %v718, 0.0
          %730 = vadd.xlane.f32.xlu0 %v729
          %v731 = vpop.xlane.xlu0 %730
          %v732 = vsel %vm722, %v719, 0.0
          %733 = vadd.xlane.f32.xlu0 %v732
          %v734 = vpop.xlane.xlu0 %733
          %v735 = vrcp.pop 32.0
          %v736 = vmul.f32 %v725, %v735
          %v737 = vmul.f32 %v728, %v735
          %v738 = vmul.f32 %v731, %v735
          %v739 = vmul.f32 %v734, %v735
          %v740 = vsub.f32 %v716, %v736
          %v741 = vsub.f32 %v717, %v737
          %v742 = vsub.f32 %v718, %v738
          %v743 = vsub.f32 %v719, %v739
          %v744 = vmul.f32 %v740, %v740
          %v745 = vmul.f32 %v741, %v741
          %v746 = vmul.f32 %v742, %v742
          %v747 = vmul.f32 %v743, %v743
          %v748 = vsel %vm722, %v744, 0.0
          %749 = vadd.xlane.f32.xlu0 %v748
          %v750 = vpop.xlane.xlu0 %749
          %v751 = vsel %vm722, %v745, 0.0
          %752 = vadd.xlane.f32.xlu0 %v751
          %v753 = vpop.xlane.xlu0 %752
          %v754 = vsel %vm722, %v746, 0.0
          %755 = vadd.xlane.f32.xlu0 %v754
          %v756 = vpop.xlane.xlu0 %755
          %v757 = vsel %vm722, %v747, 0.0
          %758 = vadd.xlane.f32.xlu0 %v757
          %v759 = vpop.xlane.xlu0 %758
          %v760 = vmul.f32 %v750, %v735
          %v761 = vmul.f32 %v753, %v735
          %v762 = vmul.f32 %v756, %v735
          %v763 = vmul.f32 %v759, %v735
          %v764 = vadd.f32 %v760, 1e-05
          %v765 = vadd.f32 %v761, 1e-05
          %v766 = vadd.f32 %v762, 1e-05
          %v767 = vadd.f32 %v763, 1e-05
          %v768 = vrsqrt.pop %v764
          %v769 = vrsqrt.pop %v765
          %v770 = vrsqrt.pop %v766
          %v771 = vrsqrt.pop %v767
          %v772 = vmul.f32 %v740, %v768
          %v773 = vmul.f32 %v741, %v769
          %v774 = vmul.f32 %v742, %v770
          %v775 = vmul.f32 %v743, %v771
          %v777 = vlaneseq
          %v778 = vshrl.u32 %v777, 7
          %v779 = vsub.s32 0, %v778
          %v780 = vrot.slane %v720, %v779
          %v782 = vmul.f32 %v772, %v780
          %v783 = vmul.f32 %v773, %v780
          %v784 = vmul.f32 %v774, %v780
          %v785 = vmul.f32 %v775, %v780
          %v787 = vlaneseq
          %v788 = vshrl.u32 %v787, 7
          %v789 = vsub.s32 0, %v788
          %v790 = vrot.slane %v721, %v789
          %v792 = vadd.f32 %v782, %v790
          %v793 = vadd.f32 %v783, %v790
          %v794 = vadd.f32 %v784, %v790
          %v795 = vadd.f32 %v785, %v790
          %v796 = vld [vmem:[%s6] sm:$0xf]
          %v797 = vld [vmem:[%s6 + $0x4] sm:$0xf]
          %v798 = vld [vmem:[%s6 + $0x8] sm:$0xf]
          %v799 = vld [vmem:[%s6 + $0xc] sm:$0xf]
          %v800 = vpack.c.bf16 %v793, %v792
          %v801 = vpack.c.bf16 %v795, %v794
          %v802 = vld [vmem:[%s9] sm:$0x1]
          %v804 = vlaneseq
          %v805 = vshrl.u32 %v804, 7
          %v806 = vsub.s32 0, %v805
          %v807 = vrot.slane %v802, %v806
          %v813 = vunpack.c.l.b16 %v796
          %v814 = vunpack.c.l.b16 %v797
          %v815 = vunpack.c.l.b16 %v798
          %v816 = vunpack.c.l.b16 %v799
          %v817 = vpack.c.b16 %v814, %v813
          %v818 = vpack.c.b16 %v816, %v815
          %v822 = vsel %vm722, %v800, 0
          %v825 = vsel %vm722, %v801, 0
          %827 = vmatprep.subr.bf16.mxu0 0
          %828 = vmatpush1.bf16.msra.mxu0 %v817
          %829 = vmatprep.subr.bf16.mxu0 0
          %830 = vmatpush1.bf16.msra.mxu0 %v818
          %831 = vmatprep.subr.bf16.mxu0 0
          %832 = vmatpush1.bf16.msra.mxu0 0
          %833 = vmatprep.subr.bf16.mxu0 0
          %834 = vmatpush1.bf16.msra.mxu0 0
          %835 = vmatprep.subr.bf16.mxu0 0
          %836 = vmatpush1.bf16.msra.mxu0 0
          %837 = vmatprep.subr.bf16.mxu0 0
          %838 = vmatpush1.bf16.msra.mxu0 0
          %839 = vmatprep.subr.bf16.mxu0 0
          %840 = vmatpush1.bf16.msra.mxu0 0
          %841 = vmatprep.subr.bf16.mxu0 0
          %842 = vmatpush1.bf16.msra.mxu0 0
          %843 = vmatprep.subr.bf16.mxu0 0
          %844 = vmatpush1.bf16.msra.mxu0 0
          %845 = vmatprep.subr.bf16.mxu0 0
          %846 = vmatpush1.bf16.msra.mxu0 0
          %847 = vmatprep.subr.bf16.mxu0 0
          %848 = vmatpush1.bf16.msra.mxu0 0
          %849 = vmatprep.subr.bf16.mxu0 0
          %850 = vmatpush1.bf16.msra.mxu0 0
          %851 = vmatprep.subr.bf16.mxu0 0
          %852 = vmatpush1.bf16.msra.mxu0 0
          %853 = vmatprep.subr.bf16.mxu0 0
          %854 = vmatpush1.bf16.msra.mxu0 0
          %855 = vmatprep.subr.bf16.mxu0 0
          %856 = vmatpush1.bf16.msra.mxu0 0
          %857 = vmatprep.subr.bf16.mxu0 0
          %858 = vmatpush1.bf16.msra.mxu0 0
          %859 = vmatprep.mubr.bf16.mxu0 0
          %860 = vmatmul.mubr.bf16.gmra.mrb[0].mxu0 %v822
          %v861 = vpop.f32.mrb[0].mxu0
          %v862 = vadd.f32 %v807, %v861
          %v863 = vpop.f32.mrb[0].mxu0
          %v864 = vpop.f32.mrb[0].mxu0
          %v865 = vadd.f32 %v807, %v864
          %v866 = vpop.f32.mrb[0].mxu0
          %867 = vmatprep.mubr.bf16.mxu0 0
          %868 = vmatmul.mubr.bf16.gmra.mrb[0].mxu0 %v825
          %v869 = vpop.f32.mrb[0].mxu0
          %v870 = vadd.f32 %v807, %v869
          %v871 = vpop.f32.mrb[0].mxu0
          %v872 = vpop.f32.mrb[0].mxu0
          %v873 = vadd.f32 %v807, %v872
          %v874 = vpop.f32.mrb[0].mxu0
          %875 = vdwg.mxu0
          %v876 = vld [vmem:[%s7] sm:$0xf]
          %v877 = vld [vmem:[%s7 + $0x4] sm:$0xf]
          %v878 = vld [vmem:[%s7 + $0x8] sm:$0xf]
          %v879 = vld [vmem:[%s7 + $0xc] sm:$0xf]
          %v880 = vld [vmem:[%s10] sm:$0x1]
          %v882 = vlaneseq
          %v883 = vshrl.u32 %v882, 7
          %v884 = vsub.s32 0, %v883
          %v885 = vrot.slane %v880, %v884
          %v891 = vunpack.c.l.b16 %v876
          %v892 = vunpack.c.l.b16 %v877
          %v893 = vunpack.c.l.b16 %v878
          %v894 = vunpack.c.l.b16 %v879
          %v895 = vpack.c.b16 %v892, %v891
          %v896 = vpack.c.b16 %v894, %v893
          %899 = vmatprep.subr.bf16.mxu0 0
          %900 = vmatpush1.bf16.msra.mxu0 %v895
          %901 = vmatprep.subr.bf16.mxu0 0
          %902 = vmatpush1.bf16.msra.mxu0 %v896
          %903 = vmatprep.subr.bf16.mxu0 0
          %904 = vmatpush1.bf16.msra.mxu0 0
          %905 = vmatprep.subr.bf16.mxu0 0
          %906 = vmatpush1.bf16.msra.mxu0 0
          %907 = vmatprep.subr.bf16.mxu0 0
          %908 = vmatpush1.bf16.msra.mxu0 0
          %909 = vmatprep.subr.bf16.mxu0 0
          %910 = vmatpush1.bf16.msra.mxu0 0
          %911 = vmatprep.subr.bf16.mxu0 0
          %912 = vmatpush1.bf16.msra.mxu0 0
          %913 = vmatprep.subr.bf16.mxu0 0
          %914 = vmatpush1.bf16.msra.mxu0 0
          %915 = vmatprep.subr.bf16.mxu0 0
          %916 = vmatpush1.bf16.msra.mxu0 0
          %917 = vmatprep.subr.bf16.mxu0 0
          %918 = vmatpush1.bf16.msra.mxu0 0
          %919 = vmatprep.subr.bf16.mxu0 0
          %920 = vmatpush1.bf16.msra.mxu0 0
          %921 = vmatprep.subr.bf16.mxu0 0
          %922 = vmatpush1.bf16.msra.mxu0 0
          %923 = vmatprep.subr.bf16.mxu0 0
          %924 = vmatpush1.bf16.msra.mxu0 0
          %925 = vmatprep.subr.bf16.mxu0 0
          %926 = vmatpush1.bf16.msra.mxu0 0
          %927 = vmatprep.subr.bf16.mxu0 0
          %928 = vmatpush1.bf16.msra.mxu0 0
          %929 = vmatprep.subr.bf16.mxu0 0
          %930 = vmatpush1.bf16.msra.mxu0 0
          %931 = vmatprep.mubr.bf16.mxu0 0
          %932 = vmatmul.mubr.bf16.gmra.mrb[0].mxu0 %v822
          %v933 = vpop.f32.mrb[0].mxu0
          %v934 = vadd.f32 %v885, %v933
          %v935 = vpop.f32.mrb[0].mxu0
          %v936 = vpop.f32.mrb[0].mxu0
          %v937 = vadd.f32 %v885, %v936
          %v938 = vpop.f32.mrb[0].mxu0
          %939 = vmatprep.mubr.bf16.mxu0 0
          %940 = vmatmul.mubr.bf16.gmra.mrb[0].mxu0 %v825
          %v941 = vpop.f32.mrb[0].mxu0
          %v942 = vadd.f32 %v885, %v941
          %v943 = vpop.f32.mrb[0].mxu0
          %v944 = vpop.f32.mrb[0].mxu0
          %v945 = vadd.f32 %v885, %v944
          %v946 = vpop.f32.mrb[0].mxu0
          %947 = vdwg.mxu0
          %v948 = vld [vmem:[%s703] sm:$0xff]
          %v949 = vld [vmem:[%s703 + $0x8] sm:$0xff]
          %v950 = vld [vmem:[%s703 + $0x10] sm:$0xff]
          %v951 = vld [vmem:[%s703 + $0x18] sm:$0xff]
          %v952 = vld [vmem:[%s708] sm:$0xff]
          %v953 = vld [vmem:[%s708 + $0x8] sm:$0xff]
          %v954 = vld [vmem:[%s708 + $0x10] sm:$0xff]
          %v955 = vld [vmem:[%s708 + $0x18] sm:$0xff]
          %v956 = vmul.f32 %v862, %v948
          %v957 = vmul.f32 %v865, %v949
          %v958 = vmul.f32 %v870, %v950
          %v959 = vmul.f32 %v873, %v951
          %964 = vrot.lane.b32.xlu0 %v952, 8
          %v965 = vpop.permute.xlu0 %964
          %966 = vrot.lane.b32.xlu0 %v953, 8
          %v967 = vpop.permute.xlu0 %966
          %968 = vrot.lane.b32.xlu0 %v954, 8
          %v969 = vpop.permute.xlu0 %968
          %970 = vrot.lane.b32.xlu0 %v955, 8
          %v971 = vpop.permute.xlu0 %970
          %v976 = vmul.f32 %v862, %v965
          %v977 = vmul.f32 %v865, %v967
          %v978 = vmul.f32 %v870, %v969
          %v979 = vmul.f32 %v873, %v971
          %984 = vrot.lane.b32.xlu0 %v976, 120
          %v985 = vpop.permute.xlu0 %984
          %986 = vrot.lane.b32.xlu0 %v977, 120
          %v987 = vpop.permute.xlu0 %986
          %988 = vrot.lane.b32.xlu0 %v978, 120
          %v989 = vpop.permute.xlu0 %988
          %990 = vrot.lane.b32.xlu0 %v979, 120
          %v991 = vpop.permute.xlu0 %990
          %v996 = vsub.f32 %v956, %v985
          %v997 = vsub.f32 %v957, %v987
          %v998 = vsub.f32 %v958, %v989
          %v999 = vsub.f32 %v959, %v991
          %1004 = vrot.lane.b32.xlu0 %v948, 8
          %v1005 = vpop.permute.xlu0 %1004
          %1006 = vrot.lane.b32.xlu0 %v949, 8
          %v1007 = vpop.permute.xlu0 %1006
          %1008 = vrot.lane.b32.xlu0 %v950, 8
          %v1009 = vpop.permute.xlu0 %1008
          %1010 = vrot.lane.b32.xlu0 %v951, 8
          %v1011 = vpop.permute.xlu0 %1010
          %v1016 = vmul.f32 %v862, %v1005
          %v1017 = vmul.f32 %v865, %v1007
          %v1018 = vmul.f32 %v870, %v1009
          %v1019 = vmul.f32 %v873, %v1011
          %v1020 = vmul.f32 %v862, %v952
          %v1021 = vmul.f32 %v865, %v953
          %v1022 = vmul.f32 %v870, %v954
          %v1023 = vmul.f32 %v873, %v955
          %1028 = vrot.lane.b32.xlu0 %v1020, 8
          %v1029 = vpop.permute.xlu0 %1028
          %1030 = vrot.lane.b32.xlu0 %v1021, 8
          %v1031 = vpop.permute.xlu0 %1030
          %1032 = vrot.lane.b32.xlu0 %v1022, 8
          %v1033 = vpop.permute.xlu0 %1032
          %1034 = vrot.lane.b32.xlu0 %v1023, 8
          %v1035 = vpop.permute.xlu0 %1034
          %v1040 = vadd.f32 %v1016, %v1029
          %v1041 = vadd.f32 %v1017, %v1031
          %v1042 = vadd.f32 %v1018, %v1033
          %v1043 = vadd.f32 %v1019, %v1035
          %1044 = vrot.lane.b32.xlu0 %v948, 16
          %v1045 = vpop.permute.xlu0 %1044
          %1046 = vrot.lane.b32.xlu0 %v949, 16
          %v1047 = vpop.permute.xlu0 %1046
          %1048 = vrot.lane.b32.xlu0 %v950, 16
          %v1049 = vpop.permute.xlu0 %1048
          %1050 = vrot.lane.b32.xlu0 %v951, 16
          %v1051 = vpop.permute.xlu0 %1050
          %v1056 = vmul.f32 %v862, %v1045
          %v1057 = vmul.f32 %v865, %v1047
          %v1058 = vmul.f32 %v870, %v1049
          %v1059 = vmul.f32 %v873, %v1051
          %1060 = vrot.lane.b32.xlu0 %v952, 24
          %v1061 = vpop.permute.xlu0 %1060
          %1062 = vrot.lane.b32.xlu0 %v953, 24
          %v1063 = vpop.permute.xlu0 %1062
          %1064 = vrot.lane.b32.xlu0 %v954, 24
          %v1065 = vpop.permute.xlu0 %1064
          %1066 = vrot.lane.b32.xlu0 %v955, 24
          %v1067 = vpop.permute.xlu0 %1066
          %v1072 = vmul.f32 %v862, %v1061
          %v1073 = vmul.f32 %v865, %v1063
          %v1074 = vmul.f32 %v870, %v1065
          %v1075 = vmul.f32 %v873, %v1067
          %1080 = vrot.lane.b32.xlu0 %v1072, 120
          %v1081 = vpop.permute.xlu0 %1080
          %1082 = vrot.lane.b32.xlu0 %v1073, 120
          %v1083 = vpop.permute.xlu0 %1082
          %1084 = vrot.lane.b32.xlu0 %v1074, 120
          %v1085 = vpop.permute.xlu0 %1084
          %1086 = vrot.lane.b32.xlu0 %v1075, 120
          %v1087 = vpop.permute.xlu0 %1086
          %v1092 = vsub.f32 %v1056, %v1081
          %v1093 = vsub.f32 %v1057, %v1083
          %v1094 = vsub.f32 %v1058, %v1085
          %v1095 = vsub.f32 %v1059, %v1087
          %1096 = vrot.lane.b32.xlu0 %v948, 24
          %v1097 = vpop.permute.xlu0 %1096
          %1098 = vrot.lane.b32.xlu0 %v949, 24
          %v1099 = vpop.permute.xlu0 %1098
          %1100 = vrot.lane.b32.xlu0 %v950, 24
          %v1101 = vpop.permute.xlu0 %1100
          %1102 = vrot.lane.b32.xlu0 %v951, 24
          %v1103 = vpop.permute.xlu0 %1102
          %v1108 = vmul.f32 %v862, %v1097
          %v1109 = vmul.f32 %v865, %v1099
          %v1110 = vmul.f32 %v870, %v1101
          %v1111 = vmul.f32 %v873, %v1103
          %1112 = vrot.lane.b32.xlu0 %v952, 16
          %v1113 = vpop.permute.xlu0 %1112
          %1114 = vrot.lane.b32.xlu0 %v953, 16
          %v1115 = vpop.permute.xlu0 %1114
          %1116 = vrot.lane.b32.xlu0 %v954, 16
          %v1117 = vpop.permute.xlu0 %1116
          %1118 = vrot.lane.b32.xlu0 %v955, 16
          %v1119 = vpop.permute.xlu0 %1118
          %v1124 = vmul.f32 %v862, %v1113
          %v1125 = vmul.f32 %v865, %v1115
          %v1126 = vmul.f32 %v870, %v1117
          %v1127 = vmul.f32 %v873, %v1119
          %1132 = vrot.lane.b32.xlu0 %v1124, 8
          %v1133 = vpop.permute.xlu0 %1132
          %1134 = vrot.lane.b32.xlu0 %v1125, 8
          %v1135 = vpop.permute.xlu0 %1134
          %1136 = vrot.lane.b32.xlu0 %v1126, 8
          %v1137 = vpop.permute.xlu0 %1136
          %1138 = vrot.lane.b32.xlu0 %v1127, 8
          %v1139 = vpop.permute.xlu0 %1138
          %v1144 = vadd.f32 %v1108, %v1133
          %v1145 = vadd.f32 %v1109, %v1135
          %v1146 = vadd.f32 %v1110, %v1137
          %v1147 = vadd.f32 %v1111, %v1139
          %vm1148 = vcmask 64512
          %v1149 = vsel %vm1148, %v996, %v1040
          %v1150 = vsel %vm1148, %v997, %v1041
          %v1151 = vsel %vm1148, %v998, %v1042
          %v1152 = vsel %vm1148, %v999, %v1043
          %vm1153 = vcmask 130048
          %v1154 = vsel %vm1153, %v1149, %v1092
          %v1155 = vsel %vm1153, %v1150, %v1093
          %v1156 = vsel %vm1153, %v1151, %v1094
          %v1157 = vsel %vm1153, %v1152, %v1095
          %vm1158 = vcmask 195584
          %v1159 = vsel %vm1158, %v1154, %v1144
          %v1160 = vsel %vm1158, %v1155, %v1145
          %v1161 = vsel %vm1158, %v1156, %v1146
          %v1162 = vsel %vm1158, %v1157, %v1147
          %v1163 = vpack.c.bf16 %v1160, %v1159
          %v1164 = vpack.c.bf16 %v1162, %v1161
          %1165 = vst.msk [vmem:[#allocation2] sm:$0xff] %vm722, %v1163
          %1166 = vst.msk [vmem:[#allocation2 + $0x8] sm:$0xff] %vm722, %v1164
          %v1167 = vpack.c.bf16 %v937, %v934
          %v1168 = vpack.c.bf16 %v945, %v942
          %1169 = vst.msk [vmem:[#allocation3] sm:$0xff] %vm722, %v1167
          %1170 = vst.msk [vmem:[#allocation3 + $0x8] sm:$0xff] %vm722, %v1168
        $region108: #{tpu_custom_call.1} parent=103 // pred_fallthru
          _
        %s1171 = scalar_lea.vmem %s698, %s711
        %v1172 = vld [vmem:[%s1171] sm:$0xff]
        %v1173 = vld [vmem:[%s1171 + $0x8] sm:$0xff]
        %v1174 = vld [vmem:[%s3] sm:$0x1]
        %v1175 = vld [vmem:[%s4] sm:$0x1]
        %vm1176 = vcmask 261120
        %v1177 = vsel %vm1176, %v1172, 0.0
        %1178 = vadd.xlane.f32.xlu0 %v1177
        %v1179 = vpop.xlane.xlu0 %1178
        %v1180 = vsel %vm1176, %v1173, 0.0
        %1181 = vadd.xlane.f32.xlu0 %v1180
        %v1182 = vpop.xlane.xlu0 %1181
        %v1183 = vrcp.pop 32.0
        %v1184 = vmul.f32 %v1179, %v1183
        %v1185 = vmul.f32 %v1182, %v1183
        %v1186 = vsub.f32 %v1172, %v1184
        %v1187 = vsub.f32 %v1173, %v1185
        %v1188 = vmul.f32 %v1186, %v1186
        %v1189 = vmul.f32 %v1187, %v1187
        %v1190 = vsel %vm1176, %v1188, 0.0
        %1191 = vadd.xlane.f32.xlu0 %v1190
        %v1192 = vpop.xlane.xlu0 %1191
        %v1193 = vsel %vm1176, %v1189, 0.0
        %1194 = vadd.xlane.f32.xlu0 %v1193
        %v1195 = vpop.xlane.xlu0 %1194
        %v1196 = vmul.f32 %v1192, %v1183
        %v1197 = vmul.f32 %v1195, %v1183
        %v1198 = vadd.f32 %v1196, 1e-05
        %v1199 = vadd.f32 %v1197, 1e-05
        %v1200 = vrsqrt.pop %v1198
        %v1201 = vrsqrt.pop %v1199
        %v1202 = vmul.f32 %v1186, %v1200
        %v1203 = vmul.f32 %v1187, %v1201
        %v1205 = vlaneseq
        %v1206 = vshrl.u32 %v1205, 7
        %v1207 = vsub.s32 0, %v1206
        %v1208 = vrot.slane %v1174, %v1207
        %v1210 = vmul.f32 %v1202, %v1208
        %v1211 = vmul.f32 %v1203, %v1208
        %v1213 = vlaneseq
        %v1214 = vshrl.u32 %v1213, 7
        %v1215 = vsub.s32 0, %v1214
        %v1216 = vrot.slane %v1175, %v1215
        %v1218 = vadd.f32 %v1210, %v1216
        %v1219 = vadd.f32 %v1211, %v1216
        %v1220 = vld [vmem:[%s5] sm:$0xf]
        %v1221 = vld [vmem:[%s5 + $0x4] sm:$0xf]
        %v1222 = vld [vmem:[%s5 + $0x8] sm:$0xf]
        %v1223 = vld [vmem:[%s5 + $0xc] sm:$0xf]
        %v1224 = vpack.c.bf16 %v1219, %v1218
        %v1225 = vld [vmem:[%s8] sm:$0x1]
        %v1227 = vlaneseq
        %v1228 = vshrl.u32 %v1227, 7
        %v1229 = vsub.s32 0, %v1228
        %v1230 = vrot.slane %v1225, %v1229
        %v1236 = vunpack.c.l.b16 %v1220
        %v1237 = vunpack.c.l.b16 %v1221
        %v1238 = vunpack.c.l.b16 %v1222
        %v1239 = vunpack.c.l.b16 %v1223
        %v1240 = vpack.c.b16 %v1237, %v1236
        %v1241 = vpack.c.b16 %v1239, %v1238
        %v1245 = vsel %vm1176, %v1224, 0
        %1247 = vmatprep.subr.bf16.mxu0 0
        %1248 = vmatpush1.bf16.msra.mxu0 %v1240
        %1249 = vmatprep.subr.bf16.mxu0 0
        %1250 = vmatpush1.bf16.msra.mxu0 %v1241
        %1251 = vmatprep.subr.bf16.mxu0 0
        %1252 = vmatpush1.bf16.msra.mxu0 0
        %1253 = vmatprep.subr.bf16.mxu0 0
        %1254 = vmatpush1.bf16.msra.mxu0 0
        %1255 = vmatprep.subr.bf16.mxu0 0
        %1256 = vmatpush1.bf16.msra.mxu0 0
        %1257 = vmatprep.subr.bf16.mxu0 0
        %1258 = vmatpush1.bf16.msra.mxu0 0
        %1259 = vmatprep.subr.bf16.mxu0 0
        %1260 = vmatpush1.bf16.msra.mxu0 0
        %1261 = vmatprep.subr.bf16.mxu0 0
        %1262 = vmatpush1.bf16.msra.mxu0 0
        %1263 = vmatprep.subr.bf16.mxu0 0
        %1264 = vmatpush1.bf16.msra.mxu0 0
        %1265 = vmatprep.subr.bf16.mxu0 0
        %1266 = vmatpush1.bf16.msra.mxu0 0
        %1267 = vmatprep.subr.bf16.mxu0 0
        %1268 = vmatpush1.bf16.msra.mxu0 0
        %1269 = vmatprep.subr.bf16.mxu0 0
        %1270 = vmatpush1.bf16.msra.mxu0 0
        %1271 = vmatprep.subr.bf16.mxu0 0
        %1272 = vmatpush1.bf16.msra.mxu0 0
        %1273 = vmatprep.subr.bf16.mxu0 0
        %1274 = vmatpush1.bf16.msra.mxu0 0
        %1275 = vmatprep.subr.bf16.mxu0 0
        %1276 = vmatpush1.bf16.msra.mxu0 0
        %1277 = vmatprep.subr.bf16.mxu0 0
        %1278 = vmatpush1.bf16.msra.mxu0 0
        %1279 = vmatprep.mubr.bf16.mxu0 0
        %1280 = vmatmul.mubr.bf16.gmra.mrb[0].mxu0 %v1245
        %v1281 = vpop.f32.mrb[0].mxu0
        %v1282 = vadd.f32 %v1230, %v1281
        %v1283 = vpop.f32.mrb[0].mxu0
        %v1284 = vpop.f32.mrb[0].mxu0
        %v1285 = vadd.f32 %v1230, %v1284
        %v1286 = vpop.f32.mrb[0].mxu0
        %1287 = vdwg.mxu0
        %s1288 = scalar_lea.vmem %s703, %s711
        %v1289 = vld [vmem:[%s1288] sm:$0xff]
        %v1290 = vld [vmem:[%s1288 + $0x8] sm:$0xff]
        %s1291 = scalar_lea.vmem %s708, %s711
        %v1292 = vld [vmem:[%s1291] sm:$0xff]
        %v1293 = vld [vmem:[%s1291 + $0x8] sm:$0xff]
        %v1294 = vmul.f32 %v1282, %v1289
        %v1295 = vmul.f32 %v1285, %v1290
        %1298 = vrot.lane.b32.xlu0 %v1292, 8
        %v1299 = vpop.permute.xlu0 %1298
        %1300 = vrot.lane.b32.xlu0 %v1293, 8
        %v1301 = vpop.permute.xlu0 %1300
        %v1304 = vmul.f32 %v1282, %v1299
        %v1305 = vmul.f32 %v1285, %v1301
        %1308 = vrot.lane.b32.xlu0 %v1304, 120
        %v1309 = vpop.permute.xlu0 %1308
        %1310 = vrot.lane.b32.xlu0 %v1305, 120
        %v1311 = vpop.permute.xlu0 %1310
        %v1314 = vsub.f32 %v1294, %v1309
        %v1315 = vsub.f32 %v1295, %v1311
        %1318 = vrot.lane.b32.xlu0 %v1289, 8
        %v1319 = vpop.permute.xlu0 %1318
        %1320 = vrot.lane.b32.xlu0 %v1290, 8
        %v1321 = vpop.permute.xlu0 %1320
        %v1324 = vmul.f32 %v1282, %v1319
        %v1325 = vmul.f32 %v1285, %v1321
        %v1326 = vmul.f32 %v1282, %v1292
        %v1327 = vmul.f32 %v1285, %v1293
        %1330 = vrot.lane.b32.xlu0 %v1326, 8
        %v1331 = vpop.permute.xlu0 %1330
        %1332 = vrot.lane.b32.xlu0 %v1327, 8
        %v1333 = vpop.permute.xlu0 %1332
        %v1336 = vadd.f32 %v1324, %v1331
        %v1337 = vadd.f32 %v1325, %v1333
        %1338 = vrot.lane.b32.xlu0 %v1289, 16
        %v1339 = vpop.permute.xlu0 %1338
        %1340 = vrot.lane.b32.xlu0 %v1290, 16
        %v1341 = vpop.permute.xlu0 %1340
        %v1344 = vmul.f32 %v1282, %v1339
        %v1345 = vmul.f32 %v1285, %v1341
        %1346 = vrot.lane.b32.xlu0 %v1292, 24
        %v1347 = vpop.permute.xlu0 %1346
        %1348 = vrot.lane.b32.xlu0 %v1293, 24
        %v1349 = vpop.permute.xlu0 %1348
        %v1352 = vmul.f32 %v1282, %v1347
        %v1353 = vmul.f32 %v1285, %v1349
        %1356 = vrot.lane.b32.xlu0 %v1352, 120
        %v1357 = vpop.permute.xlu0 %1356
        %1358 = vrot.lane.b32.xlu0 %v1353, 120
        %v1359 = vpop.permute.xlu0 %1358
        %v1362 = vsub.f32 %v1344, %v1357
        %v1363 = vsub.f32 %v1345, %v1359
        %1364 = vrot.lane.b32.xlu0 %v1289, 24
        %v1365 = vpop.permute.xlu0 %1364
        %1366 = vrot.lane.b32.xlu0 %v1290, 24
        %v1367 = vpop.permute.xlu0 %1366
        %v1370 = vmul.f32 %v1282, %v1365
        %v1371 = vmul.f32 %v1285, %v1367
        %1372 = vrot.lane.b32.xlu0 %v1292, 16
        %v1373 = vpop.permute.xlu0 %1372
        %1374 = vrot.lane.b32.xlu0 %v1293, 16
        %v1375 = vpop.permute.xlu0 %1374
        %v1378 = vmul.f32 %v1282, %v1373
        %v1379 = vmul.f32 %v1285, %v1375
        %1382 = vrot.lane.b32.xlu0 %v1378, 8
        %v1383 = vpop.permute.xlu0 %1382
        %1384 = vrot.lane.b32.xlu0 %v1379, 8
        %v1385 = vpop.permute.xlu0 %1384
        %v1388 = vadd.f32 %v1370, %v1383
        %v1389 = vadd.f32 %v1371, %v1385
        %vm1390 = vcmask 64512
        %v1391 = vsel %vm1390, %v1314, %v1336
        %v1392 = vsel %vm1390, %v1315, %v1337
        %vm1393 = vcmask 130048
        %v1394 = vsel %vm1393, %v1391, %v1362
        %v1395 = vsel %vm1393, %v1392, %v1363
        %vm1396 = vcmask 195584
        %v1397 = vsel %vm1396, %v1394, %v1388
        %v1398 = vsel %vm1396, %v1395, %v1389
        %v1399 = vpack.c.bf16 %v1398, %v1397
        %v1400 = vlaneseq
        %v1401 = vshrl.u32 %v1400, 7
        %v1402 = vadd.s32 %v1401, 8
        %v1403 = vstv %s711
        %v1404 = vadd.s32 %v1401, %v1403
        %v1405 = vadd.s32 %v1402, %v1403
        %v1406 = vlaneseq
        %v1407 = vand.u32 %v1406, 127
        %vm1408 = vcmp.ge.s32.totalorder %v1404, %v1407
        %vm1409 = vcmp.ge.s32.totalorder %v1405, %v1407
        %v1410 = vld [vmem:[#allocation2] sm:$0xff]
        %v1411 = vld [vmem:[#allocation2 + $0x8] sm:$0xff]
        %v1412 = vld [vmem:[#allocation3] sm:$0xff]
        %v1413 = vld [vmem:[#allocation3 + $0x8] sm:$0xff]
        %v1415 = vsel %vm1393, %v1399, 0
        %v1418 = vsel %vm1393, %v1410, 0
        %v1421 = vsel %vm1393, %v1411, 0
        %1423 = vmatprep.subr.bf16.mxu0 0
        %1424 = vmatpush1.bf16.xpose.msra.mxu0 %v1418
        %1425 = vmatprep.subr.bf16.mxu0 0
        %1426 = vmatpush1.bf16.xpose.msra.mxu0 %v1421
        %1427 = vmatprep.subr.bf16.mxu0 0
        %1428 = vmatpush1.bf16.xpose.msra.mxu0 0
        %1429 = vmatprep.subr.bf16.mxu0 0
        %1430 = vmatpush1.bf16.xpose.msra.mxu0 0
        %1431 = vmatprep.subr.bf16.mxu0 0
        %1432 = vmatpush1.bf16.xpose.msra.mxu0 0
        %1433 = vmatprep.subr.bf16.mxu0 0
        %1434 = vmatpush1.bf16.xpose.msra.mxu0 0
        %1435 = vmatprep.subr.bf16.mxu0 0
        %1436 = vmatpush1.bf16.xpose.msra.mxu0 0
        %1437 = vmatprep.subr.bf16.mxu0 0
        %1438 = vmatpush1.bf16.xpose.msra.mxu0 0
        %1439 = vmatprep.subr.bf16.mxu0 0
        %1440 = vmatpush1.bf16.xpose.msra.mxu0 0
        %1441 = vmatprep.subr.bf16.mxu0 0
        %1442 = vmatpush1.bf16.xpose.msra.mxu0 0
        %1443 = vmatprep.subr.bf16.mxu0 0
        %1444 = vmatpush1.bf16.xpose.msra.mxu0 0
        %1445 = vmatprep.subr.bf16.mxu0 0
        %1446 = vmatpush1.bf16.xpose.msra.mxu0 0
        %1447 = vmatprep.subr.bf16.mxu0 0
        %1448 = vmatpush1.bf16.xpose.msra.mxu0 0
        %1449 = vmatprep.subr.bf16.mxu0 0
        %1450 = vmatpush1.bf16.xpose.msra.mxu0 0
        %1451 = vmatprep.subr.bf16.mxu0 0
        %1452 = vmatpush1.bf16.xpose.msra.mxu0 0
        %1453 = vmatprep.subr.bf16.mxu0 0
        %1454 = vmatpush1.bf16.xpose.msra.mxu0 0
        %1455 = vmatprep.mubr.bf16.mxu0 0
        %1456 = vmatmul.mubr.bf16.gmra.mrb[0].mxu0 %v1415
        %v1457 = vpop.f32.mrb[0].mxu0
        %v1458 = vadd.f32 0.0, %v1457
        %v1459 = vpop.f32.mrb[0].mxu0
        %v1460 = vpop.f32.mrb[0].mxu0
        %v1461 = vadd.f32 0.0, %v1460
        %v1462 = vpop.f32.mrb[0].mxu0
        %1463 = vdwg.mxu0
        %v1464 = vsel %vm1408, %v1458, -1e+30
        %v1465 = vsel %vm1409, %v1461, -1e+30
        %v1466 = vsel %vm1176, %v1464, -inf
        %1467 = vmax.xlane.f32.xlu0 %v1466
        %v1468 = vpop.xlane.xlu0 %1467
        %v1469 = vsel %vm1176, %v1465, -inf
        %1470 = vmax.xlane.f32.xlu0 %v1469
        %v1471 = vpop.xlane.xlu0 %1470
        %v1472 = vsub.f32 %v1464, %v1468
        %v1473 = vsub.f32 %v1465, %v1471
        %v1474 = vmul.f32 %v1472, 1.442695
        %v1475 = vpow.pop %v1474
        %v1476 = vmul.f32 %v1473, 1.442695
        %v1477 = vpow.pop %v1476
        %v1478 = vsel %vm1176, %v1475, 0.0
        %1479 = vadd.xlane.f32.xlu0 %v1478
        %v1480 = vpop.xlane.xlu0 %1479
        %v1481 = vsel %vm1176, %v1477, 0.0
        %1482 = vadd.xlane.f32.xlu0 %v1481
        %v1483 = vpop.xlane.xlu0 %1482
        %v1484 = vrcp.pop %v1480
        %v1485 = vrcp.pop %v1483
        %v1486 = vmul.f32 %v1475, %v1484
        %v1487 = vmul.f32 %v1477, %v1485
        %v1488 = vpack.c.bf16 %v1487, %v1486
        %v1490 = vsel %vm1176, %v1488, 0
        %1492 = vmatprep.subr.bf16.mxu0 0
        %1493 = vmatpush1.bf16.msra.mxu0 %v1412
        %1494 = vmatprep.subr.bf16.mxu0 0
        %1495 = vmatpush1.bf16.msra.mxu0 %v1413
        %1496 = vmatprep.subr.bf16.mxu0 0
        %1497 = vmatpush1.bf16.msra.mxu0 0
        %1498 = vmatprep.subr.bf16.mxu0 0
        %1499 = vmatpush1.bf16.msra.mxu0 0
        %1500 = vmatprep.subr.bf16.mxu0 0
        %1501 = vmatpush1.bf16.msra.mxu0 0
        %1502 = vmatprep.subr.bf16.mxu0 0
        %1503 = vmatpush1.bf16.msra.mxu0 0
        %1504 = vmatprep.subr.bf16.mxu0 0
        %1505 = vmatpush1.bf16.msra.mxu0 0
        %1506 = vmatprep.subr.bf16.mxu0 0
        %1507 = vmatpush1.bf16.msra.mxu0 0
        %1508 = vmatprep.subr.bf16.mxu0 0
        %1509 = vmatpush1.bf16.msra.mxu0 0
        %1510 = vmatprep.subr.bf16.mxu0 0
        %1511 = vmatpush1.bf16.msra.mxu0 0
        %1512 = vmatprep.subr.bf16.mxu0 0
        %1513 = vmatpush1.bf16.msra.mxu0 0
        %1514 = vmatprep.subr.bf16.mxu0 0
        %1515 = vmatpush1.bf16.msra.mxu0 0
        %1516 = vmatprep.subr.bf16.mxu0 0
        %1517 = vmatpush1.bf16.msra.mxu0 0
        %1518 = vmatprep.subr.bf16.mxu0 0
        %1519 = vmatpush1.bf16.msra.mxu0 0
        %1520 = vmatprep.subr.bf16.mxu0 0
        %1521 = vmatpush1.bf16.msra.mxu0 0
        %1522 = vmatprep.subr.bf16.mxu0 0
        %1523 = vmatpush1.bf16.msra.mxu0 0
        %1524 = vmatprep.mubr.bf16.mxu0 0
        %1525 = vmatmul.mubr.bf16.gmra.mrb[0].mxu0 %v1490
        %v1526 = vpop.f32.mrb[0].mxu0
        %v1527 = vadd.f32 0.0, %v1526
        %v1528 = vpop.f32.mrb[0].mxu0
        %v1529 = vpop.f32.mrb[0].mxu0
        %v1530 = vadd.f32 0.0, %v1529
        %v1531 = vpop.f32.mrb[0].mxu0
        %1532 = vdwg.mxu0
        %1534 = vrot.lane.b32.xlu0 %v1399, 112
        %v1535 = vpop.permute.xlu0 %1534
        %1538 = vrot.lane.b32.xlu0 %v1410, 112
        %v1539 = vpop.permute.xlu0 %1538
        %1540 = vrot.lane.b32.xlu0 %v1411, 112
        %v1541 = vpop.permute.xlu0 %1540
        %v1543 = vsel %vm1393, %v1535, 0
        %v1546 = vsel %vm1393, %v1539, 0
        %v1549 = vsel %vm1393, %v1541, 0
        %1551 = vmatprep.subr.bf16.mxu0 0
        %1552 = vmatpush1.bf16.xpose.msra.mxu0 %v1546
        %1553 = vmatprep.subr.bf16.mxu0 0
        %1554 = vmatpush1.bf16.xpose.msra.mxu0 %v1549
        %1555 = vmatprep.subr.bf16.mxu0 0
        %1556 = vmatpush1.bf16.xpose.msra.mxu0 0
        %1557 = vmatprep.subr.bf16.mxu0 0
        %1558 = vmatpush1.bf16.xpose.msra.mxu0 0
        %1559 = vmatprep.subr.bf16.mxu0 0
        %1560 = vmatpush1.bf16.xpose.msra.mxu0 0
        %1561 = vmatprep.subr.bf16.mxu0 0
        %1562 = vmatpush1.bf16.xpose.msra.mxu0 0
        %1563 = vmatprep.subr.bf16.mxu0 0
        %1564 = vmatpush1.bf16.xpose.msra.mxu0 0
        %1565 = vmatprep.subr.bf16.mxu0 0
        %1566 = vmatpush1.bf16.xpose.msra.mxu0 0
        %1567 = vmatprep.subr.bf16.mxu0 0
        %1568 = vmatpush1.bf16.xpose.msra.mxu0 0
        %1569 = vmatprep.subr.bf16.mxu0 0
        %1570 = vmatpush1.bf16.xpose.msra.mxu0 0
        %1571 = vmatprep.subr.bf16.mxu0 0
        %1572 = vmatpush1.bf16.xpose.msra.mxu0 0
        %1573 = vmatprep.subr.bf16.mxu0 0
        %1574 = vmatpush1.bf16.xpose.msra.mxu0 0
        %1575 = vmatprep.subr.bf16.mxu0 0
        %1576 = vmatpush1.bf16.xpose.msra.mxu0 0
        %1577 = vmatprep.subr.bf16.mxu0 0
        %1578 = vmatpush1.bf16.xpose.msra.mxu0 0
        %1579 = vmatprep.subr.bf16.mxu0 0
        %1580 = vmatpush1.bf16.xpose.msra.mxu0 0
        %1581 = vmatprep.subr.bf16.mxu0 0
        %1582 = vmatpush1.bf16.xpose.msra.mxu0 0
        %1583 = vmatprep.mubr.bf16.mxu0 0
        %1584 = vmatmul.mubr.bf16.gmra.mrb[0].mxu0 %v1543
        %v1585 = vpop.f32.mrb[0].mxu0
        %v1586 = vadd.f32 0.0, %v1585
        %v1587 = vpop.f32.mrb[0].mxu0
        %v1588 = vpop.f32.mrb[0].mxu0
        %v1589 = vadd.f32 0.0, %v1588
        %v1590 = vpop.f32.mrb[0].mxu0
        %1591 = vdwg.mxu0
        %v1592 = vsel %vm1408, %v1586, -1e+30
        %v1593 = vsel %vm1409, %v1589, -1e+30
        %v1594 = vsel %vm1176, %v1592, -inf
        %1595 = vmax.xlane.f32.xlu0 %v1594
        %v1596 = vpop.xlane.xlu0 %1595
        %v1597 = vsel %vm1176, %v1593, -inf
        %1598 = vmax.xlane.f32.xlu0 %v1597
        %v1599 = vpop.xlane.xlu0 %1598
        %v1600 = vsub.f32 %v1592, %v1596
        %v1601 = vsub.f32 %v1593, %v1599
        %v1602 = vmul.f32 %v1600, 1.442695
        %v1603 = vpow.pop %v1602
        %v1604 = vmul.f32 %v1601, 1.442695
        %v1605 = vpow.pop %v1604
        %v1606 = vsel %vm1176, %v1603, 0.0
        %1607 = vadd.xlane.f32.xlu0 %v1606
        %v1608 = vpop.xlane.xlu0 %1607
        %v1609 = vsel %vm1176, %v1605, 0.0
        %1610 = vadd.xlane.f32.xlu0 %v1609
        %v1611 = vpop.xlane.xlu0 %1610
        %v1612 = vrcp.pop %v1608
        %v1613 = vrcp.pop %v1611
        %v1614 = vmul.f32 %v1603, %v1612
        %v1615 = vmul.f32 %v1605, %v1613
        %v1616 = vpack.c.bf16 %v1615, %v1614
        %1619 = vrot.lane.b32.xlu0 %v1412, 112
        %v1620 = vpop.permute.xlu0 %1619
        %1621 = vrot.lane.b32.xlu0 %v1413, 112
        %v1622 = vpop.permute.xlu0 %1621
        %v1626 = vsel %vm1176, %v1616, 0
        %1628 = vmatprep.subr.bf16.mxu0 0
        %1629 = vmatpush1.bf16.msra.mxu0 %v1620
        %1630 = vmatprep.subr.bf16.mxu0 0
        %1631 = vmatpush1.bf16.msra.mxu0 %v1622
        %1632 = vmatprep.subr.bf16.mxu0 0
        %1633 = vmatpush1.bf16.msra.mxu0 0
        %1634 = vmatprep.subr.bf16.mxu0 0
        %1635 = vmatpush1.bf16.msra.mxu0 0
        %1636 = vmatprep.subr.bf16.mxu0 0
        %1637 = vmatpush1.bf16.msra.mxu0 0
        %1638 = vmatprep.subr.bf16.mxu0 0
        %1639 = vmatpush1.bf16.msra.mxu0 0
        %1640 = vmatprep.subr.bf16.mxu0 0
        %1641 = vmatpush1.bf16.msra.mxu0 0
        %1642 = vmatprep.subr.bf16.mxu0 0
        %1643 = vmatpush1.bf16.msra.mxu0 0
        %1644 = vmatprep.subr.bf16.mxu0 0
        %1645 = vmatpush1.bf16.msra.mxu0 0
        %1646 = vmatprep.subr.bf16.mxu0 0
        %1647 = vmatpush1.bf16.msra.mxu0 0
        %1648 = vmatprep.subr.bf16.mxu0 0
        %1649 = vmatpush1.bf16.msra.mxu0 0
        %1650 = vmatprep.subr.bf16.mxu0 0
        %1651 = vmatpush1.bf16.msra.mxu0 0
        %1652 = vmatprep.subr.bf16.mxu0 0
        %1653 = vmatpush1.bf16.msra.mxu0 0
        %1654 = vmatprep.subr.bf16.mxu0 0
        %1655 = vmatpush1.bf16.msra.mxu0 0
        %1656 = vmatprep.subr.bf16.mxu0 0
        %1657 = vmatpush1.bf16.msra.mxu0 0
        %1658 = vmatprep.subr.bf16.mxu0 0
        %1659 = vmatpush1.bf16.msra.mxu0 0
        %1660 = vmatprep.mubr.bf16.mxu0 0
        %1661 = vmatmul.mubr.bf16.gmra.mrb[0].mxu0 %v1626
        %v1662 = vpop.f32.mrb[0].mxu0
        %v1663 = vadd.f32 0.0, %v1662
        %v1664 = vpop.f32.mrb[0].mxu0
        %v1665 = vpop.f32.mrb[0].mxu0
        %v1666 = vadd.f32 0.0, %v1665
        %v1667 = vpop.f32.mrb[0].mxu0
        %1668 = vdwg.mxu0
        %1671 = vrot.lane.b32.xlu0 %v1663, 16
        %v1672 = vpop.permute.xlu0 %1671
        %1673 = vrot.lane.b32.xlu0 %v1666, 16
        %v1674 = vpop.permute.xlu0 %1673
        %v1677 = vsel %vm1393, %v1527, %v1672
        %v1678 = vsel %vm1393, %v1530, %v1674
        %v1679 = vld [vmem:[%s11] sm:$0xf]
        %v1680 = vld [vmem:[%s11 + $0x4] sm:$0xf]
        %v1681 = vld [vmem:[%s11 + $0x8] sm:$0xf]
        %v1682 = vld [vmem:[%s11 + $0xc] sm:$0xf]
        %v1683 = vpack.c.bf16 %v1678, %v1677
        %v1688 = vunpack.c.l.b16 %v1679
        %v1689 = vunpack.c.l.b16 %v1680
        %v1690 = vunpack.c.l.b16 %v1681
        %v1691 = vunpack.c.l.b16 %v1682
        %v1692 = vpack.c.b16 %v1689, %v1688
        %v1693 = vpack.c.b16 %v1691, %v1690
        %v1697 = vsel %vm1176, %v1683, 0
        %1699 = vmatprep.subr.bf16.mxu0 0
        %1700 = vmatpush1.bf16.msra.mxu0 %v1692
        %1701 = vmatprep.subr.bf16.mxu0 0
        %1702 = vmatpush1.bf16.msra.mxu0 %v1693
        %1703 = vmatprep.subr.bf16.mxu0 0
        %1704 = vmatpush1.bf16.msra.mxu0 0
        %1705 = vmatprep.subr.bf16.mxu0 0
        %1706 = vmatpush1.bf16.msra.mxu0 0
        %1707 = vmatprep.subr.bf16.mxu0 0
        %1708 = vmatpush1.bf16.msra.mxu0 0
        %1709 = vmatprep.subr.bf16.mxu0 0
        %1710 = vmatpush1.bf16.msra.mxu0 0
        %1711 = vmatprep.subr.bf16.mxu0 0
        %1712 = vmatpush1.bf16.msra.mxu0 0
        %1713 = vmatprep.subr.bf16.mxu0 0
        %1714 = vmatpush1.bf16.msra.mxu0 0
        %1715 = vmatprep.subr.bf16.mxu0 0
        %1716 = vmatpush1.bf16.msra.mxu0 0
        %1717 = vmatprep.subr.bf16.mxu0 0
        %1718 = vmatpush1.bf16.msra.mxu0 0
        %1719 = vmatprep.subr.bf16.mxu0 0
        %1720 = vmatpush1.bf16.msra.mxu0 0
        %1721 = vmatprep.subr.bf16.mxu0 0
        %1722 = vmatpush1.bf16.msra.mxu0 0
        %1723 = vmatprep.subr.bf16.mxu0 0
        %1724 = vmatpush1.bf16.msra.mxu0 0
        %1725 = vmatprep.subr.bf16.mxu0 0
        %1726 = vmatpush1.bf16.msra.mxu0 0
        %1727 = vmatprep.subr.bf16.mxu0 0
        %1728 = vmatpush1.bf16.msra.mxu0 0
        %1729 = vmatprep.subr.bf16.mxu0 0
        %1730 = vmatpush1.bf16.msra.mxu0 0
        %1731 = vmatprep.mubr.bf16.mxu0 0
        %1732 = vmatmul.mubr.bf16.gmra.mrb[0].mxu0 %v1697
        %v1733 = vpop.f32.mrb[0].mxu0
        %v1734 = vadd.f32 0.0, %v1733
        %v1735 = vpop.f32.mrb[0].mxu0
        %v1736 = vpop.f32.mrb[0].mxu0
        %v1737 = vadd.f32 0.0, %v1736
        %v1738 = vpop.f32.mrb[0].mxu0
        %1739 = vdwg.mxu0
        %v1740 = vadd.f32 %v1172, %v1734
        %v1741 = vadd.f32 %v1173, %v1737
        %v1742 = vld [vmem:[%s12] sm:$0x1]
        %v1744 = vlaneseq
        %v1745 = vshrl.u32 %v1744, 7
        %v1746 = vsub.s32 0, %v1745
        %v1747 = vrot.slane %v1742, %v1746
        %v1749 = vadd.f32 %v1740, %v1747
        %v1750 = vadd.f32 %v1741, %v1747
        %v1751 = vld [vmem:[%s13] sm:$0x1]
        %v1752 = vld [vmem:[%s14] sm:$0x1]
        %v1753 = vsel %vm1176, %v1749, 0.0
        %1754 = vadd.xlane.f32.xlu0 %v1753
        %v1755 = vpop.xlane.xlu0 %1754
        %v1756 = vsel %vm1176, %v1750, 0.0
        %1757 = vadd.xlane.f32.xlu0 %v1756
        %v1758 = vpop.xlane.xlu0 %1757
        %v1759 = vmul.f32 %v1755, %v1183
        %v1760 = vmul.f32 %v1758, %v1183
        %v1761 = vsub.f32 %v1749, %v1759
        %v1762 = vsub.f32 %v1750, %v1760
        %v1763 = vmul.f32 %v1761, %v1761
        %v1764 = vmul.f32 %v1762, %v1762
        %v1765 = vsel %vm1176, %v1763, 0.0
        %1766 = vadd.xlane.f32.xlu0 %v1765
        %v1767 = vpop.xlane.xlu0 %1766
        %v1768 = vsel %vm1176, %v1764, 0.0
        %1769 = vadd.xlane.f32.xlu0 %v1768
        %v1770 = vpop.xlane.xlu0 %1769
        %v1771 = vmul.f32 %v1767, %v1183
        %v1772 = vmul.f32 %v1770, %v1183
        %v1773 = vadd.f32 %v1771, 1e-05
        %v1774 = vadd.f32 %v1772, 1e-05
        %v1775 = vrsqrt.pop %v1773
        %v1776 = vrsqrt.pop %v1774
        %v1777 = vmul.f32 %v1761, %v1775
        %v1778 = vmul.f32 %v1762, %v1776
        %v1780 = vlaneseq
        %v1781 = vshrl.u32 %v1780, 7
        %v1782 = vsub.s32 0, %v1781
        %v1783 = vrot.slane %v1751, %v1782
        %v1785 = vmul.f32 %v1777, %v1783
        %v1786 = vmul.f32 %v1778, %v1783
        %v1788 = vlaneseq
        %v1789 = vshrl.u32 %v1788, 7
        %v1790 = vsub.s32 0, %v1789
        %v1791 = vrot.slane %v1752, %v1790
        %v1793 = vadd.f32 %v1785, %v1791
        %v1794 = vadd.f32 %v1786, %v1791
        %v1795 = vld [vmem:[%s15] sm:$0xf]
        %v1796 = vld [vmem:[%s15 + $0x4] sm:$0xf]
        %v1797 = vld [vmem:[%s15 + $0x8] sm:$0xf]
        %v1798 = vld [vmem:[%s15 + $0xc] sm:$0xf]
        %v1799 = vpack.c.bf16 %v1794, %v1793
        %v1800 = vld [vmem:[%s17] sm:$0x1]
        %v1802 = vlaneseq
        %v1803 = vshrl.u32 %v1802, 7
        %v1804 = vsub.s32 0, %v1803
        %v1805 = vrot.slane %v1800, %v1804
        %v1811 = vunpack.c.l.b16 %v1795
        %v1812 = vunpack.c.l.b16 %v1796
        %v1813 = vunpack.c.l.b16 %v1797
        %v1814 = vunpack.c.l.b16 %v1798
        %v1815 = vpack.c.b16 %v1812, %v1811
        %v1816 = vpack.c.b16 %v1814, %v1813
        %v1820 = vsel %vm1176, %v1799, 0
        %1822 = vmatprep.subr.bf16.mxu0 0
        %1823 = vmatpush1.bf16.msra.mxu0 %v1815
        %1824 = vmatprep.subr.bf16.mxu0 0
        %1825 = vmatpush1.bf16.msra.mxu0 %v1816
        %1826 = vmatprep.subr.bf16.mxu0 0
        %1827 = vmatpush1.bf16.msra.mxu0 0
        %1828 = vmatprep.subr.bf16.mxu0 0
        %1829 = vmatpush1.bf16.msra.mxu0 0
        %1830 = vmatprep.subr.bf16.mxu0 0
        %1831 = vmatpush1.bf16.msra.mxu0 0
        %1832 = vmatprep.subr.bf16.mxu0 0
        %1833 = vmatpush1.bf16.msra.mxu0 0
        %1834 = vmatprep.subr.bf16.mxu0 0
        %1835 = vmatpush1.bf16.msra.mxu0 0
        %1836 = vmatprep.subr.bf16.mxu0 0
        %1837 = vmatpush1.bf16.msra.mxu0 0
        %1838 = vmatprep.subr.bf16.mxu0 0
        %1839 = vmatpush1.bf16.msra.mxu0 0
        %1840 = vmatprep.subr.bf16.mxu0 0
        %1841 = vmatpush1.bf16.msra.mxu0 0
        %1842 = vmatprep.subr.bf16.mxu0 0
        %1843 = vmatpush1.bf16.msra.mxu0 0
        %1844 = vmatprep.subr.bf16.mxu0 0
        %1845 = vmatpush1.bf16.msra.mxu0 0
        %1846 = vmatprep.subr.bf16.mxu0 0
        %1847 = vmatpush1.bf16.msra.mxu0 0
        %1848 = vmatprep.subr.bf16.mxu0 0
        %1849 = vmatpush1.bf16.msra.mxu0 0
        %1850 = vmatprep.subr.bf16.mxu0 0
        %1851 = vmatpush1.bf16.msra.mxu0 0
        %1852 = vmatprep.subr.bf16.mxu0 0
        %1853 = vmatpush1.bf16.msra.mxu0 0
        %1854 = vmatprep.mubr.bf16.mxu0 0
        %1855 = vmatmul.mubr.bf16.gmra.mrb[0].mxu0 %v1820
        %v1856 = vpop.f32.mrb[0].mxu0
        %v1857 = vadd.f32 %v1805, %v1856
        %v1858 = vpop.f32.mrb[0].mxu0
        %v1859 = vpop.f32.mrb[0].mxu0
        %v1860 = vadd.f32 %v1805, %v1859
        %v1861 = vpop.f32.mrb[0].mxu0
        %1862 = vdwg.mxu0
        %v1863 = vld [vmem:[%s16] sm:$0xf]
        %v1864 = vld [vmem:[%s16 + $0x4] sm:$0xf]
        %v1865 = vld [vmem:[%s16 + $0x8] sm:$0xf]
        %v1866 = vld [vmem:[%s16 + $0xc] sm:$0xf]
        %v1867 = vld [vmem:[%s18] sm:$0x1]
        %v1869 = vlaneseq
        %v1870 = vshrl.u32 %v1869, 7
        %v1871 = vsub.s32 0, %v1870
        %v1872 = vrot.slane %v1867, %v1871
        %v1878 = vunpack.c.l.b16 %v1863
        %v1879 = vunpack.c.l.b16 %v1864
        %v1880 = vunpack.c.l.b16 %v1865
        %v1881 = vunpack.c.l.b16 %v1866
        %v1882 = vpack.c.b16 %v1879, %v1878
        %v1883 = vpack.c.b16 %v1881, %v1880
        %1886 = vmatprep.subr.bf16.mxu0 0
        %1887 = vmatpush1.bf16.msra.mxu0 %v1882
        %1888 = vmatprep.subr.bf16.mxu0 0
        %1889 = vmatpush1.bf16.msra.mxu0 %v1883
        %1890 = vmatprep.subr.bf16.mxu0 0
        %1891 = vmatpush1.bf16.msra.mxu0 0
        %1892 = vmatprep.subr.bf16.mxu0 0
        %1893 = vmatpush1.bf16.msra.mxu0 0
        %1894 = vmatprep.subr.bf16.mxu0 0
        %1895 = vmatpush1.bf16.msra.mxu0 0
        %1896 = vmatprep.subr.bf16.mxu0 0
        %1897 = vmatpush1.bf16.msra.mxu0 0
        %1898 = vmatprep.subr.bf16.mxu0 0
        %1899 = vmatpush1.bf16.msra.mxu0 0
        %1900 = vmatprep.subr.bf16.mxu0 0
        %1901 = vmatpush1.bf16.msra.mxu0 0
        %1902 = vmatprep.subr.bf16.mxu0 0
        %1903 = vmatpush1.bf16.msra.mxu0 0
        %1904 = vmatprep.subr.bf16.mxu0 0
        %1905 = vmatpush1.bf16.msra.mxu0 0
        %1906 = vmatprep.subr.bf16.mxu0 0
        %1907 = vmatpush1.bf16.msra.mxu0 0
        %1908 = vmatprep.subr.bf16.mxu0 0
        %1909 = vmatpush1.bf16.msra.mxu0 0
        %1910 = vmatprep.subr.bf16.mxu0 0
        %1911 = vmatpush1.bf16.msra.mxu0 0
        %1912 = vmatprep.subr.bf16.mxu0 0
        %1913 = vmatpush1.bf16.msra.mxu0 0
        %1914 = vmatprep.subr.bf16.mxu0 0
        %1915 = vmatpush1.bf16.msra.mxu0 0
        %1916 = vmatprep.subr.bf16.mxu0 0
        %1917 = vmatpush1.bf16.msra.mxu0 0
        %1918 = vmatprep.mubr.bf16.mxu0 0
        %1919 = vmatmul.mubr.bf16.gmra.mrb[0].mxu0 %v1820
        %v1920 = vpop.f32.mrb[0].mxu0
        %v1921 = vadd.f32 %v1872, %v1920
        %v1922 = vpop.f32.mrb[0].mxu0
        %v1923 = vpop.f32.mrb[0].mxu0
        %v1924 = vadd.f32 %v1872, %v1923
        %v1925 = vpop.f32.mrb[0].mxu0
        %1926 = vdwg.mxu0
        %v1927 = vxor.u32 %v1921, 2147483648
        %v1928 = vxor.u32 %v1924, 2147483648
        %v1929 = vmul.f32 %v1927, 1.442695
        %v1930 = vpow.pop %v1929
        %v1931 = vmul.f32 %v1928, 1.442695
        %v1932 = vpow.pop %v1931
        %v1933 = vadd.f32 %v1930, 1.0
        %v1934 = vadd.f32 %v1932, 1.0
        %v1935 = vrcp.pop %v1933
        %v1936 = vmul.f32 1.0, %v1935
        %v1937 = vrcp.pop %v1934
        %v1938 = vmul.f32 1.0, %v1937
        %v1939 = vmul.f32 %v1921, %v1936
        %v1940 = vmul.f32 %v1924, %v1938
        %v1941 = vmul.f32 %v1857, %v1939
        %v1942 = vmul.f32 %v1860, %v1940
        %v1943 = vld [vmem:[%s19] sm:$0xf]
        %v1944 = vld [vmem:[%s19 + $0x4] sm:$0xf]
        %v1945 = vld [vmem:[%s19 + $0x8] sm:$0xf]
        %v1946 = vld [vmem:[%s19 + $0xc] sm:$0xf]
        %v1947 = vld [vmem:[%s19 + $0x10] sm:$0xf]
        %v1948 = vld [vmem:[%s19 + $0x14] sm:$0xf]
        %v1949 = vld [vmem:[%s19 + $0x18] sm:$0xf]
        %v1950 = vld [vmem:[%s19 + $0x1c] sm:$0xf]
        %v1951 = vpack.c.bf16 %v1942, %v1941
        %v1960 = vunpack.c.l.b16 %v1943
        %v1961 = vunpack.c.l.b16 %v1944
        %v1962 = vunpack.c.l.b16 %v1945
        %v1963 = vunpack.c.l.b16 %v1946
        %v1964 = vunpack.c.l.b16 %v1947
        %v1965 = vunpack.c.l.b16 %v1948
        %v1966 = vunpack.c.l.b16 %v1949
        %v1967 = vunpack.c.l.b16 %v1950
        %v1968 = vpack.c.b16 %v1961, %v1960
        %v1969 = vpack.c.b16 %v1963, %v1962
        %v1970 = vpack.c.b16 %v1965, %v1964
        %v1971 = vpack.c.b16 %v1967, %v1966
        %vm1976 = vcmask 523264
        %v1978 = vsel %vm1976, %v1951, 0
        %1980 = vmatprep.subr.bf16.mxu0 0
        %1981 = vmatpush1.bf16.msra.mxu0 %v1968
        %1982 = vmatprep.subr.bf16.mxu0 0
        %1983 = vmatpush1.bf16.msra.mxu0 %v1969
        %1984 = vmatprep.subr.bf16.mxu0 0
        %1985 = vmatpush1.bf16.msra.mxu0 %v1970
        %1986 = vmatprep.subr.bf16.mxu0 0
        %1987 = vmatpush1.bf16.msra.mxu0 %v1971
        %1988 = vmatprep.subr.bf16.mxu0 0
        %1989 = vmatpush1.bf16.msra.mxu0 0
        %1990 = vmatprep.subr.bf16.mxu0 0
        %1991 = vmatpush1.bf16.msra.mxu0 0
        %1992 = vmatprep.subr.bf16.mxu0 0
        %1993 = vmatpush1.bf16.msra.mxu0 0
        %1994 = vmatprep.subr.bf16.mxu0 0
        %1995 = vmatpush1.bf16.msra.mxu0 0
        %1996 = vmatprep.subr.bf16.mxu0 0
        %1997 = vmatpush1.bf16.msra.mxu0 0
        %1998 = vmatprep.subr.bf16.mxu0 0
        %1999 = vmatpush1.bf16.msra.mxu0 0
        %2000 = vmatprep.subr.bf16.mxu0 0
        %2001 = vmatpush1.bf16.msra.mxu0 0
        %2002 = vmatprep.subr.bf16.mxu0 0
        %2003 = vmatpush1.bf16.msra.mxu0 0
        %2004 = vmatprep.subr.bf16.mxu0 0
        %2005 = vmatpush1.bf16.msra.mxu0 0
        %2006 = vmatprep.subr.bf16.mxu0 0
        %2007 = vmatpush1.bf16.msra.mxu0 0
        %2008 = vmatprep.subr.bf16.mxu0 0
        %2009 = vmatpush1.bf16.msra.mxu0 0
        %2010 = vmatprep.subr.bf16.mxu0 0
        %2011 = vmatpush1.bf16.msra.mxu0 0
        %2012 = vmatprep.mubr.bf16.mxu0 0
        %2013 = vmatmul.mubr.bf16.gmra.mrb[0].mxu0 %v1978
        %v2014 = vpop.f32.mrb[0].mxu0
        %v2015 = vadd.f32 0.0, %v2014
        %v2016 = vpop.f32.mrb[0].mxu0
        %v2017 = vpop.f32.mrb[0].mxu0
        %v2018 = vadd.f32 0.0, %v2017
        %v2019 = vpop.f32.mrb[0].mxu0
        %2020 = vdwg.mxu0
        %v2021 = vadd.f32 %v1749, %v2015
        %v2022 = vadd.f32 %v1750, %v2018
        %v2023 = vld [vmem:[%s20] sm:$0x1]
        %v2025 = vlaneseq
        %v2026 = vshrl.u32 %v2025, 7
        %v2027 = vsub.s32 0, %v2026
        %v2028 = vrot.slane %v2023, %v2027
        %v2030 = vadd.f32 %v2021, %v2028
        %v2031 = vadd.f32 %v2022, %v2028
        %2032 = vst.msk [vmem:[%s693] sm:$0xff] %vm1176, %v2030
        %2033 = vst.msk [vmem:[%s693 + $0x8] sm:$0xff] %vm1176, %v2031
        %s2034 = sand.u32 %s513, 1
        %s2035 = scalar_lea.sflag [#allocation5], %s2034
        %s2036 = sand.u32 %s513, 1
        %s2037 = smul.addr %s2036, 16
        %s2038 = scalar_lea.vmem [#allocation4], %s2037
        // Predicated region
        $region109: #{tpu_custom_call.1} parent=103 // pred_check
          %p2039 = pneg %p523
        $region110: #{tpu_custom_call.1} parent=103 // pred_check_branch
          %2041 = sbr.rel (%p2039) target = $region112
        $region111: #{tpu_custom_call.1} parent=103 // pred_region
          %s2042 = smul.u32 2, %s40
          %s2044 = ssub.s32 256, 256
          %2045 = vsyncadd %s2035, %s2044
          %s2046 = smul.addr %s39, 4
          %s2047 = sadd.s32 %s2042, %s2046
          %s2048 = smul.addr %s2047, 128
          %s2049 = scalar_lea.hbm %s21, %s2048
          %s2050 = sshll.u32 %s2038, 4
          %s2051 = int_to_ptr.vmem [resolvable:$true] %s2050
          %2056 = dma.vmem_to_hbm [thread:$0]  %s2051, 256, %s2049, %s2035, 128, 128, 8
        $region112: #{tpu_custom_call.1} parent=103 // pred_fallthru
          _
      $region104: #{tpu_custom_call.1} parent=5 // pred_fallthru
        _
      %p2057 = scmp.le.s32.totalorder 2, %s30
      // Predicated region
      $region113: #{tpu_custom_call.1} parent=5 // pred_check
        %p2058 = pneg %p2057
      $region114: #{tpu_custom_call.1} parent=5 // pred_check_branch
        %2060 = sbr.rel (%p2058) target = $region116
      $region115: #{tpu_custom_call.1} parent=5 // pred_region
        %s2061 = ssub.s32 %s30, 2
        // Predicated region
        $region117: #{tpu_custom_call.1} parent=115 // pred_check
          %p2062 = pneg %p529
        $region118: #{tpu_custom_call.1} parent=115 // pred_check_branch
          %2064 = sbr.rel (%p2062) target = $region120
        $region119: #{tpu_custom_call.1} parent=115 // pred_region
          %s2065 = sand.u32 %s514, 1
          %s2066 = scalar_lea.sflag [#allocation5], %s2065
          %s2067 = sand.u32 %s514, 1
          %s2068 = smul.addr %s2067, 16
          %s2069 = scalar_lea.vmem [#allocation4], %s2068
          %2070 = dma.done %s2066, 256
        $region120: #{tpu_custom_call.1} parent=115 // pred_fallthru
          _
      $region116: #{tpu_custom_call.1} parent=5 // pred_fallthru
        _
    $region6: #{tpu_custom_call.1} parent=1 // loop_footer
      %s34 = sadd.s32 1, %s30
    $region7: #{tpu_custom_call.1} parent=1 // loop_footer_branch
      %29 = sbr.rel target = $region3
    $region8: #{tpu_custom_call.1} parent=1 // loop_exit
      _
    %2071 = vsyncpa [#allocation5], 1
    %s2072 = scalar_lea.sflag [#allocation5], 1
    %2073 = vsyncpa %s2072, 1

</llo_original>
